<compile_context>
chip_gen: v7x
topology: tpu7x:2x2x1
jax: 0.10.0
libtpu: 0.0.40
codegen_flags: <defaults>
</compile_context>

<pallas_src>
from functools import partial

import jax
import jax.numpy as jnp
from jax import lax
from jax.experimental import pallas as pl
from jax.experimental.pallas import tpu as pltpu

K = 5           # DGM_d default k
TM_MAX = 128    # row-tile cap (keeps (TM,N) temporaries v7x-VMEM safe)


def _default_compute_dtype():
    """bf16 elementwise/top-k on v6e/v7x (bf16 VPU/EUP); f32 on v5e/CPU."""
    try:
        dev = jax.devices()[0]
        if dev.platform == "tpu":
            kind = (getattr(dev, "device_kind", "") or "").lower()
            if "v6" in kind or "v7" in kind:
                return jnp.bfloat16
    except Exception:
        pass
    return jnp.float32


def _use_hw_prng_default():
    """Hardware PRNG only lowers under Mosaic (real TPU backend)."""
    try:
        return jax.default_backend() == "tpu"
    except Exception:
        return False


def _srl(x, bits):
    """Logical right shift with a same-dtype scalar (lax-friendly)."""
    return lax.shift_right_logical(x, jnp.asarray(bits, x.dtype))


# --------------------------------------------------------------------------
# Fused kernel: embed_f (2-layer MLP) + squared cdist + Gumbel top-k
# Grid: (batch, core_split, row_tiles_per_core).  The MLP runs at r == 0 for
# each (batch, core) pair and the scaled embedding stays resident in VMEM
# scratch for all of that core's row tiles.
# --------------------------------------------------------------------------
def _dgm_fused_kernel(t_ref, seed_ref, x_ref, w1_ref, b1_ref, w2_ref, b2_ref,
                      xemb_ref, val_ref, idx_ref,
                      embf_s, embs_s, sqc_s,
                      *, k, n_valid, use_hw_prng, compute_dtype):
    bi = pl.program_id(0)
    ci = pl.program_id(1)
    ri = pl.program_id(2)
    rpc = pl.num_programs(2)            # row tiles per core split
    n_pad = embs_s.shape[0]
    tm = val_ref.shape[1]
    padk = val_ref.shape[2]
    cdt = compute_dtype

    # ---- embed_f: 2-layer MLP, once per (batch, core-split) ---------------
    @pl.when(ri == 0)
    def _():
        # Fold temperature into the embedding:
        #   dist * exp(clamp(t)) == squared distances of (x_emb * exp(clamp(t)/2))
        scale_half = jnp.exp(0.5 * jnp.clip(t_ref[0, 0], -5.0, 5.0))
        x = x_ref[0]                                                   # (n_pad, f_in)
        h = jnp.dot(x, w1_ref[...], preferred_element_type=jnp.float32) + b1_ref[...]
        h = jnp.maximum(h, 0.0)
        e = jnp.dot(h, w2_ref[...], preferred_element_type=jnp.float32) + b2_ref[...]
        embf_s[...] = e                                                # module output (f32)
        es = (e * scale_half).astype(jnp.bfloat16)                     # temp-scaled Gram RHS
        embs_s[...] = es
        esf = es.astype(jnp.float32)
        sqc = jnp.transpose(jnp.sum(esf * esf, axis=-1, keepdims=True))  # (1, n_pad)
        if n_pad != n_valid:   # mask padded columns once: dist=+inf -> vals=-inf
            cmask = lax.broadcasted_iota(jnp.int32, (1, n_pad), 1) < n_valid
            sqc = jnp.where(cmask, sqc, jnp.float32(jnp.inf))
        sqc_s[...] = sqc

    # ---- this step's row tile ---------------------------------------------
    row0 = (ci * rpc + ri) * tm
    xemb_ref[0] = embf_s[pl.ds(row0, tm), :]                           # x_emb tile writeback

    rows_b = embs_s[pl.ds(row0, tm), :]                                # (tm, d) bf16
    rows_f = rows_b.astype(jnp.float32)
    sq_r = jnp.sum(rows_f * rows_f, axis=-1, keepdims=True)            # (tm, 1)
    # -2 folded into the LHS (exact, power of two) so the (tm,n) combine is add/sub only
    gram2 = lax.dot_general(rows_b * 2, embs_s[...],
                            (((1,), (1,)), ((), ())),
                            preferred_element_type=jnp.float32)        # (tm, n_pad)

    # ---- Gumbel perturbation ------------------------------------------------
    if use_hw_prng:
        pltpu.prng_seed(seed_ref[0, 0], bi, ci, ri)
        rbits = pltpu.prng_random_bits((tm, n_pad))
    else:
        # murmur3-style finalizer over (seed, batch, absolute row, column);
        # works on CPU / interpret mode (plain int32 VPU ops).
        rowi = lax.broadcasted_iota(jnp.int32, (tm, 1), 0) + row0
        coli = lax.broadcasted_iota(jnp.int32, (1, n_pad), 1)
        key = (seed_ref[0, 0] * jnp.int32(1013904223)
               + bi * jnp.int32(69069) + jnp.int32(1))
        hsh = coli * jnp.int32(-1640531527) + rowi * jnp.int32(-862048943)
        hsh = hsh ^ key
        hsh = hsh ^ _srl(hsh, 16)
        hsh = hsh * jnp.int32(-2048144789)
        hsh = hsh ^ _srl(hsh, 13)
        hsh = hsh * jnp.int32(-1028477387)
        hsh = hsh ^ _srl(hsh, 16)
        rbits = hsh
    u = (rbits & 0x007FFFFF).astype(jnp.float32) * (1.0 / (1 << 23))   # [0, 1 - 2^-23]
    q = u + 1e-8                                                       # torch: rand + 1e-8
    g = jnp.log((-jnp.log(q)).astype(cdt))                             # Gumbel term (finite)

    # vals = log(-log q) - dist_scaled   (== torch's  -(logits - log(-log q)))
    vals = g - (sq_r + sqc_s[...] - gram2).astype(cdt)                 # (tm, n_pad)

    # ---- iterative top-k along the node (lane) axis -------------------------
    colf = lax.broadcasted_iota(jnp.int32, (1, n_pad), 1).astype(jnp.float32)
    lanep = lax.broadcasted_iota(jnp.int32, (1, padk), 1)
    neg_inf = jnp.array(-jnp.inf, dtype=cdt)
    val_acc = jnp.zeros((tm, padk), jnp.float32)
    idx_acc = jnp.zeros((tm, padk), jnp.int32)
    for t in range(k):
        cur = jnp.max(vals, axis=-1, keepdims=True)                    # (tm, 1) exact max
        hit = vals == cur
        idxf = jnp.min(jnp.where(hit, colf, jnp.float32(n_pad)),
                       axis=-1, keepdims=True)                         # first-hit column
        val_acc = jnp.where(lanep == t, cur.astype(jnp.float32), val_acc)
        idx_acc = jnp.where(lanep == t, idxf.astype(jnp.int32), idx_acc)
        vals = jnp.where(hit, neg_inf, vals)                           # remove selected
    val_ref[0] = val_acc
    idx_ref[0] = idx_acc


def _tile_rows(n, tm_max=TM_MAX):
    if n >= tm_max:
        return tm_max
    return max(8, ((n + 7) // 8) * 8)


def dgm_forward(temperature, seed, x, w1, b1, w2, b2, k=K,
                compute_dtype=None, use_hw_prng=None, tm_max=TM_MAX):
    b, n, f_in = x.shape
    hid = w1.shape[1]
    f_out = w2.shape[1]
    if compute_dtype is None:
        compute_dtype = _default_compute_dtype()
    if use_hw_prng is None:
        use_hw_prng = _use_hw_prng_default()

    tm = _tile_rows(n, tm_max)
    n_pad = ((n + tm - 1) // tm) * tm           # pad instead of TM=N fallback
    rsteps = n_pad // tm
    csplit = 2 if (rsteps >= 2 and rsteps % 2 == 0) else 1    # v7x: feed both TCs
    rpc = rsteps // csplit
    padk = ((k + 7) // 8) * 8

    if n_pad != n:
        x = jnp.pad(x, ((0, 0), (0, n_pad - n), (0, 0)))

    cost = pl.CostEstimate(
        flops=int(2 * b * n_pad * (f_in * hid + hid * f_out + n_pad * f_out)),
        transcendentals=int(2 * b * n_pad * n_pad),
        bytes_accessed=int(4 * (x.size + w1.size + b1.size + w2.size + b2.size
                                + b * n_pad * f_out + 2 * b * n_pad * padk)),
    )

    x_emb, val_pad, idx_pad = pl.pallas_call(
        partial(_dgm_fused_kernel, k=k, n_valid=n, use_hw_prng=use_hw_prng,
                compute_dtype=compute_dtype),
        out_shape=(
            jax.ShapeDtypeStruct((b, n_pad, f_out), jnp.float32),   # x_emb
            jax.ShapeDtypeStruct((b, n_pad, padk), jnp.float32),    # top-k values
            jax.ShapeDtypeStruct((b, n_pad, padk), jnp.int32),      # top-k indices
        ),
        grid=(b, csplit, rpc),
        in_specs=[
            pl.BlockSpec(memory_space=pltpu.MemorySpace.SMEM),      # temperature (1,1)
            pl.BlockSpec(memory_space=pltpu.MemorySpace.SMEM),      # seed        (1,1)
            pl.BlockSpec((1, n_pad, f_in), lambda i, c, r: (i, 0, 0)),
            pl.BlockSpec((f_in, hid), lambda i, c, r: (0, 0)),
            pl.BlockSpec((1, hid), lambda i, c, r: (0, 0)),
            pl.BlockSpec((hid, f_out), lambda i, c, r: (0, 0)),
            pl.BlockSpec((1, f_out), lambda i, c, r: (0, 0)),
        ],
        out_specs=(
            pl.BlockSpec((1, tm, f_out), lambda i, c, r: (i, c * rpc + r, 0)),
            pl.BlockSpec((1, tm, padk), lambda i, c, r: (i, c * rpc + r, 0)),
            pl.BlockSpec((1, tm, padk), lambda i, c, r: (i, c * rpc + r, 0)),
        ),
        scratch_shapes=[
            pltpu.VMEM((n_pad, f_out), jnp.float32),    # unscaled embedding (x_emb source)
            pltpu.VMEM((n_pad, f_out), jnp.bfloat16),   # temperature-scaled Gram RHS
            pltpu.VMEM((1, n_pad), jnp.float32),        # column sq norms (+inf on pad cols)
        ],
        compiler_params=pltpu.CompilerParams(
            dimension_semantics=("parallel", "parallel", "arbitrary"),
            vmem_limit_bytes=48 * 1024 * 1024,
        ),
        cost_estimate=cost,
    )(temperature, seed, x, w1, b1, w2, b2)

    return x_emb[:, :n, :], val_pad[:, :n, :k], idx_pad[:, :n, :k]


# --------------------------------------------------------------------------
# DGM_d module wrapper (forward pass, euclidean distance, sparse=True)
# --------------------------------------------------------------------------
class DGMdPallas:
    def __init__(self, in_dim, hidden, out_dim, k=K, key=None):
        self.k = k
        # temperature init: 4.0 for euclidean distance (as in the torch module)
        self.temperature = jnp.full((1, 1), 4.0, jnp.float32)
        k1, k2, k3, k4 = jax.random.split(key, 4)
        s1 = 1.0 / jnp.sqrt(in_dim)
        s2 = 1.0 / jnp.sqrt(hidden)
        self.w1 = jax.random.uniform(k1, (in_dim, hidden), jnp.float32, -s1, s1)
        self.b1 = jax.random.uniform(k2, (1, hidden), jnp.float32, -s1, s1)
        self.w2 = jax.random.uniform(k3, (hidden, out_dim), jnp.float32, -s2, s2)
        self.b2 = jax.random.uniform(k4, (1, out_dim), jnp.float32, -s2, s2)

    def __call__(self, x, A=None, seed=0):
        # x = embed_f(x, A)   (A ignored by the MLP embed_f, as in DGM's MLP)
        b, n, _ = x.shape
        seed_arr = jnp.full((1, 1), seed, jnp.int32)
        x_emb, logprobs, indices = dgm_forward(
            self.temperature, seed_arr, x, self.w1, self.b1, self.w2, self.b2,
            k=self.k)

        # edge bookkeeping (pure index manipulation, plain JAX glue)
        rows = jnp.broadcast_to(jnp.arange(n, dtype=jnp.int32).reshape(1, n, 1),
                                (b, n, self.k))
        edges = jnp.stack((indices.reshape(b, -1), rows.reshape(b, -1)), axis=-2)
        offset = (jnp.arange(b, dtype=jnp.int32) * n)[:, None, None]
        edges_hat = jnp.transpose(edges + offset, (1, 0, 2)).reshape(2, -1)  # sparse=True
        return x_emb, edges_hat, logprobs


if __name__ == "__main__":
    # N=200 exercises the pad-to-tile path, padded-column masking and the
    # 2-way core split (n_pad=256, tm=128, rsteps=2).
    B, N, F_IN, HID, F_OUT = 2, 200, 16, 32, 32

    root = jax.random.PRNGKey(0)
    k_x, k_param = jax.random.split(root, 2)

    x = jax.random.normal(k_x, (B, N, F_IN), jnp.float32)
    A = jnp.zeros((2, 10), jnp.int32)   # edge-list arg, unused by the MLP embed_f

    model = DGMdPallas(F_IN, HID, F_OUT, k=K, key=k_param)
    x_emb, edges_hat, logprobs = model(x, A, seed=0)
    jax.block_until_ready((x_emb, edges_hat, logprobs))

    # shape checks
    assert x_emb.shape == (B, N, F_OUT)
    assert edges_hat.shape == (2, B * N * K)
    assert logprobs.shape == (B, N, K)
    assert int(edges_hat.max()) < B * N and int(edges_hat.min()) >= 0

    # the deterministic part (embed MLP) must match a plain-JAX reference
    ref_emb = jnp.maximum(jnp.matmul(x, model.w1) + model.b1, 0.0) @ model.w2 + model.b2
    assert jnp.allclose(x_emb, ref_emb, atol=1e-3, rtol=1e-3)

    # top-k values must be non-increasing along k and finite
    lp = logprobs.astype(jnp.float32)
    assert bool(jnp.all(lp[..., :-1] >= lp[..., 1:]))
    assert bool(jnp.all(jnp.isfinite(lp)))

    print("KERNEL_OK")
</pallas_src>

<mosaic_0001>
module attributes {stable_mosaic.version = 11 : i64} {
  func.func @_dgm_fused_kernel(%arg0: i32, %arg1: i32, %arg2: i32, %arg3: memref<1x1xf32, #tpu.memory_space<smem>>, %arg4: memref<1x1xi32, #tpu.memory_space<smem>>, %arg5: memref<1x256x16xf32, #tpu.memory_space<vmem>>, %arg6: memref<16x32xf32, #tpu.memory_space<vmem>>, %arg7: memref<1x32xf32, #tpu.memory_space<vmem>>, %arg8: memref<32x32xf32, #tpu.memory_space<vmem>>, %arg9: memref<1x32xf32, #tpu.memory_space<vmem>>, %arg10: memref<1x128x32xf32, #tpu.memory_space<vmem>>, %arg11: memref<1x128x8xf32, #tpu.memory_space<vmem>>, %arg12: memref<1x128x8xi32, #tpu.memory_space<vmem>>, %arg13: memref<256x32xf32, #tpu.memory_space<vmem>>, %arg14: memref<256x32xbf16, #tpu.memory_space<vmem>>, %arg15: memref<1x256xf32, #tpu.memory_space<vmem>>) attributes {dimension_semantics = [#tpu.dimension_semantics<parallel>, #tpu.dimension_semantics<parallel>, #tpu.dimension_semantics<arbitrary>], iteration_bounds = array<i64: 2, 2, 1>, scalar_prefetch = 0 : i64, scratch_operands = 3 : i64, tpu.core_type = #tpu.core_type<tc>, window_params = [{transform_indices = @transform_0, window_bounds = array<i64: 1, 1>}, {transform_indices = @transform_1, window_bounds = array<i64: 1, 1>}, {transform_indices = @transform_2, window_bounds = array<i64: 1, 256, 16>}, {pipeline_mode = #tpu.pipeline_mode<synchronous>, transform_indices = @transform_3, window_bounds = array<i64: 16, 32>}, {pipeline_mode = #tpu.pipeline_mode<synchronous>, transform_indices = @transform_4, window_bounds = array<i64: 1, 32>}, {pipeline_mode = #tpu.pipeline_mode<synchronous>, transform_indices = @transform_5, window_bounds = array<i64: 32, 32>}, {pipeline_mode = #tpu.pipeline_mode<synchronous>, transform_indices = @transform_6, window_bounds = array<i64: 1, 32>}, {transform_indices = @transform_7, window_bounds = array<i64: 1, 128, 32>}, {transform_indices = @transform_8, window_bounds = array<i64: 1, 128, 8>}, {transform_indices = @transform_9, window_bounds = array<i64: 1, 128, 8>}]} {
    %c0_i32 = arith.constant 0 : i32
    %0 = arith.cmpi eq, %arg2, %c0_i32 : i32
    %1 = arith.extui %0 : i1 to i32
    %c0_i32_0 = arith.constant 0 : i32
    %2 = arith.cmpi ne, %1, %c0_i32_0 : i32
    scf.if %2 {
      %c0_52 = arith.constant 0 : index
      %c0_53 = arith.constant 0 : index
      %213 = memref.load %arg3[%c0_52, %c0_53] : memref<1x1xf32, #tpu.memory_space<smem>>
      %cst_54 = arith.constant -5.000000e+00 : f32
      %cst_55 = arith.constant 5.000000e+00 : f32
      %214 = arith.maximumf %cst_54, %213 : f32
      %215 = arith.minimumf %cst_55, %214 : f32
      %cst_56 = arith.constant 5.000000e-01 : f32
      %216 = arith.mulf %cst_56, %215 : f32
      %217 = math.exp %216 : f32
      %c0_57 = arith.constant 0 : index
      %c0_58 = arith.constant 0 : index
      %c0_59 = arith.constant 0 : index
      %218 = vector.load %arg5[%c0_57, %c0_58, %c0_59] : memref<1x256x16xf32, #tpu.memory_space<vmem>>, vector<1x256x16xf32>
      %219 = vector.shape_cast %218 : vector<1x256x16xf32> to vector<256x16xf32>
      %c0_60 = arith.constant 0 : index
      %c0_61 = arith.constant 0 : index
      %220 = vector.load %arg6[%c0_60, %c0_61] : memref<16x32xf32, #tpu.memory_space<vmem>>, vector<16x32xf32>
      %cst_62 = arith.constant dense<0.000000e+00> : vector<256x32xf32>
      %221 = tpu.matmul %219, %220, %cst_62 {dimension_numbers = #tpu.dot_dimension_numbers<[1], [0], [0], [1], [0, 0, 1, 1], [], []>} : vector<256x16xf32>, vector<16x32xf32>, vector<256x32xf32> -> vector<256x32xf32>
      %c0_63 = arith.constant 0 : index
      %c0_64 = arith.constant 0 : index
      %222 = vector.load %arg7[%c0_63, %c0_64] : memref<1x32xf32, #tpu.memory_space<vmem>>, vector<1x32xf32>
      %223 = vector.broadcast %222 : vector<1x32xf32> to vector<256x32xf32>
      %224 = arith.addf %221, %223 : vector<256x32xf32>
      %cst_65 = arith.constant 0.000000e+00 : f32
      %225 = vector.broadcast %cst_65 : f32 to vector<256x32xf32>
      %226 = arith.maximumf %224, %225 : vector<256x32xf32>
      %c0_66 = arith.constant 0 : index
      %c0_67 = arith.constant 0 : index
      %227 = vector.load %arg8[%c0_66, %c0_67] : memref<32x32xf32, #tpu.memory_space<vmem>>, vector<32x32xf32>
      %cst_68 = arith.constant dense<0.000000e+00> : vector<256x32xf32>
      %228 = tpu.matmul %226, %227, %cst_68 {dimension_numbers = #tpu.dot_dimension_numbers<[1], [0], [0], [1], [0, 0, 1, 1], [], []>} : vector<256x32xf32>, vector<32x32xf32>, vector<256x32xf32> -> vector<256x32xf32>
      %c0_69 = arith.constant 0 : index
      %c0_70 = arith.constant 0 : index
      %229 = vector.load %arg9[%c0_69, %c0_70] : memref<1x32xf32, #tpu.memory_space<vmem>>, vector<1x32xf32>
      %230 = vector.broadcast %229 : vector<1x32xf32> to vector<256x32xf32>
      %231 = arith.addf %228, %230 : vector<256x32xf32>
      %c0_71 = arith.constant 0 : index
      %c0_72 = arith.constant 0 : index
      %232 = vector.load %arg13[%c0_71, %c0_72] : memref<256x32xf32, #tpu.memory_space<vmem>>, vector<256x32xf32>
      tpu.vector_store %arg13[%c0_71, %c0_72], %231 {strides = array<i32>} : memref<256x32xf32, #tpu.memory_space<vmem>>, vector<256x32xf32>,
      %233 = vector.broadcast %217 : f32 to vector<256x32xf32>
      %234 = arith.mulf %231, %233 : vector<256x32xf32>
      %235 = arith.truncf %234 : vector<256x32xf32> to vector<256x32xbf16>
      %c0_73 = arith.constant 0 : index
      %c0_74 = arith.constant 0 : index
      %236 = vector.load %arg14[%c0_73, %c0_74] : memref<256x32xbf16, #tpu.memory_space<vmem>>, vector<256x32xbf16>
      tpu.vector_store %arg14[%c0_73, %c0_74], %235 {strides = array<i32>} : memref<256x32xbf16, #tpu.memory_space<vmem>>, vector<256x32xbf16>,
      %237 = arith.extf %235 : vector<256x32xbf16> to vector<256x32xf32>
      %238 = arith.mulf %237, %237 : vector<256x32xf32>
      %cst_75 = arith.constant dense<0.000000e+00> : vector<256xf32>
      %239 = vector.multi_reduction <add>, %238, %cst_75 [1] : vector<256x32xf32> to vector<256xf32>
      %240 = vector.shape_cast %239 : vector<256xf32> to vector<256x1xf32>
      %241 = tpu.transpose %240, [1, 0] : vector<256x1xf32> -> vector<1x256xf32>
      %242 = tpu.iota {dimensions = array<i32: 1>} : vector<1x256xi32>
      %c200_i32 = arith.constant 200 : i32
      %243 = vector.broadcast %c200_i32 : i32 to vector<1x256xi32>
      %244 = arith.cmpi slt, %242, %243 : vector<1x256xi32>
      %cst_76 = arith.constant 0x7F800000 : f32
      %245 = vector.broadcast %cst_76 : f32 to vector<1x256xf32>
      %246 = arith.select %244, %241, %245 : vector<1x256xi1>, vector<1x256xf32>
      %c0_77 = arith.constant 0 : index
      %c0_78 = arith.constant 0 : index
      %247 = vector.load %arg15[%c0_77, %c0_78] : memref<1x256xf32, #tpu.memory_space<vmem>>, vector<1x256xf32>
      tpu.vector_store %arg15[%c0_77, %c0_78], %246 {strides = array<i32>} : memref<1x256xf32, #tpu.memory_space<vmem>>, vector<1x256xf32>,
    } else {
    }
    %c1_i32 = arith.constant 1 : i32
    %3 = arith.muli %arg1, %c1_i32 : i32
    %4 = arith.addi %3, %arg2 : i32
    %c128_i32 = arith.constant 128 : i32
    %5 = arith.muli %4, %c128_i32 : i32
    %6 = arith.index_cast %5 : i32 to index
    %c0 = arith.constant 0 : index
    %7 = vector.load %arg13[%6, %c0] : memref<256x32xf32, #tpu.memory_space<vmem>>, vector<128x32xf32>
    %c0_1 = arith.constant 0 : index
    %c0_2 = arith.constant 0 : index
    %c0_3 = arith.constant 0 : index
    %8 = vector.load %arg10[%c0_1, %c0_2, %c0_3] : memref<1x128x32xf32, #tpu.memory_space<vmem>>, vector<1x128x32xf32>
    %9 = vector.shape_cast %8 : vector<1x128x32xf32> to vector<128x32xf32>
    %10 = vector.shape_cast %7 : vector<128x32xf32> to vector<1x128x32xf32>
    tpu.vector_store %arg10[%c0_1, %c0_2, %c0_3], %10 {strides = array<i32>} : memref<1x128x32xf32, #tpu.memory_space<vmem>>, vector<1x128x32xf32>,
    %11 = arith.index_cast %5 : i32 to index
    %c0_4 = arith.constant 0 : index
    %12 = vector.load %arg14[%11, %c0_4] : memref<256x32xbf16, #tpu.memory_space<vmem>>, vector<128x32xbf16>
    %13 = arith.extf %12 : vector<128x32xbf16> to vector<128x32xf32>
    %14 = arith.mulf %13, %13 : vector<128x32xf32>
    %cst = arith.constant dense<0.000000e+00> : vector<128xf32>
    %15 = vector.multi_reduction <add>, %14, %cst [1] : vector<128x32xf32> to vector<128xf32>
    %16 = vector.shape_cast %15 : vector<128xf32> to vector<128x1xf32>
    %cst_5 = arith.constant 2.000000e+00 : bf16
    %17 = vector.broadcast %cst_5 : bf16 to vector<128x32xbf16>
    %18 = arith.mulf %12, %17 : vector<128x32xbf16>
    %c0_6 = arith.constant 0 : index
    %c0_7 = arith.constant 0 : index
    %19 = vector.load %arg14[%c0_6, %c0_7] : memref<256x32xbf16, #tpu.memory_space<vmem>>, vector<256x32xbf16>
    %cst_8 = arith.constant dense<0.000000e+00> : vector<128x256xf32>
    %20 = tpu.matmul %18, %19, %cst_8 {dimension_numbers = #tpu.dot_dimension_numbers<[1], [1], [0], [0], [0, 0, 1, 0], [], []>} : vector<128x32xbf16>, vector<256x32xbf16>, vector<128x256xf32> -> vector<128x256xf32>
    %21 = tpu.iota {dimensions = array<i32: 0>} : vector<128x1xi32>
    %22 = vector.broadcast %5 : i32 to vector<128x1xi32>
    %23 = arith.addi %21, %22 : vector<128x1xi32>
    %24 = tpu.iota {dimensions = array<i32: 1>} : vector<1x256xi32>
    %c0_9 = arith.constant 0 : index
    %c0_10 = arith.constant 0 : index
    %25 = memref.load %arg4[%c0_9, %c0_10] : memref<1x1xi32, #tpu.memory_space<smem>>
    %c1013904223_i32 = arith.constant 1013904223 : i32
    %26 = arith.muli %25, %c1013904223_i32 : i32
    %c69069_i32 = arith.constant 69069 : i32
    %27 = arith.muli %arg0, %c69069_i32 : i32
    %28 = arith.addi %26, %27 : i32
    %c1_i32_11 = arith.constant 1 : i32
    %29 = arith.addi %28, %c1_i32_11 : i32
    %c-1640531527_i32 = arith.constant -1640531527 : i32
    %30 = vector.broadcast %c-1640531527_i32 : i32 to vector<1x256xi32>
    %31 = arith.muli %24, %30 : vector<1x256xi32>
    %c-862048943_i32 = arith.constant -862048943 : i32
    %32 = vector.broadcast %c-862048943_i32 : i32 to vector<128x1xi32>
    %33 = arith.muli %23, %32 : vector<128x1xi32>
    %34 = vector.broadcast %31 : vector<1x256xi32> to vector<128x256xi32>
    %35 = vector.broadcast %33 : vector<128x1xi32> to vector<128x256xi32>
    %36 = arith.addi %34, %35 : vector<128x256xi32>
    %37 = vector.broadcast %29 : i32 to vector<128x256xi32>
    %38 = arith.xori %36, %37 : vector<128x256xi32>
    %c16_i32 = arith.constant 16 : i32
    %39 = vector.broadcast %c16_i32 : i32 to vector<128x256xi32>
    %40 = arith.shrui %38, %39 : vector<128x256xi32>
    %41 = arith.xori %38, %40 : vector<128x256xi32>
    %c-2048144789_i32 = arith.constant -2048144789 : i32
    %42 = vector.broadcast %c-2048144789_i32 : i32 to vector<128x256xi32>
    %43 = arith.muli %41, %42 : vector<128x256xi32>
    %c13_i32 = arith.constant 13 : i32
    %44 = vector.broadcast %c13_i32 : i32 to vector<128x256xi32>
    %45 = arith.shrui %43, %44 : vector<128x256xi32>
    %46 = arith.xori %43, %45 : vector<128x256xi32>
    %c-1028477387_i32 = arith.constant -1028477387 : i32
    %47 = vector.broadcast %c-1028477387_i32 : i32 to vector<128x256xi32>
    %48 = arith.muli %46, %47 : vector<128x256xi32>
    %c16_i32_12 = arith.constant 16 : i32
    %49 = vector.broadcast %c16_i32_12 : i32 to vector<128x256xi32>
    %50 = arith.shrui %48, %49 : vector<128x256xi32>
    %51 = arith.xori %48, %50 : vector<128x256xi32>
    %c8388607_i32 = arith.constant 8388607 : i32
    %52 = vector.broadcast %c8388607_i32 : i32 to vector<128x256xi32>
    %53 = arith.andi %51, %52 : vector<128x256xi32>
    %54 = arith.sitofp %53 : vector<128x256xi32> to vector<128x256xf32>
    %cst_13 = arith.constant 1.1920929E-7 : f32
    %55 = vector.broadcast %cst_13 : f32 to vector<128x256xf32>
    %56 = arith.mulf %54, %55 : vector<128x256xf32>
    %cst_14 = arith.constant 9.99999993E-9 : f32
    %57 = vector.broadcast %cst_14 : f32 to vector<128x256xf32>
    %58 = arith.addf %56, %57 : vector<128x256xf32>
    %59 = math.log %58 : vector<128x256xf32>
    %cst_15 = arith.constant 0.000000e+00 : f32
    %60 = vector.broadcast %cst_15 : f32 to vector<128x256xf32>
    %61 = arith.subf %60, %59 : vector<128x256xf32>
    %62 = math.log %61 : vector<128x256xf32>
    %c0_16 = arith.constant 0 : index
    %c0_17 = arith.constant 0 : index
    %63 = vector.load %arg15[%c0_16, %c0_17] : memref<1x256xf32, #tpu.memory_space<vmem>>, vector<1x256xf32>
    %64 = vector.broadcast %16 : vector<128x1xf32> to vector<128x256xf32>
    %65 = vector.broadcast %63 : vector<1x256xf32> to vector<128x256xf32>
    %66 = arith.addf %64, %65 : vector<128x256xf32>
    %67 = arith.subf %66, %20 : vector<128x256xf32>
    %68 = arith.subf %62, %67 : vector<128x256xf32>
    %69 = tpu.iota {dimensions = array<i32: 1>} : vector<1x256xi32>
    %70 = arith.sitofp %69 : vector<1x256xi32> to vector<1x256xf32>
    %71 = tpu.iota {dimensions = array<i32: 1>} : vector<1x8xi32>
    %cst_18 = arith.constant 0.000000e+00 : f32
    %72 = vector.broadcast %cst_18 : f32 to vector<128x8xf32>
    %c0_i32_19 = arith.constant 0 : i32
    %73 = vector.broadcast %c0_i32_19 : i32 to vector<128x8xi32>
    %cst_20 = arith.constant dense<0xFF800000> : vector<128xf32>
    %74 = vector.multi_reduction <maximumf>, %68, %cst_20 [1] : vector<128x256xf32> to vector<128xf32>
    %75 = vector.shape_cast %74 : vector<128xf32> to vector<128x1xf32>
    %76 = vector.broadcast %75 : vector<128x1xf32> to vector<128x256xf32>
    %77 = arith.cmpf oeq, %68, %76 : vector<128x256xf32>
    %cst_21 = arith.constant 2.560000e+02 : f32
    %78 = vector.shape_cast %70 : vector<1x256xf32> to vector<1x256xf32>
    %79 = vector.broadcast %78 : vector<1x256xf32> to vector<128x256xf32>
    %80 = vector.broadcast %cst_21 : f32 to vector<128x256xf32>
    %81 = arith.select %77, %79, %80 : vector<128x256xi1>, vector<128x256xf32>
    %cst_22 = arith.constant dense<0x7F800000> : vector<128xf32>
    %82 = vector.multi_reduction <minimumf>, %81, %cst_22 [1] : vector<128x256xf32> to vector<128xf32>
    %83 = vector.shape_cast %82 : vector<128xf32> to vector<128x1xf32>
    %c0_i32_23 = arith.constant 0 : i32
    %84 = vector.broadcast %c0_i32_23 : i32 to vector<1x8xi32>
    %85 = arith.cmpi eq, %71, %84 : vector<1x8xi32>
    %86 = vector.shape_cast %85 : vector<1x8xi1> to vector<1x8xi1>
    %87 = vector.broadcast %86 : vector<1x8xi1> to vector<128x8xi1>
    %88 = vector.shape_cast %75 : vector<128x1xf32> to vector<128x1xf32>
    %89 = vector.broadcast %88 : vector<128x1xf32> to vector<128x8xf32>
    %90 = arith.select %87, %89, %72 : vector<128x8xi1>, vector<128x8xf32>
    %c0_i32_24 = arith.constant 0 : i32
    %91 = vector.broadcast %c0_i32_24 : i32 to vector<1x8xi32>
    %92 = arith.cmpi eq, %71, %91 : vector<1x8xi32>
    %93 = arith.fptosi %83 : vector<128x1xf32> to vector<128x1xi32>
    %94 = vector.shape_cast %92 : vector<1x8xi1> to vector<1x8xi1>
    %95 = vector.broadcast %94 : vector<1x8xi1> to vector<128x8xi1>
    %96 = vector.shape_cast %93 : vector<128x1xi32> to vector<128x1xi32>
    %97 = vector.broadcast %96 : vector<128x1xi32> to vector<128x8xi32>
    %98 = arith.select %95, %97, %73 : vector<128x8xi1>, vector<128x8xi32>
    %cst_25 = arith.constant 0xFF800000 : f32
    %99 = vector.broadcast %cst_25 : f32 to vector<128x256xf32>
    %100 = arith.select %77, %99, %68 : vector<128x256xi1>, vector<128x256xf32>
    %cst_26 = arith.constant dense<0xFF800000> : vector<128xf32>
    %101 = vector.multi_reduction <maximumf>, %100, %cst_26 [1] : vector<128x256xf32> to vector<128xf32>
    %102 = vector.shape_cast %101 : vector<128xf32> to vector<128x1xf32>
    %103 = vector.broadcast %102 : vector<128x1xf32> to vector<128x256xf32>
    %104 = arith.cmpf oeq, %100, %103 : vector<128x256xf32>
    %cst_27 = arith.constant 2.560000e+02 : f32
    %105 = vector.shape_cast %70 : vector<1x256xf32> to vector<1x256xf32>
    %106 = vector.broadcast %105 : vector<1x256xf32> to vector<128x256xf32>
    %107 = vector.broadcast %cst_27 : f32 to vector<128x256xf32>
    %108 = arith.select %104, %106, %107 : vector<128x256xi1>, vector<128x256xf32>
    %cst_28 = arith.constant dense<0x7F800000> : vector<128xf32>
    %109 = vector.multi_reduction <minimumf>, %108, %cst_28 [1] : vector<128x256xf32> to vector<128xf32>
    %110 = vector.shape_cast %109 : vector<128xf32> to vector<128x1xf32>
    %c1_i32_29 = arith.constant 1 : i32
    %111 = vector.broadcast %c1_i32_29 : i32 to vector<1x8xi32>
    %112 = arith.cmpi eq, %71, %111 : vector<1x8xi32>
    %113 = vector.shape_cast %112 : vector<1x8xi1> to vector<1x8xi1>
    %114 = vector.broadcast %113 : vector<1x8xi1> to vector<128x8xi1>
    %115 = vector.shape_cast %102 : vector<128x1xf32> to vector<128x1xf32>
    %116 = vector.broadcast %115 : vector<128x1xf32> to vector<128x8xf32>
    %117 = arith.select %114, %116, %90 : vector<128x8xi1>, vector<128x8xf32>
    %c1_i32_30 = arith.constant 1 : i32
    %118 = vector.broadcast %c1_i32_30 : i32 to vector<1x8xi32>
    %119 = arith.cmpi eq, %71, %118 : vector<1x8xi32>
    %120 = arith.fptosi %110 : vector<128x1xf32> to vector<128x1xi32>
    %121 = vector.shape_cast %119 : vector<1x8xi1> to vector<1x8xi1>
    %122 = vector.broadcast %121 : vector<1x8xi1> to vector<128x8xi1>
    %123 = vector.shape_cast %120 : vector<128x1xi32> to vector<128x1xi32>
    %124 = vector.broadcast %123 : vector<128x1xi32> to vector<128x8xi32>
    %125 = arith.select %122, %124, %98 : vector<128x8xi1>, vector<128x8xi32>
    %cst_31 = arith.constant 0xFF800000 : f32
    %126 = vector.broadcast %cst_31 : f32 to vector<128x256xf32>
    %127 = arith.select %104, %126, %100 : vector<128x256xi1>, vector<128x256xf32>
    %cst_32 = arith.constant dense<0xFF800000> : vector<128xf32>
    %128 = vector.multi_reduction <maximumf>, %127, %cst_32 [1] : vector<128x256xf32> to vector<128xf32>
    %129 = vector.shape_cast %128 : vector<128xf32> to vector<128x1xf32>
    %130 = vector.broadcast %129 : vector<128x1xf32> to vector<128x256xf32>
    %131 = arith.cmpf oeq, %127, %130 : vector<128x256xf32>
    %cst_33 = arith.constant 2.560000e+02 : f32
    %132 = vector.shape_cast %70 : vector<1x256xf32> to vector<1x256xf32>
    %133 = vector.broadcast %132 : vector<1x256xf32> to vector<128x256xf32>
    %134 = vector.broadcast %cst_33 : f32 to vector<128x256xf32>
    %135 = arith.select %131, %133, %134 : vector<128x256xi1>, vector<128x256xf32>
    %cst_34 = arith.constant dense<0x7F800000> : vector<128xf32>
    %136 = vector.multi_reduction <minimumf>, %135, %cst_34 [1] : vector<128x256xf32> to vector<128xf32>
    %137 = vector.shape_cast %136 : vector<128xf32> to vector<128x1xf32>
    %c2_i32 = arith.constant 2 : i32
    %138 = vector.broadcast %c2_i32 : i32 to vector<1x8xi32>
    %139 = arith.cmpi eq, %71, %138 : vector<1x8xi32>
    %140 = vector.shape_cast %139 : vector<1x8xi1> to vector<1x8xi1>
    %141 = vector.broadcast %140 : vector<1x8xi1> to vector<128x8xi1>
    %142 = vector.shape_cast %129 : vector<128x1xf32> to vector<128x1xf32>
    %143 = vector.broadcast %142 : vector<128x1xf32> to vector<128x8xf32>
    %144 = arith.select %141, %143, %117 : vector<128x8xi1>, vector<128x8xf32>
    %c2_i32_35 = arith.constant 2 : i32
    %145 = vector.broadcast %c2_i32_35 : i32 to vector<1x8xi32>
    %146 = arith.cmpi eq, %71, %145 : vector<1x8xi32>
    %147 = arith.fptosi %137 : vector<128x1xf32> to vector<128x1xi32>
    %148 = vector.shape_cast %146 : vector<1x8xi1> to vector<1x8xi1>
    %149 = vector.broadcast %148 : vector<1x8xi1> to vector<128x8xi1>
    %150 = vector.shape_cast %147 : vector<128x1xi32> to vector<128x1xi32>
    %151 = vector.broadcast %150 : vector<128x1xi32> to vector<128x8xi32>
    %152 = arith.select %149, %151, %125 : vector<128x8xi1>, vector<128x8xi32>
    %cst_36 = arith.constant 0xFF800000 : f32
    %153 = vector.broadcast %cst_36 : f32 to vector<128x256xf32>
    %154 = arith.select %131, %153, %127 : vector<128x256xi1>, vector<128x256xf32>
    %cst_37 = arith.constant dense<0xFF800000> : vector<128xf32>
    %155 = vector.multi_reduction <maximumf>, %154, %cst_37 [1] : vector<128x256xf32> to vector<128xf32>
    %156 = vector.shape_cast %155 : vector<128xf32> to vector<128x1xf32>
    %157 = vector.broadcast %156 : vector<128x1xf32> to vector<128x256xf32>
    %158 = arith.cmpf oeq, %154, %157 : vector<128x256xf32>
    %cst_38 = arith.constant 2.560000e+02 : f32
    %159 = vector.shape_cast %70 : vector<1x256xf32> to vector<1x256xf32>
    %160 = vector.broadcast %159 : vector<1x256xf32> to vector<128x256xf32>
    %161 = vector.broadcast %cst_38 : f32 to vector<128x256xf32>
    %162 = arith.select %158, %160, %161 : vector<128x256xi1>, vector<128x256xf32>
    %cst_39 = arith.constant dense<0x7F800000> : vector<128xf32>
    %163 = vector.multi_reduction <minimumf>, %162, %cst_39 [1] : vector<128x256xf32> to vector<128xf32>
    %164 = vector.shape_cast %163 : vector<128xf32> to vector<128x1xf32>
    %c3_i32 = arith.constant 3 : i32
    %165 = vector.broadcast %c3_i32 : i32 to vector<1x8xi32>
    %166 = arith.cmpi eq, %71, %165 : vector<1x8xi32>
    %167 = vector.shape_cast %166 : vector<1x8xi1> to vector<1x8xi1>
    %168 = vector.broadcast %167 : vector<1x8xi1> to vector<128x8xi1>
    %169 = vector.shape_cast %156 : vector<128x1xf32> to vector<128x1xf32>
    %170 = vector.broadcast %169 : vector<128x1xf32> to vector<128x8xf32>
    %171 = arith.select %168, %170, %144 : vector<128x8xi1>, vector<128x8xf32>
    %c3_i32_40 = arith.constant 3 : i32
    %172 = vector.broadcast %c3_i32_40 : i32 to vector<1x8xi32>
    %173 = arith.cmpi eq, %71, %172 : vector<1x8xi32>
    %174 = arith.fptosi %164 : vector<128x1xf32> to vector<128x1xi32>
    %175 = vector.shape_cast %173 : vector<1x8xi1> to vector<1x8xi1>
    %176 = vector.broadcast %175 : vector<1x8xi1> to vector<128x8xi1>
    %177 = vector.shape_cast %174 : vector<128x1xi32> to vector<128x1xi32>
    %178 = vector.broadcast %177 : vector<128x1xi32> to vector<128x8xi32>
    %179 = arith.select %176, %178, %152 : vector<128x8xi1>, vector<128x8xi32>
    %cst_41 = arith.constant 0xFF800000 : f32
    %180 = vector.broadcast %cst_41 : f32 to vector<128x256xf32>
    %181 = arith.select %158, %180, %154 : vector<128x256xi1>, vector<128x256xf32>
    %cst_42 = arith.constant dense<0xFF800000> : vector<128xf32>
    %182 = vector.multi_reduction <maximumf>, %181, %cst_42 [1] : vector<128x256xf32> to vector<128xf32>
    %183 = vector.shape_cast %182 : vector<128xf32> to vector<128x1xf32>
    %184 = vector.broadcast %183 : vector<128x1xf32> to vector<128x256xf32>
    %185 = arith.cmpf oeq, %181, %184 : vector<128x256xf32>
    %cst_43 = arith.constant 2.560000e+02 : f32
    %186 = vector.shape_cast %70 : vector<1x256xf32> to vector<1x256xf32>
    %187 = vector.broadcast %186 : vector<1x256xf32> to vector<128x256xf32>
    %188 = vector.broadcast %cst_43 : f32 to vector<128x256xf32>
    %189 = arith.select %185, %187, %188 : vector<128x256xi1>, vector<128x256xf32>
    %cst_44 = arith.constant dense<0x7F800000> : vector<128xf32>
    %190 = vector.multi_reduction <minimumf>, %189, %cst_44 [1] : vector<128x256xf32> to vector<128xf32>
    %191 = vector.shape_cast %190 : vector<128xf32> to vector<128x1xf32>
    %c4_i32 = arith.constant 4 : i32
    %192 = vector.broadcast %c4_i32 : i32 to vector<1x8xi32>
    %193 = arith.cmpi eq, %71, %192 : vector<1x8xi32>
    %194 = vector.shape_cast %193 : vector<1x8xi1> to vector<1x8xi1>
    %195 = vector.broadcast %194 : vector<1x8xi1> to vector<128x8xi1>
    %196 = vector.shape_cast %183 : vector<128x1xf32> to vector<128x1xf32>
    %197 = vector.broadcast %196 : vector<128x1xf32> to vector<128x8xf32>
    %198 = arith.select %195, %197, %171 : vector<128x8xi1>, vector<128x8xf32>
    %c4_i32_45 = arith.constant 4 : i32
    %199 = vector.broadcast %c4_i32_45 : i32 to vector<1x8xi32>
    %200 = arith.cmpi eq, %71, %199 : vector<1x8xi32>
    %201 = arith.fptosi %191 : vector<128x1xf32> to vector<128x1xi32>
    %202 = vector.shape_cast %200 : vector<1x8xi1> to vector<1x8xi1>
    %203 = vector.broadcast %202 : vector<1x8xi1> to vector<128x8xi1>
    %204 = vector.shape_cast %201 : vector<128x1xi32> to vector<128x1xi32>
    %205 = vector.broadcast %204 : vector<128x1xi32> to vector<128x8xi32>
    %206 = arith.select %203, %205, %179 : vector<128x8xi1>, vector<128x8xi32>
    %c0_46 = arith.constant 0 : index
    %c0_47 = arith.constant 0 : index
    %c0_48 = arith.constant 0 : index
    %207 = vector.load %arg11[%c0_46, %c0_47, %c0_48] : memref<1x128x8xf32, #tpu.memory_space<vmem>>, vector<1x128x8xf32>
    %208 = vector.shape_cast %207 : vector<1x128x8xf32> to vector<128x8xf32>
    %209 = vector.shape_cast %198 : vector<128x8xf32> to vector<1x128x8xf32>
    tpu.vector_store %arg11[%c0_46, %c0_47, %c0_48], %209 {strides = array<i32>} : memref<1x128x8xf32, #tpu.memory_space<vmem>>, vector<1x128x8xf32>,
    %c0_49 = arith.constant 0 : index
    %c0_50 = arith.constant 0 : index
    %c0_51 = arith.constant 0 : index
    %210 = vector.load %arg12[%c0_49, %c0_50, %c0_51] : memref<1x128x8xi32, #tpu.memory_space<vmem>>, vector<1x128x8xi32>
    %211 = vector.shape_cast %210 : vector<1x128x8xi32> to vector<128x8xi32>
    %212 = vector.shape_cast %206 : vector<128x8xi32> to vector<1x128x8xi32>
    tpu.vector_store %arg12[%c0_49, %c0_50, %c0_51], %212 {strides = array<i32>} : memref<1x128x8xi32, #tpu.memory_space<vmem>>, vector<1x128x8xi32>,
    return
  }
  func.func @transform_0(%arg0: i32, %arg1: i32, %arg2: i32) -> (i32, i32) {
    %c0_i32 = arith.constant 0 : i32
    %c0_i32_0 = arith.constant 0 : i32
    %c0_i32_1 = arith.constant 0 : i32
    return %c0_i32, %c0_i32_0 : i32, i32
  }
  func.func @transform_1(%arg0: i32, %arg1: i32, %arg2: i32) -> (i32, i32) {
    %c0_i32 = arith.constant 0 : i32
    %c0_i32_0 = arith.constant 0 : i32
    %c0_i32_1 = arith.constant 0 : i32
    return %c0_i32, %c0_i32_0 : i32, i32
  }
  func.func @transform_2(%arg0: i32, %arg1: i32, %arg2: i32) -> (i32, i32, i32) {
    %c0_i32 = arith.constant 0 : i32
    %c0_i32_0 = arith.constant 0 : i32
    %c0_i32_1 = arith.constant 0 : i32
    return %arg0, %c0_i32, %c0_i32_0 : i32, i32, i32
  }
  func.func @transform_3(%arg0: i32, %arg1: i32, %arg2: i32) -> (i32, i32) {
    %c0_i32 = arith.constant 0 : i32
    %c0_i32_0 = arith.constant 0 : i32
    %c0_i32_1 = arith.constant 0 : i32
    return %c0_i32, %c0_i32_0 : i32, i32
  }
  func.func @transform_4(%arg0: i32, %arg1: i32, %arg2: i32) -> (i32, i32) {
    %c0_i32 = arith.constant 0 : i32
    %c0_i32_0 = arith.constant 0 : i32
    %c0_i32_1 = arith.constant 0 : i32
    return %c0_i32, %c0_i32_0 : i32, i32
  }
  func.func @transform_5(%arg0: i32, %arg1: i32, %arg2: i32) -> (i32, i32) {
    %c0_i32 = arith.constant 0 : i32
    %c0_i32_0 = arith.constant 0 : i32
    %c0_i32_1 = arith.constant 0 : i32
    return %c0_i32, %c0_i32_0 : i32, i32
  }
  func.func @transform_6(%arg0: i32, %arg1: i32, %arg2: i32) -> (i32, i32) {
    %c0_i32 = arith.constant 0 : i32
    %c0_i32_0 = arith.constant 0 : i32
    %c0_i32_1 = arith.constant 0 : i32
    return %c0_i32, %c0_i32_0 : i32, i32
  }
  func.func @transform_7(%arg0: i32, %arg1: i32, %arg2: i32) -> (i32, i32, i32) {
    %c1_i32 = arith.constant 1 : i32
    %0 = arith.muli %arg1, %c1_i32 : i32
    %1 = arith.addi %0, %arg2 : i32
    %c0_i32 = arith.constant 0 : i32
    %c0_i32_0 = arith.constant 0 : i32
    return %arg0, %1, %c0_i32 : i32, i32, i32
  }
  func.func @transform_8(%arg0: i32, %arg1: i32, %arg2: i32) -> (i32, i32, i32) {
    %c1_i32 = arith.constant 1 : i32
    %0 = arith.muli %arg1, %c1_i32 : i32
    %1 = arith.addi %0, %arg2 : i32
    %c0_i32 = arith.constant 0 : i32
    %c0_i32_0 = arith.constant 0 : i32
    return %arg0, %1, %c0_i32 : i32, i32, i32
  }
  func.func @transform_9(%arg0: i32, %arg1: i32, %arg2: i32) -> (i32, i32, i32) {
    %c1_i32 = arith.constant 1 : i32
    %0 = arith.muli %arg1, %c1_i32 : i32
    %1 = arith.addi %0, %arg2 : i32
    %c0_i32 = arith.constant 0 : i32
    %c0_i32_0 = arith.constant 0 : i32
    return %arg0, %1, %c0_i32 : i32, i32, i32
  }
}

</mosaic_0001>

<llo_original>
// kernel: tpu_custom_call.1
$region0: #{tpu_custom_call.1}
  #allocation0 [shape = 'u32[]', space=smem, size = 0x4, offset = 0x4, fixed_abs, tag = 'smem constant byte address 0x4 - core index']
  #allocation1 [shape = 'u32[144,128]{1,0:T(1,128)}', space=vmem, size = 0x12000, scoped, tag = 'internal scratch']
  #allocation2 [shape = 'f32[256,32]{1,0:T(8,128)}', space=vmem, size = 0x20000, scoped, tag = 'scratch operand']
  #allocation3 [shape = 'bf16[256,32]{1,0:T(16,128)(2,1)}', space=vmem, size = 0x10000, scoped, tag = 'scratch operand']
  #allocation4 [shape = 'f32[1,256]{1,0:T(1,128)}', space=vmem, size = 0x400, scoped, tag = 'scratch operand']
  #allocation5 [shape = 'f32[1,1]{1,0:T(1,128)S(6)}', space=smem, size = 0x200, scoped, tag = 'scoped memory for tpu_custom_call.1']
  #allocation6 [shape = 's32[1,1]{1,0:T(1,128)S(6)}', space=smem, size = 0x200, scoped, tag = 'scoped memory for tpu_custom_call.1']
  %s0 = inlined_call_operand.<no memory space> [shape: f32[1,1], index: 0, kind: input, shape index: {}]
  %s1 = inlined_call_operand.<no memory space> [shape: s32[1,1], index: 1, kind: input, shape index: {}]
  %s2 = inlined_call_operand.vmem [shape: f32[2,256,16], index: 2, kind: input, shape index: {}]
  %s3 = inlined_call_operand.vmem [shape: f32[16,32], index: 3, kind: input, shape index: {}]
  %s4 = inlined_call_operand.vmem [shape: f32[1,32], index: 4, kind: input, shape index: {}]
  %s5 = inlined_call_operand.vmem [shape: f32[32,32], index: 5, kind: input, shape index: {}]
  %s6 = inlined_call_operand.vmem [shape: f32[1,32], index: 6, kind: input, shape index: {}]
  %s7 = inlined_call_operand.vmem [shape: f32[2,256,32], index: 7, kind: output, shape index: {0}]
  %s8 = inlined_call_operand.vmem [shape: f32[2,256,8], index: 8, kind: output, shape index: {1}]
  %s9 = inlined_call_operand.vmem [shape: s32[2,256,8], index: 9, kind: output, shape index: {2}]
  %10 = xla_tuple %s7, %s8, %s9
  %s11 = sld [smem:[#allocation0]]
  $region81: #{tpu_custom_call.1} parent=0
    _
  %s13 = ssub.s32 1, %s11
  %s14 = scalar_select 0, %s13, %s11
  %15 = sst [smem:[#allocation5]] %s0
  %16 = sst [smem:[#allocation6]] %s1
  loop: start=0, step=1, limit=6
  $region2: #{tpu_custom_call.1} parent=0 // loop_pre_header
    _
  $region3: #{tpu_custom_call.1} parent=0 // loop_header
    %s18 = sphi 0, %s22
    %p19 = scmp.ge.s32.totalorder %s18, 6
    %s25 = sphi 0, %s44
    %s26 = sphi 0, %s40
    %s27 = sphi 0, %s36
    %s28 = sphi 0, %s25
    %s29 = sphi 0, %s26
    %s30 = sphi 0, %s27
    %s31 = sphi 0, %s28
    %s32 = sphi 0, %s29
    %s33 = sphi 0, %s30
    %s45 = sphi 0, %s45
    %s47 = sphi 0, %s45
    %s48 = sphi 0, %s47
    %s62 = sphi 0, %s48
    %s66 = sphi 0, %s66
    %s68 = sphi 0, %s66
    %s69 = sphi 0, %s68
    %s83 = sphi 0, %s69
    %s89 = sphi 0, %s91
    %s92 = sphi 0, %s89
    %s93 = sphi 0, %s92
    %s109 = sphi 0, %s93
    %s113 = sphi 0, %s113
    %s115 = sphi 0, %s113
    %s116 = sphi 0, %s115
    %s130 = sphi 0, %s116
    %s134 = sphi 0, %s134
    %s136 = sphi 0, %s134
    %s137 = sphi 0, %s136
    %s151 = sphi 0, %s137
    %s155 = sphi 0, %s155
    %s157 = sphi 0, %s155
    %s158 = sphi 0, %s157
    %s172 = sphi 0, %s158
    %s176 = sphi 0, %s176
    %s178 = sphi 0, %s176
    %s179 = sphi 0, %s178
    %s193 = sphi 0, %s179
    %s203 = sphi 0, %s205
    %s206 = sphi 0, %s203
    %s207 = sphi 0, %s206
    %s223 = sphi 0, %s207
    %s233 = sphi 0, %s235
    %s236 = sphi 0, %s233
    %s237 = sphi 0, %s236
    %s253 = sphi 0, %s237
    %s263 = sphi 0, %s265
    %s266 = sphi 0, %s263
    %s267 = sphi 0, %s266
    %s283 = sphi 0, %s267
  $region4: #{tpu_custom_call.1} parent=0 // loop_header_branch
    %21 = sbr.rel (%p19) target = $region8
  $region5: #{tpu_custom_call.1} parent=0 // loop_body
    %s23 = ssub.s32 %s18, 1
    %s24 = ssub.s32 %s18, 2
    %s34 = sadd.s32 1, %s27
    %p35 = scmp.ge.s32.totalorder %s34, 1
    %s36 = scalar_select %p35, 0, %s34
    %s37 = sadd.s32 1, %s26
    %s38 = scalar_select %p35, %s37, %s26
    %p39 = scmp.ge.s32.totalorder %s38, 2
    %s40 = scalar_select %p39, 0, %s38
    %s41 = sadd.s32 1, %s25
    %s42 = scalar_select %p39, %s41, %s25
    %p43 = scmp.ge.s32.totalorder %s42, 2
    %s44 = scalar_select %p43, 0, %s42
    %s46 = sadd.s32 %s45, 1
    %p49 = scmp.eq.s32.totalorder %s18, 3
    %p50 = scmp.ne.s32.totalorder %s45, %s47
    %p51 = scmp.eq.s32.totalorder %s18, 0
    %p52 = por %p50, %p51
    %p53 = scmp.ne.s32.totalorder %s45, %s47
    %p54 = scmp.eq.s32.totalorder %s23, 3
    %p55 = por %p53, %p54
    %p56 = scmp.ne.s32.totalorder %s47, %s48
    %p57 = scmp.eq.s32.totalorder %s23, 0
    %p58 = por %p56, %p57
    %p59 = scmp.ne.s32.totalorder %s47, %s48
    %p60 = scmp.eq.s32.totalorder %s24, 3
    %p61 = por %p59, %p60
    %p63 = scmp.ne.s32.totalorder %s48, %s62
    %p64 = scmp.eq.s32.totalorder %s24, 0
    %p65 = por %p63, %p64
    %s67 = sadd.s32 %s66, 1
    %p70 = scmp.eq.s32.totalorder %s18, 3
    %p71 = scmp.ne.s32.totalorder %s66, %s68
    %p72 = scmp.eq.s32.totalorder %s18, 0
    %p73 = por %p71, %p72
    %p74 = scmp.ne.s32.totalorder %s66, %s68
    %p75 = scmp.eq.s32.totalorder %s23, 3
    %p76 = por %p74, %p75
    %p77 = scmp.ne.s32.totalorder %s68, %s69
    %p78 = scmp.eq.s32.totalorder %s23, 0
    %p79 = por %p77, %p78
    %p80 = scmp.ne.s32.totalorder %s68, %s69
    %p81 = scmp.eq.s32.totalorder %s24, 3
    %p82 = por %p80, %p81
    %p84 = scmp.ne.s32.totalorder %s69, %s83
    %p85 = scmp.eq.s32.totalorder %s24, 0
    %p86 = por %p84, %p85
    %s87 = ssub.s32 %s25, %s44
    %p88 = scmp.eq.s32.totalorder %s87, 0
    %s90 = sadd.s32 %s89, 1
    %s91 = scalar_select %p88, %s89, %s90
    %p94 = pneg %p88
    %p95 = scmp.eq.s32.totalorder %s18, 3
    %p96 = por %p94, %p95
    %p97 = scmp.ne.s32.totalorder %s89, %s92
    %p98 = scmp.eq.s32.totalorder %s18, 0
    %p99 = por %p97, %p98
    %p100 = scmp.ne.s32.totalorder %s89, %s92
    %p101 = scmp.eq.s32.totalorder %s23, 3
    %p102 = por %p100, %p101
    %p103 = scmp.ne.s32.totalorder %s92, %s93
    %p104 = scmp.eq.s32.totalorder %s23, 0
    %p105 = por %p103, %p104
    %p106 = scmp.ne.s32.totalorder %s92, %s93
    %p107 = scmp.eq.s32.totalorder %s24, 3
    %p108 = por %p106, %p107
    %p110 = scmp.ne.s32.totalorder %s93, %s109
    %p111 = scmp.eq.s32.totalorder %s24, 0
    %p112 = por %p110, %p111
    %s114 = sadd.s32 %s113, 1
    %p117 = scmp.eq.s32.totalorder %s18, 3
    %p118 = scmp.ne.s32.totalorder %s113, %s115
    %p119 = scmp.eq.s32.totalorder %s18, 0
    %p120 = por %p118, %p119
    %p121 = scmp.ne.s32.totalorder %s113, %s115
    %p122 = scmp.eq.s32.totalorder %s23, 3
    %p123 = por %p121, %p122
    %p124 = scmp.ne.s32.totalorder %s115, %s116
    %p125 = scmp.eq.s32.totalorder %s23, 0
    %p126 = por %p124, %p125
    %p127 = scmp.ne.s32.totalorder %s115, %s116
    %p128 = scmp.eq.s32.totalorder %s24, 3
    %p129 = por %p127, %p128
    %p131 = scmp.ne.s32.totalorder %s116, %s130
    %p132 = scmp.eq.s32.totalorder %s24, 0
    %p133 = por %p131, %p132
    %s135 = sadd.s32 %s134, 1
    %p138 = scmp.eq.s32.totalorder %s18, 3
    %p139 = scmp.ne.s32.totalorder %s134, %s136
    %p140 = scmp.eq.s32.totalorder %s18, 0
    %p141 = por %p139, %p140
    %p142 = scmp.ne.s32.totalorder %s134, %s136
    %p143 = scmp.eq.s32.totalorder %s23, 3
    %p144 = por %p142, %p143
    %p145 = scmp.ne.s32.totalorder %s136, %s137
    %p146 = scmp.eq.s32.totalorder %s23, 0
    %p147 = por %p145, %p146
    %p148 = scmp.ne.s32.totalorder %s136, %s137
    %p149 = scmp.eq.s32.totalorder %s24, 3
    %p150 = por %p148, %p149
    %p152 = scmp.ne.s32.totalorder %s137, %s151
    %p153 = scmp.eq.s32.totalorder %s24, 0
    %p154 = por %p152, %p153
    %s156 = sadd.s32 %s155, 1
    %p159 = scmp.eq.s32.totalorder %s18, 3
    %p160 = scmp.ne.s32.totalorder %s155, %s157
    %p161 = scmp.eq.s32.totalorder %s18, 0
    %p162 = por %p160, %p161
    %p163 = scmp.ne.s32.totalorder %s155, %s157
    %p164 = scmp.eq.s32.totalorder %s23, 3
    %p165 = por %p163, %p164
    %p166 = scmp.ne.s32.totalorder %s157, %s158
    %p167 = scmp.eq.s32.totalorder %s23, 0
    %p168 = por %p166, %p167
    %p169 = scmp.ne.s32.totalorder %s157, %s158
    %p170 = scmp.eq.s32.totalorder %s24, 3
    %p171 = por %p169, %p170
    %p173 = scmp.ne.s32.totalorder %s158, %s172
    %p174 = scmp.eq.s32.totalorder %s24, 0
    %p175 = por %p173, %p174
    %s177 = sadd.s32 %s176, 1
    %p180 = scmp.eq.s32.totalorder %s18, 3
    %p181 = scmp.ne.s32.totalorder %s176, %s178
    %p182 = scmp.eq.s32.totalorder %s18, 0
    %p183 = por %p181, %p182
    %p184 = scmp.ne.s32.totalorder %s176, %s178
    %p185 = scmp.eq.s32.totalorder %s23, 3
    %p186 = por %p184, %p185
    %p187 = scmp.ne.s32.totalorder %s178, %s179
    %p188 = scmp.eq.s32.totalorder %s23, 0
    %p189 = por %p187, %p188
    %p190 = scmp.ne.s32.totalorder %s178, %s179
    %p191 = scmp.eq.s32.totalorder %s24, 3
    %p192 = por %p190, %p191
    %p194 = scmp.ne.s32.totalorder %s179, %s193
    %p195 = scmp.eq.s32.totalorder %s24, 0
    %p196 = por %p194, %p195
    %s197 = sadd.s32 %s26, %s27
    %s198 = sadd.s32 %s40, %s36
    %s199 = ssub.s32 %s25, %s44
    %s200 = ssub.s32 %s197, %s198
    %s201 = sor.u32 %s199, %s200
    %p202 = scmp.eq.s32.totalorder %s201, 0
    %s204 = sadd.s32 %s203, 1
    %s205 = scalar_select %p202, %s203, %s204
    %p208 = pneg %p202
    %p209 = scmp.eq.s32.totalorder %s18, 3
    %p210 = por %p208, %p209
    %p211 = scmp.ne.s32.totalorder %s203, %s206
    %p212 = scmp.eq.s32.totalorder %s18, 0
    %p213 = por %p211, %p212
    %p214 = scmp.ne.s32.totalorder %s203, %s206
    %p215 = scmp.eq.s32.totalorder %s23, 3
    %p216 = por %p214, %p215
    %p217 = scmp.ne.s32.totalorder %s206, %s207
    %p218 = scmp.eq.s32.totalorder %s23, 0
    %p219 = por %p217, %p218
    %p220 = scmp.ne.s32.totalorder %s206, %s207
    %p221 = scmp.eq.s32.totalorder %s24, 3
    %p222 = por %p220, %p221
    %p224 = scmp.ne.s32.totalorder %s207, %s223
    %p225 = scmp.eq.s32.totalorder %s24, 0
    %p226 = por %p224, %p225
    %s227 = sadd.s32 %s26, %s27
    %s228 = sadd.s32 %s40, %s36
    %s229 = ssub.s32 %s25, %s44
    %s230 = ssub.s32 %s227, %s228
    %s231 = sor.u32 %s229, %s230
    %p232 = scmp.eq.s32.totalorder %s231, 0
    %s234 = sadd.s32 %s233, 1
    %s235 = scalar_select %p232, %s233, %s234
    %p238 = pneg %p232
    %p239 = scmp.eq.s32.totalorder %s18, 3
    %p240 = por %p238, %p239
    %p241 = scmp.ne.s32.totalorder %s233, %s236
    %p242 = scmp.eq.s32.totalorder %s18, 0
    %p243 = por %p241, %p242
    %p244 = scmp.ne.s32.totalorder %s233, %s236
    %p245 = scmp.eq.s32.totalorder %s23, 3
    %p246 = por %p244, %p245
    %p247 = scmp.ne.s32.totalorder %s236, %s237
    %p248 = scmp.eq.s32.totalorder %s23, 0
    %p249 = por %p247, %p248
    %p250 = scmp.ne.s32.totalorder %s236, %s237
    %p251 = scmp.eq.s32.totalorder %s24, 3
    %p252 = por %p250, %p251
    %p254 = scmp.ne.s32.totalorder %s237, %s253
    %p255 = scmp.eq.s32.totalorder %s24, 0
    %p256 = por %p254, %p255
    %s257 = sadd.s32 %s26, %s27
    %s258 = sadd.s32 %s40, %s36
    %s259 = ssub.s32 %s25, %s44
    %s260 = ssub.s32 %s257, %s258
    %s261 = sor.u32 %s259, %s260
    %p262 = scmp.eq.s32.totalorder %s261, 0
    %s264 = sadd.s32 %s263, 1
    %s265 = scalar_select %p262, %s263, %s264
    %p268 = pneg %p262
    %p269 = scmp.eq.s32.totalorder %s18, 3
    %p270 = por %p268, %p269
    %p271 = scmp.ne.s32.totalorder %s263, %s266
    %p272 = scmp.eq.s32.totalorder %s18, 0
    %p273 = por %p271, %p272
    %p274 = scmp.ne.s32.totalorder %s263, %s266
    %p275 = scmp.eq.s32.totalorder %s23, 3
    %p276 = por %p274, %p275
    %p277 = scmp.ne.s32.totalorder %s266, %s267
    %p278 = scmp.eq.s32.totalorder %s23, 0
    %p279 = por %p277, %p278
    %p280 = scmp.ne.s32.totalorder %s266, %s267
    %p281 = scmp.eq.s32.totalorder %s24, 3
    %p282 = por %p280, %p281
    %p284 = scmp.ne.s32.totalorder %s267, %s283
    %p285 = scmp.eq.s32.totalorder %s24, 0
    %p286 = por %p284, %p285
    %p287 = scmp.le.s32.totalorder 1, %s18
    %p288 = scmp.lt.s32.totalorder %s18, 5
    %p289 = pnand %p287, %p288
    %p290 = pneg %p289
    // Predicated region
    $region9: #{tpu_custom_call.1} parent=5 // pred_check
      _
    $region10: #{tpu_custom_call.1} parent=5 // pred_check_branch
      %292 = sbr.rel (%p289) target = $region12
    $region11: #{tpu_custom_call.1} parent=5 // pred_region
      %s293 = ssub.s32 %s18, 1
      // Predicated region
      $region13: #{tpu_custom_call.1} parent=11 // pred_check
        %p294 = pneg %p58
      $region14: #{tpu_custom_call.1} parent=11 // pred_check_branch
        %296 = sbr.rel (%p294) target = $region16
      $region15: #{tpu_custom_call.1} parent=11 // pred_region
        _
      $region16: #{tpu_custom_call.1} parent=11 // pred_fallthru
        _
      // Predicated region
      $region17: #{tpu_custom_call.1} parent=11 // pred_check
        %p297 = pneg %p79
      $region18: #{tpu_custom_call.1} parent=11 // pred_check_branch
        %299 = sbr.rel (%p297) target = $region20
      $region19: #{tpu_custom_call.1} parent=11 // pred_region
        _
      $region20: #{tpu_custom_call.1} parent=11 // pred_fallthru
        _
      // Predicated region
      $region21: #{tpu_custom_call.1} parent=11 // pred_check
        %p300 = pneg %p126
      $region22: #{tpu_custom_call.1} parent=11 // pred_check_branch
        %302 = sbr.rel (%p300) target = $region24
      $region23: #{tpu_custom_call.1} parent=11 // pred_region
        _
      $region24: #{tpu_custom_call.1} parent=11 // pred_fallthru
        _
      // Predicated region
      $region25: #{tpu_custom_call.1} parent=11 // pred_check
        %p303 = pneg %p147
      $region26: #{tpu_custom_call.1} parent=11 // pred_check_branch
        %305 = sbr.rel (%p303) target = $region28
      $region27: #{tpu_custom_call.1} parent=11 // pred_region
        _
      $region28: #{tpu_custom_call.1} parent=11 // pred_fallthru
        _
      // Predicated region
      $region29: #{tpu_custom_call.1} parent=11 // pred_check
        %p306 = pneg %p168
      $region30: #{tpu_custom_call.1} parent=11 // pred_check_branch
        %308 = sbr.rel (%p306) target = $region32
      $region31: #{tpu_custom_call.1} parent=11 // pred_region
        _
      $region32: #{tpu_custom_call.1} parent=11 // pred_fallthru
        _
      // Predicated region
      $region33: #{tpu_custom_call.1} parent=11 // pred_check
        %p309 = pneg %p189
      $region34: #{tpu_custom_call.1} parent=11 // pred_check_branch
        %311 = sbr.rel (%p309) target = $region36
      $region35: #{tpu_custom_call.1} parent=11 // pred_region
        _
      $region36: #{tpu_custom_call.1} parent=11 // pred_fallthru
        _
    $region12: #{tpu_custom_call.1} parent=5 // pred_fallthru
      _
    %p312 = scmp.lt.s32.totalorder %s18, 4
    // Predicated region
    $region37: #{tpu_custom_call.1} parent=5 // pred_check
      %p313 = pneg %p312
    $region38: #{tpu_custom_call.1} parent=5 // pred_check_branch
      %315 = sbr.rel (%p313) target = $region40
    $region39: #{tpu_custom_call.1} parent=5 // pred_region
      // Predicated region
      $region41: #{tpu_custom_call.1} parent=39 // pred_check
        %p316 = pneg %p99
      $region42: #{tpu_custom_call.1} parent=39 // pred_check_branch
        %318 = sbr.rel (%p316) target = $region44
      $region43: #{tpu_custom_call.1} parent=39 // pred_region
        %p319 = scmp.lt.s32.totalorder %s25, 1
        %s320 = scalar_select %p319, %s25, 1
        %s321 = smul.addr %s320, 32
        %s322 = smul.addr %s321, 8
        %s323 = scalar_lea.vmem %s2, %s322
      $region44: #{tpu_custom_call.1} parent=39 // pred_fallthru
        _
    $region40: #{tpu_custom_call.1} parent=5 // pred_fallthru
      _
    %p324 = scmp.le.s32.totalorder 1, %s18
    %p325 = scmp.lt.s32.totalorder %s18, 5
    %p326 = pnand %p324, %p325
    %p327 = pneg %p326
    // Predicated region
    $region45: #{tpu_custom_call.1} parent=5 // pred_check
      _
    $region46: #{tpu_custom_call.1} parent=5 // pred_check_branch
      %329 = sbr.rel (%p326) target = $region48
    $region47: #{tpu_custom_call.1} parent=5 // pred_region
      %s330 = ssub.s32 %s18, 1
      %p331 = pneg %p58
      %p332 = pneg %p55
      %p333 = pneg %p79
      %p334 = pneg %p76
      %p335 = scmp.lt.s32.totalorder %s28, 1
      %s336 = scalar_select %p335, %s28, 1
      %s337 = smul.addr %s336, 32
      %s338 = smul.addr %s337, 8
      %s339 = scalar_lea.vmem %s2, %s338
      %p340 = pneg %p105
      %p341 = pneg %p102
      %p342 = pneg %p126
      %p343 = pneg %p123
      %p344 = pneg %p147
      %p345 = pneg %p144
      %p346 = pneg %p168
      %p347 = pneg %p165
      %p348 = pneg %p189
      %p349 = pneg %p186
      %p350 = pneg %p219
      %p351 = pneg %p216
      %s352 = sadd.s32 %s29, %s30
      %s353 = smul.u32 16, %s352
      %p354 = scmp.lt.s32.totalorder %s28, 1
      %s355 = scalar_select %p354, %s28, 1
      %p356 = scmp.lt.s32.totalorder %s353, 31
      %s357 = scalar_select %p356, %s353, 31
      %s358 = smul.addr %s355, 32
      %s359 = sadd.s32 %s357, %s358
      %s360 = smul.addr %s359, 8
      %s361 = scalar_lea.vmem %s7, %s360
      %p362 = pneg %p249
      %p363 = pneg %p246
      %s364 = sadd.s32 %s29, %s30
      %s365 = smul.u32 16, %s364
      %p366 = scmp.lt.s32.totalorder %s28, 1
      %s367 = scalar_select %p366, %s28, 1
      %p368 = scmp.lt.s32.totalorder %s365, 31
      %s369 = scalar_select %p368, %s365, 31
      %s370 = smul.addr %s367, 32
      %s371 = sadd.s32 %s369, %s370
      %s372 = smul.addr %s371, 8
      %s373 = scalar_lea.vmem %s8, %s372
      %p374 = pneg %p279
      %p375 = pneg %p276
      %s376 = sadd.s32 %s29, %s30
      %s377 = smul.u32 16, %s376
      %p378 = scmp.lt.s32.totalorder %s28, 1
      %s379 = scalar_select %p378, %s28, 1
      %p380 = scmp.lt.s32.totalorder %s377, 31
      %s381 = scalar_select %p380, %s377, 31
      %s382 = smul.addr %s379, 32
      %s383 = sadd.s32 %s381, %s382
      %s384 = smul.addr %s383, 8
      %s385 = scalar_lea.vmem %s9, %s384
      %p386 = scmp.lt.s32.totalorder %s28, 1
      %s387 = scalar_select %p386, %s28, 1
      %s388 = smul.addr %s387, 32
      %s389 = smul.addr %s388, 8
      %s390 = scalar_lea.vmem %s2, %s389
      %s391 = sadd.s32 %s29, %s30
      %s392 = smul.u32 16, %s391
      %p393 = scmp.lt.s32.totalorder %s28, 1
      %s394 = scalar_select %p393, %s28, 1
      %p395 = scmp.lt.s32.totalorder %s392, 31
      %s396 = scalar_select %p395, %s392, 31
      %s397 = smul.addr %s394, 32
      %s398 = sadd.s32 %s396, %s397
      %s399 = smul.addr %s398, 8
      %s400 = scalar_lea.vmem %s7, %s399
      %s401 = sadd.s32 %s29, %s30
      %s402 = smul.u32 16, %s401
      %s403 = sadd.s32 %s29, %s30
      %s404 = smul.u32 16, %s403
      %p405 = scmp.lt.s32.totalorder %s28, 1
      %s406 = scalar_select %p405, %s28, 1
      %p407 = scmp.lt.s32.totalorder %s404, 31
      %s408 = scalar_select %p407, %s404, 31
      %s409 = smul.addr %s406, 32
      %s410 = sadd.s32 %s408, %s409
      %s411 = smul.addr %s410, 8
      %s412 = scalar_lea.vmem %s8, %s411
      %s413 = sadd.s32 %s29, %s30
      %s414 = smul.u32 16, %s413
      %s415 = sadd.s32 %s29, %s30
      %s416 = smul.u32 16, %s415
      %p417 = scmp.lt.s32.totalorder %s28, 1
      %s418 = scalar_select %p417, %s28, 1
      %p419 = scmp.lt.s32.totalorder %s416, 31
      %s420 = scalar_select %p419, %s416, 31
      %s421 = smul.addr %s418, 32
      %s422 = sadd.s32 %s420, %s421
      %s423 = smul.addr %s422, 8
      %s424 = scalar_lea.vmem %s9, %s423
      %s425 = sadd.s32 %s29, %s30
      %s426 = smul.u32 16, %s425
      %p429 = scmp.eq.s32.totalorder %s30, 0
      // Predicated region
      $region49: #{tpu_custom_call.1} parent=47 // pred_check
        %p430 = pneg %p429
      $region50: #{tpu_custom_call.1} parent=47 // pred_check_branch
        %432 = sbr.rel (%p430) target = $region52
      $region51: #{tpu_custom_call.1} parent=47 // pred_region
        %s433 = sld [smem:[#allocation5]]
        %s434 = smax.f32 %s433, -5.0
        %s435 = smin.f32 %s434, 5.0
        %s436 = smul.f32 %s435, 0.5
        %v437 = vstv %s436
        %v438 = vmul.f32 %v437, 1.442695
        %v439 = vpow.pop %v438
        %s440 = vtos %v439
        %v441 = vld [vmem:[%s390] sm:$0xff]
        %v442 = vld [vmem:[%s390 + $0x8] sm:$0xff]
        %v443 = vld [vmem:[%s390 + $0x10] sm:$0xff]
        %v444 = vld [vmem:[%s390 + $0x18] sm:$0xff]
        %v445 = vld [vmem:[%s390 + $0x20] sm:$0xff]
        %v446 = vld [vmem:[%s390 + $0x28] sm:$0xff]
        %v447 = vld [vmem:[%s390 + $0x30] sm:$0xff]
        %v448 = vld [vmem:[%s390 + $0x38] sm:$0xff]
        %v449 = vld [vmem:[%s390 + $0x40] sm:$0xff]
        %v450 = vld [vmem:[%s390 + $0x48] sm:$0xff]
        %v451 = vld [vmem:[%s390 + $0x50] sm:$0xff]
        %v452 = vld [vmem:[%s390 + $0x58] sm:$0xff]
        %v453 = vld [vmem:[%s390 + $0x60] sm:$0xff]
        %v454 = vld [vmem:[%s390 + $0x68] sm:$0xff]
        %v455 = vld [vmem:[%s390 + $0x70] sm:$0xff]
        %v456 = vld [vmem:[%s390 + $0x78] sm:$0xff]
        %v457 = vld [vmem:[%s390 + $0x80] sm:$0xff]
        %v458 = vld [vmem:[%s390 + $0x88] sm:$0xff]
        %v459 = vld [vmem:[%s390 + $0x90] sm:$0xff]
        %v460 = vld [vmem:[%s390 + $0x98] sm:$0xff]
        %v461 = vld [vmem:[%s390 + $0xa0] sm:$0xff]
        %v462 = vld [vmem:[%s390 + $0xa8] sm:$0xff]
        %v463 = vld [vmem:[%s390 + $0xb0] sm:$0xff]
        %v464 = vld [vmem:[%s390 + $0xb8] sm:$0xff]
        %v465 = vld [vmem:[%s390 + $0xc0] sm:$0xff]
        %v466 = vld [vmem:[%s390 + $0xc8] sm:$0xff]
        %v467 = vld [vmem:[%s390 + $0xd0] sm:$0xff]
        %v468 = vld [vmem:[%s390 + $0xd8] sm:$0xff]
        %v469 = vld [vmem:[%s390 + $0xe0] sm:$0xff]
        %v470 = vld [vmem:[%s390 + $0xe8] sm:$0xff]
        %v471 = vld [vmem:[%s390 + $0xf0] sm:$0xff]
        %v472 = vld [vmem:[%s390 + $0xf8] sm:$0xff]
        %v473 = vld [vmem:[%s3] sm:$0xff]
        %v474 = vld [vmem:[%s3 + $0x8] sm:$0xff]
        %v475 = vld [vmem:[%s4] sm:$0x1]
        %v477 = vlaneseq
        %v478 = vshrl.u32 %v477, 7
        %v479 = vsub.s32 0, %v478
        %v480 = vrot.slane %v475, %v479
        %vm482 = vcmask 130048
        %v484 = vsel %vm482, %v441, 0
        %v487 = vsel %vm482, %v442, 0
        %v490 = vsel %vm482, %v443, 0
        %v493 = vsel %vm482, %v444, 0
        %v496 = vsel %vm482, %v445, 0
        %v499 = vsel %vm482, %v446, 0
        %v502 = vsel %vm482, %v447, 0
        %v505 = vsel %vm482, %v448, 0
        %v508 = vsel %vm482, %v449, 0
        %v511 = vsel %vm482, %v450, 0
        %v514 = vsel %vm482, %v451, 0
        %v517 = vsel %vm482, %v452, 0
        %v520 = vsel %vm482, %v453, 0
        %v523 = vsel %vm482, %v454, 0
        %v526 = vsel %vm482, %v455, 0
        %v529 = vsel %vm482, %v456, 0
        %v532 = vsel %vm482, %v457, 0
        %v535 = vsel %vm482, %v458, 0
        %v538 = vsel %vm482, %v459, 0
        %v541 = vsel %vm482, %v460, 0
        %v544 = vsel %vm482, %v461, 0
        %v547 = vsel %vm482, %v462, 0
        %v550 = vsel %vm482, %v463, 0
        %v553 = vsel %vm482, %v464, 0
        %v556 = vsel %vm482, %v465, 0
        %v559 = vsel %vm482, %v466, 0
        %v562 = vsel %vm482, %v467, 0
        %v565 = vsel %vm482, %v468, 0
        %v568 = vsel %vm482, %v469, 0
        %v571 = vsel %vm482, %v470, 0
        %v574 = vsel %vm482, %v471, 0
        %v577 = vsel %vm482, %v472, 0
        %579 = vmatprep.subr.mxu0 0.0
        %580 = vmatpush1.msra.mxu0 %v473
        %581 = vmatprep.subr.mxu0 0.0
        %582 = vmatpush1.msra.mxu0 %v474
        %583 = vmatprep.subr.mxu0 0.0
        %584 = vmatpush1.msra.mxu0 0.0
        %585 = vmatprep.subr.mxu0 0.0
        %586 = vmatpush1.msra.mxu0 0.0
        %587 = vmatprep.subr.mxu0 0.0
        %588 = vmatpush1.msra.mxu0 0.0
        %589 = vmatprep.subr.mxu0 0.0
        %590 = vmatpush1.msra.mxu0 0.0
        %591 = vmatprep.subr.mxu0 0.0
        %592 = vmatpush1.msra.mxu0 0.0
        %593 = vmatprep.subr.mxu0 0.0
        %594 = vmatpush1.msra.mxu0 0.0
        %595 = vmatprep.subr.mxu0 0.0
        %596 = vmatpush1.msra.mxu0 0.0
        %597 = vmatprep.subr.mxu0 0.0
        %598 = vmatpush1.msra.mxu0 0.0
        %599 = vmatprep.subr.mxu0 0.0
        %600 = vmatpush1.msra.mxu0 0.0
        %601 = vmatprep.subr.mxu0 0.0
        %602 = vmatpush1.msra.mxu0 0.0
        %603 = vmatprep.subr.mxu0 0.0
        %604 = vmatpush1.msra.mxu0 0.0
        %605 = vmatprep.subr.mxu0 0.0
        %606 = vmatpush1.msra.mxu0 0.0
        %607 = vmatprep.subr.mxu0 0.0
        %608 = vmatpush1.msra.mxu0 0.0
        %609 = vmatprep.subr.mxu0 0.0
        %610 = vmatpush1.msra.mxu0 0.0
        %611 = vmatprep.subr.mxu0 0.0
        %612 = vmatpush1.msra.mxu0 0.0
        %613 = vmatprep.subr.mxu0 0.0
        %614 = vmatpush1.msra.mxu0 0.0
        %615 = vmatprep.subr.mxu0 0.0
        %616 = vmatpush1.msra.mxu0 0.0
        %617 = vmatprep.subr.mxu0 0.0
        %618 = vmatpush1.msra.mxu0 0.0
        %619 = vmatprep.subr.mxu0 0.0
        %620 = vmatpush1.msra.mxu0 0.0
        %621 = vmatprep.subr.mxu0 0.0
        %622 = vmatpush1.msra.mxu0 0.0
        %623 = vmatprep.subr.mxu0 0.0
        %624 = vmatpush1.msra.mxu0 0.0
        %625 = vmatprep.subr.mxu0 0.0
        %626 = vmatpush1.msra.mxu0 0.0
        %627 = vmatprep.subr.mxu0 0.0
        %628 = vmatpush1.msra.mxu0 0.0
        %629 = vmatprep.subr.mxu0 0.0
        %630 = vmatpush1.msra.mxu0 0.0
        %631 = vmatprep.subr.mxu0 0.0
        %632 = vmatpush1.msra.mxu0 0.0
        %633 = vmatprep.subr.mxu0 0.0
        %634 = vmatpush1.msra.mxu0 0.0
        %635 = vmatprep.subr.mxu0 0.0
        %636 = vmatpush1.msra.mxu0 0.0
        %637 = vmatprep.subr.mxu0 0.0
        %638 = vmatpush1.msra.mxu0 0.0
        %639 = vmatprep.subr.mxu0 0.0
        %640 = vmatpush1.msra.mxu0 0.0
        %641 = vmatprep.subr.mxu0 0.0
        %642 = vmatpush1.msra.mxu0 0.0
        %643 = vmatprep.mubr.f32.mxu0 0.0
        %644 = vmatmul.mubr.f32.gmra.mrb[0].mxu0 %v484
        %v645 = vpop.f32.mrb[0].mxu0
        %v646 = vadd.f32 %v480, %v645
        %v647 = vpop.f32.mrb[0].mxu0
        %648 = vmatprep.mubr.f32.mxu0 0.0
        %649 = vmatmul.mubr.f32.gmra.mrb[0].mxu0 %v487
        %v650 = vpop.f32.mrb[0].mxu0
        %v651 = vadd.f32 %v480, %v650
        %v652 = vpop.f32.mrb[0].mxu0
        %653 = vmatprep.mubr.f32.mxu0 0.0
        %654 = vmatmul.mubr.f32.gmra.mrb[0].mxu0 %v490
        %v655 = vpop.f32.mrb[0].mxu0
        %v656 = vadd.f32 %v480, %v655
        %v657 = vpop.f32.mrb[0].mxu0
        %658 = vmatprep.mubr.f32.mxu0 0.0
        %659 = vmatmul.mubr.f32.gmra.mrb[0].mxu0 %v493
        %v660 = vpop.f32.mrb[0].mxu0
        %v661 = vadd.f32 %v480, %v660
        %v662 = vpop.f32.mrb[0].mxu0
        %663 = vmatprep.mubr.f32.mxu0 0.0
        %664 = vmatmul.mubr.f32.gmra.mrb[0].mxu0 %v496
        %v665 = vpop.f32.mrb[0].mxu0
        %v666 = vadd.f32 %v480, %v665
        %v667 = vpop.f32.mrb[0].mxu0
        %668 = vmatprep.mubr.f32.mxu0 0.0
        %669 = vmatmul.mubr.f32.gmra.mrb[0].mxu0 %v499
        %v670 = vpop.f32.mrb[0].mxu0
        %v671 = vadd.f32 %v480, %v670
        %v672 = vpop.f32.mrb[0].mxu0
        %673 = vmatprep.mubr.f32.mxu0 0.0
        %674 = vmatmul.mubr.f32.gmra.mrb[0].mxu0 %v502
        %v675 = vpop.f32.mrb[0].mxu0
        %v676 = vadd.f32 %v480, %v675
        %v677 = vpop.f32.mrb[0].mxu0
        %678 = vmatprep.mubr.f32.mxu0 0.0
        %679 = vmatmul.mubr.f32.gmra.mrb[0].mxu0 %v505
        %v680 = vpop.f32.mrb[0].mxu0
        %v681 = vadd.f32 %v480, %v680
        %v682 = vpop.f32.mrb[0].mxu0
        %683 = vmatprep.mubr.f32.mxu0 0.0
        %684 = vmatmul.mubr.f32.gmra.mrb[0].mxu0 %v508
        %v685 = vpop.f32.mrb[0].mxu0
        %v686 = vadd.f32 %v480, %v685
        %v687 = vpop.f32.mrb[0].mxu0
        %688 = vmatprep.mubr.f32.mxu0 0.0
        %689 = vmatmul.mubr.f32.gmra.mrb[0].mxu0 %v511
        %v690 = vpop.f32.mrb[0].mxu0
        %v691 = vadd.f32 %v480, %v690
        %v692 = vpop.f32.mrb[0].mxu0
        %693 = vmatprep.mubr.f32.mxu0 0.0
        %694 = vmatmul.mubr.f32.gmra.mrb[0].mxu0 %v514
        %v695 = vpop.f32.mrb[0].mxu0
        %v696 = vadd.f32 %v480, %v695
        %v697 = vpop.f32.mrb[0].mxu0
        %698 = vmatprep.mubr.f32.mxu0 0.0
        %699 = vmatmul.mubr.f32.gmra.mrb[0].mxu0 %v517
        %v700 = vpop.f32.mrb[0].mxu0
        %v701 = vadd.f32 %v480, %v700
        %v702 = vpop.f32.mrb[0].mxu0
        %703 = vmatprep.mubr.f32.mxu0 0.0
        %704 = vmatmul.mubr.f32.gmra.mrb[0].mxu0 %v520
        %v705 = vpop.f32.mrb[0].mxu0
        %v706 = vadd.f32 %v480, %v705
        %v707 = vpop.f32.mrb[0].mxu0
        %708 = vmatprep.mubr.f32.mxu0 0.0
        %709 = vmatmul.mubr.f32.gmra.mrb[0].mxu0 %v523
        %v710 = vpop.f32.mrb[0].mxu0
        %v711 = vadd.f32 %v480, %v710
        %v712 = vpop.f32.mrb[0].mxu0
        %713 = vmatprep.mubr.f32.mxu0 0.0
        %714 = vmatmul.mubr.f32.gmra.mrb[0].mxu0 %v526
        %v715 = vpop.f32.mrb[0].mxu0
        %v716 = vadd.f32 %v480, %v715
        %v717 = vpop.f32.mrb[0].mxu0
        %718 = vmatprep.mubr.f32.mxu0 0.0
        %719 = vmatmul.mubr.f32.gmra.mrb[0].mxu0 %v529
        %v720 = vpop.f32.mrb[0].mxu0
        %v721 = vadd.f32 %v480, %v720
        %v722 = vpop.f32.mrb[0].mxu0
        %723 = vmatprep.mubr.f32.mxu0 0.0
        %724 = vmatmul.mubr.f32.gmra.mrb[0].mxu0 %v532
        %v725 = vpop.f32.mrb[0].mxu0
        %v726 = vadd.f32 %v480, %v725
        %v727 = vpop.f32.mrb[0].mxu0
        %728 = vmatprep.mubr.f32.mxu0 0.0
        %729 = vmatmul.mubr.f32.gmra.mrb[0].mxu0 %v535
        %v730 = vpop.f32.mrb[0].mxu0
        %v731 = vadd.f32 %v480, %v730
        %v732 = vpop.f32.mrb[0].mxu0
        %733 = vmatprep.mubr.f32.mxu0 0.0
        %734 = vmatmul.mubr.f32.gmra.mrb[0].mxu0 %v538
        %v735 = vpop.f32.mrb[0].mxu0
        %v736 = vadd.f32 %v480, %v735
        %v737 = vpop.f32.mrb[0].mxu0
        %738 = vmatprep.mubr.f32.mxu0 0.0
        %739 = vmatmul.mubr.f32.gmra.mrb[0].mxu0 %v541
        %v740 = vpop.f32.mrb[0].mxu0
        %v741 = vadd.f32 %v480, %v740
        %v742 = vpop.f32.mrb[0].mxu0
        %743 = vmatprep.mubr.f32.mxu0 0.0
        %744 = vmatmul.mubr.f32.gmra.mrb[0].mxu0 %v544
        %v745 = vpop.f32.mrb[0].mxu0
        %v746 = vadd.f32 %v480, %v745
        %v747 = vpop.f32.mrb[0].mxu0
        %748 = vmatprep.mubr.f32.mxu0 0.0
        %749 = vmatmul.mubr.f32.gmra.mrb[0].mxu0 %v547
        %v750 = vpop.f32.mrb[0].mxu0
        %v751 = vadd.f32 %v480, %v750
        %v752 = vpop.f32.mrb[0].mxu0
        %753 = vmatprep.mubr.f32.mxu0 0.0
        %754 = vmatmul.mubr.f32.gmra.mrb[0].mxu0 %v550
        %v755 = vpop.f32.mrb[0].mxu0
        %v756 = vadd.f32 %v480, %v755
        %v757 = vpop.f32.mrb[0].mxu0
        %758 = vmatprep.mubr.f32.mxu0 0.0
        %759 = vmatmul.mubr.f32.gmra.mrb[0].mxu0 %v553
        %v760 = vpop.f32.mrb[0].mxu0
        %v761 = vadd.f32 %v480, %v760
        %v762 = vpop.f32.mrb[0].mxu0
        %763 = vmatprep.mubr.f32.mxu0 0.0
        %764 = vmatmul.mubr.f32.gmra.mrb[0].mxu0 %v556
        %v765 = vpop.f32.mrb[0].mxu0
        %v766 = vadd.f32 %v480, %v765
        %v767 = vpop.f32.mrb[0].mxu0
        %768 = vmatprep.mubr.f32.mxu0 0.0
        %769 = vmatmul.mubr.f32.gmra.mrb[0].mxu0 %v559
        %v770 = vpop.f32.mrb[0].mxu0
        %v771 = vadd.f32 %v480, %v770
        %v772 = vpop.f32.mrb[0].mxu0
        %773 = vmatprep.mubr.f32.mxu0 0.0
        %774 = vmatmul.mubr.f32.gmra.mrb[0].mxu0 %v562
        %v775 = vpop.f32.mrb[0].mxu0
        %v776 = vadd.f32 %v480, %v775
        %v777 = vpop.f32.mrb[0].mxu0
        %778 = vmatprep.mubr.f32.mxu0 0.0
        %779 = vmatmul.mubr.f32.gmra.mrb[0].mxu0 %v565
        %v780 = vpop.f32.mrb[0].mxu0
        %v781 = vadd.f32 %v480, %v780
        %v782 = vpop.f32.mrb[0].mxu0
        %783 = vmatprep.mubr.f32.mxu0 0.0
        %784 = vmatmul.mubr.f32.gmra.mrb[0].mxu0 %v568
        %v785 = vpop.f32.mrb[0].mxu0
        %v786 = vadd.f32 %v480, %v785
        %v787 = vpop.f32.mrb[0].mxu0
        %788 = vmatprep.mubr.f32.mxu0 0.0
        %789 = vmatmul.mubr.f32.gmra.mrb[0].mxu0 %v571
        %v790 = vpop.f32.mrb[0].mxu0
        %v791 = vadd.f32 %v480, %v790
        %v792 = vpop.f32.mrb[0].mxu0
        %793 = vmatprep.mubr.f32.mxu0 0.0
        %794 = vmatmul.mubr.f32.gmra.mrb[0].mxu0 %v574
        %v795 = vpop.f32.mrb[0].mxu0
        %v796 = vadd.f32 %v480, %v795
        %v797 = vpop.f32.mrb[0].mxu0
        %798 = vmatprep.mubr.f32.mxu0 0.0
        %799 = vmatmul.mubr.f32.gmra.mrb[0].mxu0 %v577
        %v800 = vpop.f32.mrb[0].mxu0
        %v801 = vadd.f32 %v480, %v800
        %v802 = vpop.f32.mrb[0].mxu0
        %803 = vdwg.mxu0
        %v804 = vmax.f32 %v646, 0.0
        %v805 = vmax.f32 %v651, 0.0
        %v806 = vmax.f32 %v656, 0.0
        %v807 = vmax.f32 %v661, 0.0
        %v808 = vmax.f32 %v666, 0.0
        %v809 = vmax.f32 %v671, 0.0
        %v810 = vmax.f32 %v676, 0.0
        %v811 = vmax.f32 %v681, 0.0
        %v812 = vmax.f32 %v686, 0.0
        %v813 = vmax.f32 %v691, 0.0
        %v814 = vmax.f32 %v696, 0.0
        %v815 = vmax.f32 %v701, 0.0
        %v816 = vmax.f32 %v706, 0.0
        %v817 = vmax.f32 %v711, 0.0
        %v818 = vmax.f32 %v716, 0.0
        %v819 = vmax.f32 %v721, 0.0
        %v820 = vmax.f32 %v726, 0.0
        %v821 = vmax.f32 %v731, 0.0
        %v822 = vmax.f32 %v736, 0.0
        %v823 = vmax.f32 %v741, 0.0
        %v824 = vmax.f32 %v746, 0.0
        %v825 = vmax.f32 %v751, 0.0
        %v826 = vmax.f32 %v756, 0.0
        %v827 = vmax.f32 %v761, 0.0
        %v828 = vmax.f32 %v766, 0.0
        %v829 = vmax.f32 %v771, 0.0
        %v830 = vmax.f32 %v776, 0.0
        %v831 = vmax.f32 %v781, 0.0
        %v832 = vmax.f32 %v786, 0.0
        %v833 = vmax.f32 %v791, 0.0
        %v834 = vmax.f32 %v796, 0.0
        %v835 = vmax.f32 %v801, 0.0
        %v836 = vld [vmem:[%s5] sm:$0xff]
        %v837 = vld [vmem:[%s5 + $0x8] sm:$0xff]
        %v838 = vld [vmem:[%s5 + $0x10] sm:$0xff]
        %v839 = vld [vmem:[%s5 + $0x18] sm:$0xff]
        %v840 = vld [vmem:[%s6] sm:$0x1]
        %v842 = vlaneseq
        %v843 = vshrl.u32 %v842, 7
        %v844 = vsub.s32 0, %v843
        %v845 = vrot.slane %v840, %v844
        %vm847 = vcmask 261120
        %v849 = vsel %vm847, %v804, 0
        %v852 = vsel %vm847, %v805, 0
        %v855 = vsel %vm847, %v806, 0
        %v858 = vsel %vm847, %v807, 0
        %v861 = vsel %vm847, %v808, 0
        %v864 = vsel %vm847, %v809, 0
        %v867 = vsel %vm847, %v810, 0
        %v870 = vsel %vm847, %v811, 0
        %v873 = vsel %vm847, %v812, 0
        %v876 = vsel %vm847, %v813, 0
        %v879 = vsel %vm847, %v814, 0
        %v882 = vsel %vm847, %v815, 0
        %v885 = vsel %vm847, %v816, 0
        %v888 = vsel %vm847, %v817, 0
        %v891 = vsel %vm847, %v818, 0
        %v894 = vsel %vm847, %v819, 0
        %v897 = vsel %vm847, %v820, 0
        %v900 = vsel %vm847, %v821, 0
        %v903 = vsel %vm847, %v822, 0
        %v906 = vsel %vm847, %v823, 0
        %v909 = vsel %vm847, %v824, 0
        %v912 = vsel %vm847, %v825, 0
        %v915 = vsel %vm847, %v826, 0
        %v918 = vsel %vm847, %v827, 0
        %v921 = vsel %vm847, %v828, 0
        %v924 = vsel %vm847, %v829, 0
        %v927 = vsel %vm847, %v830, 0
        %v930 = vsel %vm847, %v831, 0
        %v933 = vsel %vm847, %v832, 0
        %v936 = vsel %vm847, %v833, 0
        %v939 = vsel %vm847, %v834, 0
        %v942 = vsel %vm847, %v835, 0
        %944 = vmatprep.subr.mxu0 0.0
        %945 = vmatpush1.msra.mxu0 %v836
        %946 = vmatprep.subr.mxu0 0.0
        %947 = vmatpush1.msra.mxu0 %v837
        %948 = vmatprep.subr.mxu0 0.0
        %949 = vmatpush1.msra.mxu0 %v838
        %950 = vmatprep.subr.mxu0 0.0
        %951 = vmatpush1.msra.mxu0 %v839
        %952 = vmatprep.subr.mxu0 0.0
        %953 = vmatpush1.msra.mxu0 0.0
        %954 = vmatprep.subr.mxu0 0.0
        %955 = vmatpush1.msra.mxu0 0.0
        %956 = vmatprep.subr.mxu0 0.0
        %957 = vmatpush1.msra.mxu0 0.0
        %958 = vmatprep.subr.mxu0 0.0
        %959 = vmatpush1.msra.mxu0 0.0
        %960 = vmatprep.subr.mxu0 0.0
        %961 = vmatpush1.msra.mxu0 0.0
        %962 = vmatprep.subr.mxu0 0.0
        %963 = vmatpush1.msra.mxu0 0.0
        %964 = vmatprep.subr.mxu0 0.0
        %965 = vmatpush1.msra.mxu0 0.0
        %966 = vmatprep.subr.mxu0 0.0
        %967 = vmatpush1.msra.mxu0 0.0
        %968 = vmatprep.subr.mxu0 0.0
        %969 = vmatpush1.msra.mxu0 0.0
        %970 = vmatprep.subr.mxu0 0.0
        %971 = vmatpush1.msra.mxu0 0.0
        %972 = vmatprep.subr.mxu0 0.0
        %973 = vmatpush1.msra.mxu0 0.0
        %974 = vmatprep.subr.mxu0 0.0
        %975 = vmatpush1.msra.mxu0 0.0
        %976 = vmatprep.subr.mxu0 0.0
        %977 = vmatpush1.msra.mxu0 0.0
        %978 = vmatprep.subr.mxu0 0.0
        %979 = vmatpush1.msra.mxu0 0.0
        %980 = vmatprep.subr.mxu0 0.0
        %981 = vmatpush1.msra.mxu0 0.0
        %982 = vmatprep.subr.mxu0 0.0
        %983 = vmatpush1.msra.mxu0 0.0
        %984 = vmatprep.subr.mxu0 0.0
        %985 = vmatpush1.msra.mxu0 0.0
        %986 = vmatprep.subr.mxu0 0.0
        %987 = vmatpush1.msra.mxu0 0.0
        %988 = vmatprep.subr.mxu0 0.0
        %989 = vmatpush1.msra.mxu0 0.0
        %990 = vmatprep.subr.mxu0 0.0
        %991 = vmatpush1.msra.mxu0 0.0
        %992 = vmatprep.subr.mxu0 0.0
        %993 = vmatpush1.msra.mxu0 0.0
        %994 = vmatprep.subr.mxu0 0.0
        %995 = vmatpush1.msra.mxu0 0.0
        %996 = vmatprep.subr.mxu0 0.0
        %997 = vmatpush1.msra.mxu0 0.0
        %998 = vmatprep.subr.mxu0 0.0
        %999 = vmatpush1.msra.mxu0 0.0
        %1000 = vmatprep.subr.mxu0 0.0
        %1001 = vmatpush1.msra.mxu0 0.0
        %1002 = vmatprep.subr.mxu0 0.0
        %1003 = vmatpush1.msra.mxu0 0.0
        %1004 = vmatprep.subr.mxu0 0.0
        %1005 = vmatpush1.msra.mxu0 0.0
        %1006 = vmatprep.subr.mxu0 0.0
        %1007 = vmatpush1.msra.mxu0 0.0
        %1008 = vmatprep.mubr.f32.mxu0 0.0
        %1009 = vmatmul.mubr.f32.gmra.mrb[0].mxu0 %v849
        %v1010 = vpop.f32.mrb[0].mxu0
        %v1011 = vadd.f32 %v845, %v1010
        %v1012 = vpop.f32.mrb[0].mxu0
        %1013 = vmatprep.mubr.f32.mxu0 0.0
        %1014 = vmatmul.mubr.f32.gmra.mrb[0].mxu0 %v852
        %v1015 = vpop.f32.mrb[0].mxu0
        %v1016 = vadd.f32 %v845, %v1015
        %v1017 = vpop.f32.mrb[0].mxu0
        %1018 = vmatprep.mubr.f32.mxu0 0.0
        %1019 = vmatmul.mubr.f32.gmra.mrb[0].mxu0 %v855
        %v1020 = vpop.f32.mrb[0].mxu0
        %v1021 = vadd.f32 %v845, %v1020
        %v1022 = vpop.f32.mrb[0].mxu0
        %1023 = vmatprep.mubr.f32.mxu0 0.0
        %1024 = vmatmul.mubr.f32.gmra.mrb[0].mxu0 %v858
        %v1025 = vpop.f32.mrb[0].mxu0
        %v1026 = vadd.f32 %v845, %v1025
        %v1027 = vpop.f32.mrb[0].mxu0
        %1028 = vmatprep.mubr.f32.mxu0 0.0
        %1029 = vmatmul.mubr.f32.gmra.mrb[0].mxu0 %v861
        %v1030 = vpop.f32.mrb[0].mxu0
        %v1031 = vadd.f32 %v845, %v1030
        %v1032 = vpop.f32.mrb[0].mxu0
        %1033 = vmatprep.mubr.f32.mxu0 0.0
        %1034 = vmatmul.mubr.f32.gmra.mrb[0].mxu0 %v864
        %v1035 = vpop.f32.mrb[0].mxu0
        %v1036 = vadd.f32 %v845, %v1035
        %v1037 = vpop.f32.mrb[0].mxu0
        %1038 = vmatprep.mubr.f32.mxu0 0.0
        %1039 = vmatmul.mubr.f32.gmra.mrb[0].mxu0 %v867
        %v1040 = vpop.f32.mrb[0].mxu0
        %v1041 = vadd.f32 %v845, %v1040
        %v1042 = vpop.f32.mrb[0].mxu0
        %1043 = vmatprep.mubr.f32.mxu0 0.0
        %1044 = vmatmul.mubr.f32.gmra.mrb[0].mxu0 %v870
        %v1045 = vpop.f32.mrb[0].mxu0
        %v1046 = vadd.f32 %v845, %v1045
        %v1047 = vpop.f32.mrb[0].mxu0
        %1048 = vmatprep.mubr.f32.mxu0 0.0
        %1049 = vmatmul.mubr.f32.gmra.mrb[0].mxu0 %v873
        %v1050 = vpop.f32.mrb[0].mxu0
        %v1051 = vadd.f32 %v845, %v1050
        %v1052 = vpop.f32.mrb[0].mxu0
        %1053 = vmatprep.mubr.f32.mxu0 0.0
        %1054 = vmatmul.mubr.f32.gmra.mrb[0].mxu0 %v876
        %v1055 = vpop.f32.mrb[0].mxu0
        %v1056 = vadd.f32 %v845, %v1055
        %v1057 = vpop.f32.mrb[0].mxu0
        %1058 = vmatprep.mubr.f32.mxu0 0.0
        %1059 = vmatmul.mubr.f32.gmra.mrb[0].mxu0 %v879
        %v1060 = vpop.f32.mrb[0].mxu0
        %v1061 = vadd.f32 %v845, %v1060
        %v1062 = vpop.f32.mrb[0].mxu0
        %1063 = vmatprep.mubr.f32.mxu0 0.0
        %1064 = vmatmul.mubr.f32.gmra.mrb[0].mxu0 %v882
        %v1065 = vpop.f32.mrb[0].mxu0
        %v1066 = vadd.f32 %v845, %v1065
        %v1067 = vpop.f32.mrb[0].mxu0
        %1068 = vmatprep.mubr.f32.mxu0 0.0
        %1069 = vmatmul.mubr.f32.gmra.mrb[0].mxu0 %v885
        %v1070 = vpop.f32.mrb[0].mxu0
        %v1071 = vadd.f32 %v845, %v1070
        %v1072 = vpop.f32.mrb[0].mxu0
        %1073 = vmatprep.mubr.f32.mxu0 0.0
        %1074 = vmatmul.mubr.f32.gmra.mrb[0].mxu0 %v888
        %v1075 = vpop.f32.mrb[0].mxu0
        %v1076 = vadd.f32 %v845, %v1075
        %v1077 = vpop.f32.mrb[0].mxu0
        %1078 = vmatprep.mubr.f32.mxu0 0.0
        %1079 = vmatmul.mubr.f32.gmra.mrb[0].mxu0 %v891
        %v1080 = vpop.f32.mrb[0].mxu0
        %v1081 = vadd.f32 %v845, %v1080
        %v1082 = vpop.f32.mrb[0].mxu0
        %1083 = vmatprep.mubr.f32.mxu0 0.0
        %1084 = vmatmul.mubr.f32.gmra.mrb[0].mxu0 %v894
        %v1085 = vpop.f32.mrb[0].mxu0
        %v1086 = vadd.f32 %v845, %v1085
        %v1087 = vpop.f32.mrb[0].mxu0
        %1088 = vmatprep.mubr.f32.mxu0 0.0
        %1089 = vmatmul.mubr.f32.gmra.mrb[0].mxu0 %v897
        %v1090 = vpop.f32.mrb[0].mxu0
        %v1091 = vadd.f32 %v845, %v1090
        %v1092 = vpop.f32.mrb[0].mxu0
        %1093 = vmatprep.mubr.f32.mxu0 0.0
        %1094 = vmatmul.mubr.f32.gmra.mrb[0].mxu0 %v900
        %v1095 = vpop.f32.mrb[0].mxu0
        %v1096 = vadd.f32 %v845, %v1095
        %v1097 = vpop.f32.mrb[0].mxu0
        %1098 = vmatprep.mubr.f32.mxu0 0.0
        %1099 = vmatmul.mubr.f32.gmra.mrb[0].mxu0 %v903
        %v1100 = vpop.f32.mrb[0].mxu0
        %v1101 = vadd.f32 %v845, %v1100
        %v1102 = vpop.f32.mrb[0].mxu0
        %1103 = vmatprep.mubr.f32.mxu0 0.0
        %1104 = vmatmul.mubr.f32.gmra.mrb[0].mxu0 %v906
        %v1105 = vpop.f32.mrb[0].mxu0
        %v1106 = vadd.f32 %v845, %v1105
        %v1107 = vpop.f32.mrb[0].mxu0
        %1108 = vmatprep.mubr.f32.mxu0 0.0
        %1109 = vmatmul.mubr.f32.gmra.mrb[0].mxu0 %v909
        %v1110 = vpop.f32.mrb[0].mxu0
        %v1111 = vadd.f32 %v845, %v1110
        %v1112 = vpop.f32.mrb[0].mxu0
        %1113 = vmatprep.mubr.f32.mxu0 0.0
        %1114 = vmatmul.mubr.f32.gmra.mrb[0].mxu0 %v912
        %v1115 = vpop.f32.mrb[0].mxu0
        %v1116 = vadd.f32 %v845, %v1115
        %v1117 = vpop.f32.mrb[0].mxu0
        %1118 = vmatprep.mubr.f32.mxu0 0.0
        %1119 = vmatmul.mubr.f32.gmra.mrb[0].mxu0 %v915
        %v1120 = vpop.f32.mrb[0].mxu0
        %v1121 = vadd.f32 %v845, %v1120
        %v1122 = vpop.f32.mrb[0].mxu0
        %1123 = vmatprep.mubr.f32.mxu0 0.0
        %1124 = vmatmul.mubr.f32.gmra.mrb[0].mxu0 %v918
        %v1125 = vpop.f32.mrb[0].mxu0
        %v1126 = vadd.f32 %v845, %v1125
        %v1127 = vpop.f32.mrb[0].mxu0
        %1128 = vmatprep.mubr.f32.mxu0 0.0
        %1129 = vmatmul.mubr.f32.gmra.mrb[0].mxu0 %v921
        %v1130 = vpop.f32.mrb[0].mxu0
        %v1131 = vadd.f32 %v845, %v1130
        %v1132 = vpop.f32.mrb[0].mxu0
        %1133 = vmatprep.mubr.f32.mxu0 0.0
        %1134 = vmatmul.mubr.f32.gmra.mrb[0].mxu0 %v924
        %v1135 = vpop.f32.mrb[0].mxu0
        %v1136 = vadd.f32 %v845, %v1135
        %v1137 = vpop.f32.mrb[0].mxu0
        %1138 = vmatprep.mubr.f32.mxu0 0.0
        %1139 = vmatmul.mubr.f32.gmra.mrb[0].mxu0 %v927
        %v1140 = vpop.f32.mrb[0].mxu0
        %v1141 = vadd.f32 %v845, %v1140
        %v1142 = vpop.f32.mrb[0].mxu0
        %1143 = vmatprep.mubr.f32.mxu0 0.0
        %1144 = vmatmul.mubr.f32.gmra.mrb[0].mxu0 %v930
        %v1145 = vpop.f32.mrb[0].mxu0
        %v1146 = vadd.f32 %v845, %v1145
        %v1147 = vpop.f32.mrb[0].mxu0
        %1148 = vmatprep.mubr.f32.mxu0 0.0
        %1149 = vmatmul.mubr.f32.gmra.mrb[0].mxu0 %v933
        %v1150 = vpop.f32.mrb[0].mxu0
        %v1151 = vadd.f32 %v845, %v1150
        %v1152 = vpop.f32.mrb[0].mxu0
        %1153 = vmatprep.mubr.f32.mxu0 0.0
        %1154 = vmatmul.mubr.f32.gmra.mrb[0].mxu0 %v936
        %v1155 = vpop.f32.mrb[0].mxu0
        %v1156 = vadd.f32 %v845, %v1155
        %v1157 = vpop.f32.mrb[0].mxu0
        %1158 = vmatprep.mubr.f32.mxu0 0.0
        %1159 = vmatmul.mubr.f32.gmra.mrb[0].mxu0 %v939
        %v1160 = vpop.f32.mrb[0].mxu0
        %v1161 = vadd.f32 %v845, %v1160
        %v1162 = vpop.f32.mrb[0].mxu0
        %1163 = vmatprep.mubr.f32.mxu0 0.0
        %1164 = vmatmul.mubr.f32.gmra.mrb[0].mxu0 %v942
        %v1165 = vpop.f32.mrb[0].mxu0
        %v1166 = vadd.f32 %v845, %v1165
        %v1167 = vpop.f32.mrb[0].mxu0
        %1168 = vdwg.mxu0
        %1169 = vst.msk [vmem:[#allocation2] sm:$0xff] %vm847, %v1011
        %1170 = vst.msk [vmem:[#allocation2 + $0x8] sm:$0xff] %vm847, %v1016
        %1171 = vst.msk [vmem:[#allocation2 + $0x10] sm:$0xff] %vm847, %v1021
        %1172 = vst.msk [vmem:[#allocation2 + $0x18] sm:$0xff] %vm847, %v1026
        %1173 = vst.msk [vmem:[#allocation2 + $0x20] sm:$0xff] %vm847, %v1031
        %1174 = vst.msk [vmem:[#allocation2 + $0x28] sm:$0xff] %vm847, %v1036
        %1175 = vst.msk [vmem:[#allocation2 + $0x30] sm:$0xff] %vm847, %v1041
        %1176 = vst.msk [vmem:[#allocation2 + $0x38] sm:$0xff] %vm847, %v1046
        %1177 = vst.msk [vmem:[#allocation2 + $0x40] sm:$0xff] %vm847, %v1051
        %1178 = vst.msk [vmem:[#allocation2 + $0x48] sm:$0xff] %vm847, %v1056
        %1179 = vst.msk [vmem:[#allocation2 + $0x50] sm:$0xff] %vm847, %v1061
        %1180 = vst.msk [vmem:[#allocation2 + $0x58] sm:$0xff] %vm847, %v1066
        %1181 = vst.msk [vmem:[#allocation2 + $0x60] sm:$0xff] %vm847, %v1071
        %1182 = vst.msk [vmem:[#allocation2 + $0x68] sm:$0xff] %vm847, %v1076
        %1183 = vst.msk [vmem:[#allocation2 + $0x70] sm:$0xff] %vm847, %v1081
        %1184 = vst.msk [vmem:[#allocation2 + $0x78] sm:$0xff] %vm847, %v1086
        %1185 = vst.msk [vmem:[#allocation2 + $0x80] sm:$0xff] %vm847, %v1091
        %1186 = vst.msk [vmem:[#allocation2 + $0x88] sm:$0xff] %vm847, %v1096
        %1187 = vst.msk [vmem:[#allocation2 + $0x90] sm:$0xff] %vm847, %v1101
        %1188 = vst.msk [vmem:[#allocation2 + $0x98] sm:$0xff] %vm847, %v1106
        %1189 = vst.msk [vmem:[#allocation2 + $0xa0] sm:$0xff] %vm847, %v1111
        %1190 = vst.msk [vmem:[#allocation2 + $0xa8] sm:$0xff] %vm847, %v1116
        %1191 = vst.msk [vmem:[#allocation2 + $0xb0] sm:$0xff] %vm847, %v1121
        %1192 = vst.msk [vmem:[#allocation2 + $0xb8] sm:$0xff] %vm847, %v1126
        %1193 = vst.msk [vmem:[#allocation2 + $0xc0] sm:$0xff] %vm847, %v1131
        %1194 = vst.msk [vmem:[#allocation2 + $0xc8] sm:$0xff] %vm847, %v1136
        %1195 = vst.msk [vmem:[#allocation2 + $0xd0] sm:$0xff] %vm847, %v1141
        %1196 = vst.msk [vmem:[#allocation2 + $0xd8] sm:$0xff] %vm847, %v1146
        %1197 = vst.msk [vmem:[#allocation2 + $0xe0] sm:$0xff] %vm847, %v1151
        %1198 = vst.msk [vmem:[#allocation2 + $0xe8] sm:$0xff] %vm847, %v1156
        %1199 = vst.msk [vmem:[#allocation2 + $0xf0] sm:$0xff] %vm847, %v1161
        %1200 = vst.msk [vmem:[#allocation2 + $0xf8] sm:$0xff] %vm847, %v1166
        %v1201 = vstv %s440
        %v1202 = vmul.f32 %v1011, %v1201
        %v1203 = vmul.f32 %v1016, %v1201
        %v1204 = vmul.f32 %v1021, %v1201
        %v1205 = vmul.f32 %v1026, %v1201
        %v1206 = vmul.f32 %v1031, %v1201
        %v1207 = vmul.f32 %v1036, %v1201
        %v1208 = vmul.f32 %v1041, %v1201
        %v1209 = vmul.f32 %v1046, %v1201
        %v1210 = vmul.f32 %v1051, %v1201
        %v1211 = vmul.f32 %v1056, %v1201
        %v1212 = vmul.f32 %v1061, %v1201
        %v1213 = vmul.f32 %v1066, %v1201
        %v1214 = vmul.f32 %v1071, %v1201
        %v1215 = vmul.f32 %v1076, %v1201
        %v1216 = vmul.f32 %v1081, %v1201
        %v1217 = vmul.f32 %v1086, %v1201
        %v1218 = vmul.f32 %v1091, %v1201
        %v1219 = vmul.f32 %v1096, %v1201
        %v1220 = vmul.f32 %v1101, %v1201
        %v1221 = vmul.f32 %v1106, %v1201
        %v1222 = vmul.f32 %v1111, %v1201
        %v1223 = vmul.f32 %v1116, %v1201
        %v1224 = vmul.f32 %v1121, %v1201
        %v1225 = vmul.f32 %v1126, %v1201
        %v1226 = vmul.f32 %v1131, %v1201
        %v1227 = vmul.f32 %v1136, %v1201
        %v1228 = vmul.f32 %v1141, %v1201
        %v1229 = vmul.f32 %v1146, %v1201
        %v1230 = vmul.f32 %v1151, %v1201
        %v1231 = vmul.f32 %v1156, %v1201
        %v1232 = vmul.f32 %v1161, %v1201
        %v1233 = vmul.f32 %v1166, %v1201
        %v1234 = vpack.c.bf16 %v1203, %v1202
        %v1235 = vpack.c.bf16 %v1205, %v1204
        %v1236 = vpack.c.bf16 %v1207, %v1206
        %v1237 = vpack.c.bf16 %v1209, %v1208
        %v1238 = vpack.c.bf16 %v1211, %v1210
        %v1239 = vpack.c.bf16 %v1213, %v1212
        %v1240 = vpack.c.bf16 %v1215, %v1214
        %v1241 = vpack.c.bf16 %v1217, %v1216
        %v1242 = vpack.c.bf16 %v1219, %v1218
        %v1243 = vpack.c.bf16 %v1221, %v1220
        %v1244 = vpack.c.bf16 %v1223, %v1222
        %v1245 = vpack.c.bf16 %v1225, %v1224
        %v1246 = vpack.c.bf16 %v1227, %v1226
        %v1247 = vpack.c.bf16 %v1229, %v1228
        %v1248 = vpack.c.bf16 %v1231, %v1230
        %v1249 = vpack.c.bf16 %v1233, %v1232
        %1250 = vst.msk [vmem:[#allocation3] sm:$0xff] %vm847, %v1234
        %1251 = vst.msk [vmem:[#allocation3 + $0x8] sm:$0xff] %vm847, %v1235
        %1252 = vst.msk [vmem:[#allocation3 + $0x10] sm:$0xff] %vm847, %v1236
        %1253 = vst.msk [vmem:[#allocation3 + $0x18] sm:$0xff] %vm847, %v1237
        %1254 = vst.msk [vmem:[#allocation3 + $0x20] sm:$0xff] %vm847, %v1238
        %1255 = vst.msk [vmem:[#allocation3 + $0x28] sm:$0xff] %vm847, %v1239
        %1256 = vst.msk [vmem:[#allocation3 + $0x30] sm:$0xff] %vm847, %v1240
        %1257 = vst.msk [vmem:[#allocation3 + $0x38] sm:$0xff] %vm847, %v1241
        %1258 = vst.msk [vmem:[#allocation3 + $0x40] sm:$0xff] %vm847, %v1242
        %1259 = vst.msk [vmem:[#allocation3 + $0x48] sm:$0xff] %vm847, %v1243
        %1260 = vst.msk [vmem:[#allocation3 + $0x50] sm:$0xff] %vm847, %v1244
        %1261 = vst.msk [vmem:[#allocation3 + $0x58] sm:$0xff] %vm847, %v1245
        %1262 = vst.msk [vmem:[#allocation3 + $0x60] sm:$0xff] %vm847, %v1246
        %1263 = vst.msk [vmem:[#allocation3 + $0x68] sm:$0xff] %vm847, %v1247
        %1264 = vst.msk [vmem:[#allocation3 + $0x70] sm:$0xff] %vm847, %v1248
        %1265 = vst.msk [vmem:[#allocation3 + $0x78] sm:$0xff] %vm847, %v1249
        %v1266 = vunpack.c.l.bf16 %v1234
        %v1267 = vunpack.c.h.bf16 %v1234
        %v1268 = vunpack.c.l.bf16 %v1235
        %v1269 = vunpack.c.h.bf16 %v1235
        %v1270 = vunpack.c.l.bf16 %v1236
        %v1271 = vunpack.c.h.bf16 %v1236
        %v1272 = vunpack.c.l.bf16 %v1237
        %v1273 = vunpack.c.h.bf16 %v1237
        %v1274 = vunpack.c.l.bf16 %v1238
        %v1275 = vunpack.c.h.bf16 %v1238
        %v1276 = vunpack.c.l.bf16 %v1239
        %v1277 = vunpack.c.h.bf16 %v1239
        %v1278 = vunpack.c.l.bf16 %v1240
        %v1279 = vunpack.c.h.bf16 %v1240
        %v1280 = vunpack.c.l.bf16 %v1241
        %v1281 = vunpack.c.h.bf16 %v1241
        %v1282 = vunpack.c.l.bf16 %v1242
        %v1283 = vunpack.c.h.bf16 %v1242
        %v1284 = vunpack.c.l.bf16 %v1243
        %v1285 = vunpack.c.h.bf16 %v1243
        %v1286 = vunpack.c.l.bf16 %v1244
        %v1287 = vunpack.c.h.bf16 %v1244
        %v1288 = vunpack.c.l.bf16 %v1245
        %v1289 = vunpack.c.h.bf16 %v1245
        %v1290 = vunpack.c.l.bf16 %v1246
        %v1291 = vunpack.c.h.bf16 %v1246
        %v1292 = vunpack.c.l.bf16 %v1247
        %v1293 = vunpack.c.h.bf16 %v1247
        %v1294 = vunpack.c.l.bf16 %v1248
        %v1295 = vunpack.c.h.bf16 %v1248
        %v1296 = vunpack.c.l.bf16 %v1249
        %v1297 = vunpack.c.h.bf16 %v1249
        %v1298 = vmul.f32 %v1266, %v1266
        %v1299 = vmul.f32 %v1267, %v1267
        %v1300 = vmul.f32 %v1268, %v1268
        %v1301 = vmul.f32 %v1269, %v1269
        %v1302 = vmul.f32 %v1270, %v1270
        %v1303 = vmul.f32 %v1271, %v1271
        %v1304 = vmul.f32 %v1272, %v1272
        %v1305 = vmul.f32 %v1273, %v1273
        %v1306 = vmul.f32 %v1274, %v1274
        %v1307 = vmul.f32 %v1275, %v1275
        %v1308 = vmul.f32 %v1276, %v1276
        %v1309 = vmul.f32 %v1277, %v1277
        %v1310 = vmul.f32 %v1278, %v1278
        %v1311 = vmul.f32 %v1279, %v1279
        %v1312 = vmul.f32 %v1280, %v1280
        %v1313 = vmul.f32 %v1281, %v1281
        %v1314 = vmul.f32 %v1282, %v1282
        %v1315 = vmul.f32 %v1283, %v1283
        %v1316 = vmul.f32 %v1284, %v1284
        %v1317 = vmul.f32 %v1285, %v1285
        %v1318 = vmul.f32 %v1286, %v1286
        %v1319 = vmul.f32 %v1287, %v1287
        %v1320 = vmul.f32 %v1288, %v1288
        %v1321 = vmul.f32 %v1289, %v1289
        %v1322 = vmul.f32 %v1290, %v1290
        %v1323 = vmul.f32 %v1291, %v1291
        %v1324 = vmul.f32 %v1292, %v1292
        %v1325 = vmul.f32 %v1293, %v1293
        %v1326 = vmul.f32 %v1294, %v1294
        %v1327 = vmul.f32 %v1295, %v1295
        %v1328 = vmul.f32 %v1296, %v1296
        %v1329 = vmul.f32 %v1297, %v1297
        %v1330 = vsel %vm847, %v1298, 0.0
        %1331 = vadd.xlane.f32.xlu0 %v1330
        %v1332 = vpop.xlane.xlu0 %1331
        %v1333 = vsel %vm847, %v1299, 0.0
        %1334 = vadd.xlane.f32.xlu0 %v1333
        %v1335 = vpop.xlane.xlu0 %1334
        %v1336 = vsel %vm847, %v1300, 0.0
        %1337 = vadd.xlane.f32.xlu0 %v1336
        %v1338 = vpop.xlane.xlu0 %1337
        %v1339 = vsel %vm847, %v1301, 0.0
        %1340 = vadd.xlane.f32.xlu0 %v1339
        %v1341 = vpop.xlane.xlu0 %1340
        %v1342 = vsel %vm847, %v1302, 0.0
        %1343 = vadd.xlane.f32.xlu0 %v1342
        %v1344 = vpop.xlane.xlu0 %1343
        %v1345 = vsel %vm847, %v1303, 0.0
        %1346 = vadd.xlane.f32.xlu0 %v1345
        %v1347 = vpop.xlane.xlu0 %1346
        %v1348 = vsel %vm847, %v1304, 0.0
        %1349 = vadd.xlane.f32.xlu0 %v1348
        %v1350 = vpop.xlane.xlu0 %1349
        %v1351 = vsel %vm847, %v1305, 0.0
        %1352 = vadd.xlane.f32.xlu0 %v1351
        %v1353 = vpop.xlane.xlu0 %1352
        %v1354 = vsel %vm847, %v1306, 0.0
        %1355 = vadd.xlane.f32.xlu0 %v1354
        %v1356 = vpop.xlane.xlu0 %1355
        %v1357 = vsel %vm847, %v1307, 0.0
        %1358 = vadd.xlane.f32.xlu0 %v1357
        %v1359 = vpop.xlane.xlu0 %1358
        %v1360 = vsel %vm847, %v1308, 0.0
        %1361 = vadd.xlane.f32.xlu0 %v1360
        %v1362 = vpop.xlane.xlu0 %1361
        %v1363 = vsel %vm847, %v1309, 0.0
        %1364 = vadd.xlane.f32.xlu0 %v1363
        %v1365 = vpop.xlane.xlu0 %1364
        %v1366 = vsel %vm847, %v1310, 0.0
        %1367 = vadd.xlane.f32.xlu0 %v1366
        %v1368 = vpop.xlane.xlu0 %1367
        %v1369 = vsel %vm847, %v1311, 0.0
        %1370 = vadd.xlane.f32.xlu0 %v1369
        %v1371 = vpop.xlane.xlu0 %1370
        %v1372 = vsel %vm847, %v1312, 0.0
        %1373 = vadd.xlane.f32.xlu0 %v1372
        %v1374 = vpop.xlane.xlu0 %1373
        %v1375 = vsel %vm847, %v1313, 0.0
        %1376 = vadd.xlane.f32.xlu0 %v1375
        %v1377 = vpop.xlane.xlu0 %1376
        %v1378 = vsel %vm847, %v1314, 0.0
        %1379 = vadd.xlane.f32.xlu0 %v1378
        %v1380 = vpop.xlane.xlu0 %1379
        %v1381 = vsel %vm847, %v1315, 0.0
        %1382 = vadd.xlane.f32.xlu0 %v1381
        %v1383 = vpop.xlane.xlu0 %1382
        %v1384 = vsel %vm847, %v1316, 0.0
        %1385 = vadd.xlane.f32.xlu0 %v1384
        %v1386 = vpop.xlane.xlu0 %1385
        %v1387 = vsel %vm847, %v1317, 0.0
        %1388 = vadd.xlane.f32.xlu0 %v1387
        %v1389 = vpop.xlane.xlu0 %1388
        %v1390 = vsel %vm847, %v1318, 0.0
        %1391 = vadd.xlane.f32.xlu0 %v1390
        %v1392 = vpop.xlane.xlu0 %1391
        %v1393 = vsel %vm847, %v1319, 0.0
        %1394 = vadd.xlane.f32.xlu0 %v1393
        %v1395 = vpop.xlane.xlu0 %1394
        %v1396 = vsel %vm847, %v1320, 0.0
        %1397 = vadd.xlane.f32.xlu0 %v1396
        %v1398 = vpop.xlane.xlu0 %1397
        %v1399 = vsel %vm847, %v1321, 0.0
        %1400 = vadd.xlane.f32.xlu0 %v1399
        %v1401 = vpop.xlane.xlu0 %1400
        %v1402 = vsel %vm847, %v1322, 0.0
        %1403 = vadd.xlane.f32.xlu0 %v1402
        %v1404 = vpop.xlane.xlu0 %1403
        %v1405 = vsel %vm847, %v1323, 0.0
        %1406 = vadd.xlane.f32.xlu0 %v1405
        %v1407 = vpop.xlane.xlu0 %1406
        %v1408 = vsel %vm847, %v1324, 0.0
        %1409 = vadd.xlane.f32.xlu0 %v1408
        %v1410 = vpop.xlane.xlu0 %1409
        %v1411 = vsel %vm847, %v1325, 0.0
        %1412 = vadd.xlane.f32.xlu0 %v1411
        %v1413 = vpop.xlane.xlu0 %1412
        %v1414 = vsel %vm847, %v1326, 0.0
        %1415 = vadd.xlane.f32.xlu0 %v1414
        %v1416 = vpop.xlane.xlu0 %1415
        %v1417 = vsel %vm847, %v1327, 0.0
        %1418 = vadd.xlane.f32.xlu0 %v1417
        %v1419 = vpop.xlane.xlu0 %1418
        %v1420 = vsel %vm847, %v1328, 0.0
        %1421 = vadd.xlane.f32.xlu0 %v1420
        %v1422 = vpop.xlane.xlu0 %1421
        %v1423 = vsel %vm847, %v1329, 0.0
        %1424 = vadd.xlane.f32.xlu0 %v1423
        %v1425 = vpop.xlane.xlu0 %1424
        %1426 = vxpose.xlu0.b32.start [1/16] %v1332, 128
        %1427 = vxpose.xlu0.b32.cont [2/16] %v1335, 128
        %1428 = vxpose.xlu0.b32.cont [3/16] %v1338, 128
        %1429 = vxpose.xlu0.b32.cont [4/16] %v1341, 128
        %1430 = vxpose.xlu0.b32.cont [5/16] %v1344, 128
        %1431 = vxpose.xlu0.b32.cont [6/16] %v1347, 128
        %1432 = vxpose.xlu0.b32.cont [7/16] %v1350, 128
        %1433 = vxpose.xlu0.b32.cont [8/16] %v1353, 128
        %1434 = vxpose.xlu0.b32.cont [9/16] %v1356, 128
        %1435 = vxpose.xlu0.b32.cont [10/16] %v1359, 128
        %1436 = vxpose.xlu0.b32.cont [11/16] %v1362, 128
        %1437 = vxpose.xlu0.b32.cont [12/16] %v1365, 128
        %1438 = vxpose.xlu0.b32.cont [13/16] %v1368, 128
        %1439 = vxpose.xlu0.b32.cont [14/16] %v1371, 128
        %1440 = vxpose.xlu0.b32.cont [15/16] %v1374, 128
        %1441 = vxpose.xlu0.b32.end [16/16] %v1377, 128
        %v1442 = vpop.trf.xlu0
        %v1443 = vpop.trf.xlu0
        %v1444 = vpop.trf.xlu0
        %v1445 = vpop.trf.xlu0
        %v1446 = vpop.trf.xlu0
        %v1447 = vpop.trf.xlu0
        %v1448 = vpop.trf.xlu0
        %v1449 = vpop.trf.xlu0
        %v1450 = vpop.trf.xlu0
        %v1451 = vpop.trf.xlu0
        %v1452 = vpop.trf.xlu0
        %v1453 = vpop.trf.xlu0
        %v1454 = vpop.trf.xlu0
        %v1455 = vpop.trf.xlu0
        %v1456 = vpop.trf.xlu0
        %v1457 = vpop.trf.xlu0
        %1458 = vxpose.xlu0.b32.start [1/16] %v1380, 128
        %1459 = vxpose.xlu0.b32.cont [2/16] %v1383, 128
        %1460 = vxpose.xlu0.b32.cont [3/16] %v1386, 128
        %1461 = vxpose.xlu0.b32.cont [4/16] %v1389, 128
        %1462 = vxpose.xlu0.b32.cont [5/16] %v1392, 128
        %1463 = vxpose.xlu0.b32.cont [6/16] %v1395, 128
        %1464 = vxpose.xlu0.b32.cont [7/16] %v1398, 128
        %1465 = vxpose.xlu0.b32.cont [8/16] %v1401, 128
        %1466 = vxpose.xlu0.b32.cont [9/16] %v1404, 128
        %1467 = vxpose.xlu0.b32.cont [10/16] %v1407, 128
        %1468 = vxpose.xlu0.b32.cont [11/16] %v1410, 128
        %1469 = vxpose.xlu0.b32.cont [12/16] %v1413, 128
        %1470 = vxpose.xlu0.b32.cont [13/16] %v1416, 128
        %1471 = vxpose.xlu0.b32.cont [14/16] %v1419, 128
        %1472 = vxpose.xlu0.b32.cont [15/16] %v1422, 128
        %1473 = vxpose.xlu0.b32.end [16/16] %v1425, 128
        %v1474 = vpop.trf.xlu0
        %v1475 = vpop.trf.xlu0
        %v1476 = vpop.trf.xlu0
        %v1477 = vpop.trf.xlu0
        %v1478 = vpop.trf.xlu0
        %v1479 = vpop.trf.xlu0
        %v1480 = vpop.trf.xlu0
        %v1481 = vpop.trf.xlu0
        %v1482 = vpop.trf.xlu0
        %v1483 = vpop.trf.xlu0
        %v1484 = vpop.trf.xlu0
        %v1485 = vpop.trf.xlu0
        %v1486 = vpop.trf.xlu0
        %v1487 = vpop.trf.xlu0
        %v1488 = vpop.trf.xlu0
        %v1489 = vpop.trf.xlu0
        %v1490 = vlaneseq
        %v1491 = vand.u32 %v1490, 127
        %v1492 = vadd.s32 %v1491, 128
        %vm1493 = vcmp.lt.s32.totalorder %v1491, 200
        %vm1494 = vcmp.lt.s32.totalorder %v1492, 200
        %v1495 = vsel %vm1493, %v1442, inf
        %v1496 = vsel %vm1494, %v1474, inf
        %v1499 = vcombine.low %v1495, %v1496
        %v1501 = vunpack.c.l.s4 1966171168
        %v1502 = vunpack.c.0.s8 %v1501
        %v1503 = vlaneseq
        %v1504 = vshrl.u32 %v1503, 7
        %v1505 = vsub.s32 %v1502, %v1504
        %v1506 = vrot.slane %v1499, %v1505
        %v1508 = vunpack.c.l.s4 1966171168
        %v1509 = vunpack.c.0.s8 %v1508
        %v1510 = vlaneseq
        %v1511 = vshrl.u32 %v1510, 7
        %v1512 = vsub.s32 %v1509, %v1511
        %v1513 = vrot.slane %v1506, %v1512
        %v1515 = vlaneseq
        %vm1516 = vcmp.ge.s32.totalorder %v1515, 0
        %vm1517 = vcmp.lt.s32.totalorder %v1515, 256
        %vm1518 = vmand %vm1516, %vm1517
        %1519 = vst.msk [vmem:[#allocation4] sm:$0x3] %vm1518, %v1513
      $region52: #{tpu_custom_call.1} parent=47 // pred_fallthru
        _
      %s1520 = sadd.s32 %s29, %s30
      %s1521 = smul.u32 %s1520, 128
      %s1522 = scalar_lea.vmem [#allocation2], %s1521
      %v1523 = vld [vmem:[%s1522] sm:$0xff]
      %v1524 = vld [vmem:[%s1522 + $0x8] sm:$0xff]
      %v1525 = vld [vmem:[%s1522 + $0x10] sm:$0xff]
      %v1526 = vld [vmem:[%s1522 + $0x18] sm:$0xff]
      %v1527 = vld [vmem:[%s1522 + $0x20] sm:$0xff]
      %v1528 = vld [vmem:[%s1522 + $0x28] sm:$0xff]
      %v1529 = vld [vmem:[%s1522 + $0x30] sm:$0xff]
      %v1530 = vld [vmem:[%s1522 + $0x38] sm:$0xff]
      %v1531 = vld [vmem:[%s1522 + $0x40] sm:$0xff]
      %v1532 = vld [vmem:[%s1522 + $0x48] sm:$0xff]
      %v1533 = vld [vmem:[%s1522 + $0x50] sm:$0xff]
      %v1534 = vld [vmem:[%s1522 + $0x58] sm:$0xff]
      %v1535 = vld [vmem:[%s1522 + $0x60] sm:$0xff]
      %v1536 = vld [vmem:[%s1522 + $0x68] sm:$0xff]
      %v1537 = vld [vmem:[%s1522 + $0x70] sm:$0xff]
      %v1538 = vld [vmem:[%s1522 + $0x78] sm:$0xff]
      %vm1539 = vcmask 261120
      %1540 = vst.msk [vmem:[%s400] sm:$0xff] %vm1539, %v1523
      %1541 = vst.msk [vmem:[%s400 + $0x8] sm:$0xff] %vm1539, %v1524
      %1542 = vst.msk [vmem:[%s400 + $0x10] sm:$0xff] %vm1539, %v1525
      %1543 = vst.msk [vmem:[%s400 + $0x18] sm:$0xff] %vm1539, %v1526
      %1544 = vst.msk [vmem:[%s400 + $0x20] sm:$0xff] %vm1539, %v1527
      %1545 = vst.msk [vmem:[%s400 + $0x28] sm:$0xff] %vm1539, %v1528
      %1546 = vst.msk [vmem:[%s400 + $0x30] sm:$0xff] %vm1539, %v1529
      %1547 = vst.msk [vmem:[%s400 + $0x38] sm:$0xff] %vm1539, %v1530
      %1548 = vst.msk [vmem:[%s400 + $0x40] sm:$0xff] %vm1539, %v1531
      %1549 = vst.msk [vmem:[%s400 + $0x48] sm:$0xff] %vm1539, %v1532
      %1550 = vst.msk [vmem:[%s400 + $0x50] sm:$0xff] %vm1539, %v1533
      %1551 = vst.msk [vmem:[%s400 + $0x58] sm:$0xff] %vm1539, %v1534
      %1552 = vst.msk [vmem:[%s400 + $0x60] sm:$0xff] %vm1539, %v1535
      %1553 = vst.msk [vmem:[%s400 + $0x68] sm:$0xff] %vm1539, %v1536
      %1554 = vst.msk [vmem:[%s400 + $0x70] sm:$0xff] %vm1539, %v1537
      %1555 = vst.msk [vmem:[%s400 + $0x78] sm:$0xff] %vm1539, %v1538
      %s1556 = sshra.s32 %s1521, 4
      %s1557 = sand.u32 %s1521, 15
      %s1558 = smul.addr %s1556, 8
      %s1559 = scalar_lea.vmem [#allocation3], %s1558
      %v1560 = vld [vmem:[%s1559] sm:$0xff]
      %v1561 = vld [vmem:[%s1559 + $0x8] sm:$0xff]
      %v1562 = vld [vmem:[%s1559 + $0x10] sm:$0xff]
      %v1563 = vld [vmem:[%s1559 + $0x18] sm:$0xff]
      %v1564 = vld [vmem:[%s1559 + $0x20] sm:$0xff]
      %v1565 = vld [vmem:[%s1559 + $0x28] sm:$0xff]
      %v1566 = vld [vmem:[%s1559 + $0x30] sm:$0xff]
      %v1567 = vld [vmem:[%s1559 + $0x38] sm:$0xff]
      %v1568 = vunpack.c.l.bf16 %v1560
      %v1569 = vunpack.c.h.bf16 %v1560
      %v1570 = vunpack.c.l.bf16 %v1561
      %v1571 = vunpack.c.h.bf16 %v1561
      %v1572 = vunpack.c.l.bf16 %v1562
      %v1573 = vunpack.c.h.bf16 %v1562
      %v1574 = vunpack.c.l.bf16 %v1563
      %v1575 = vunpack.c.h.bf16 %v1563
      %v1576 = vunpack.c.l.bf16 %v1564
      %v1577 = vunpack.c.h.bf16 %v1564
      %v1578 = vunpack.c.l.bf16 %v1565
      %v1579 = vunpack.c.h.bf16 %v1565
      %v1580 = vunpack.c.l.bf16 %v1566
      %v1581 = vunpack.c.h.bf16 %v1566
      %v1582 = vunpack.c.l.bf16 %v1567
      %v1583 = vunpack.c.h.bf16 %v1567
      %v1584 = vmul.f32 %v1568, %v1568
      %v1585 = vmul.f32 %v1569, %v1569
      %v1586 = vmul.f32 %v1570, %v1570
      %v1587 = vmul.f32 %v1571, %v1571
      %v1588 = vmul.f32 %v1572, %v1572
      %v1589 = vmul.f32 %v1573, %v1573
      %v1590 = vmul.f32 %v1574, %v1574
      %v1591 = vmul.f32 %v1575, %v1575
      %v1592 = vmul.f32 %v1576, %v1576
      %v1593 = vmul.f32 %v1577, %v1577
      %v1594 = vmul.f32 %v1578, %v1578
      %v1595 = vmul.f32 %v1579, %v1579
      %v1596 = vmul.f32 %v1580, %v1580
      %v1597 = vmul.f32 %v1581, %v1581
      %v1598 = vmul.f32 %v1582, %v1582
      %v1599 = vmul.f32 %v1583, %v1583
      %v1600 = vsel %vm1539, %v1584, 0.0
      %1601 = vadd.xlane.f32.xlu0 %v1600
      %v1602 = vpop.xlane.xlu0 %1601
      %v1603 = vsel %vm1539, %v1585, 0.0
      %1604 = vadd.xlane.f32.xlu0 %v1603
      %v1605 = vpop.xlane.xlu0 %1604
      %v1606 = vsel %vm1539, %v1586, 0.0
      %1607 = vadd.xlane.f32.xlu0 %v1606
      %v1608 = vpop.xlane.xlu0 %1607
      %v1609 = vsel %vm1539, %v1587, 0.0
      %1610 = vadd.xlane.f32.xlu0 %v1609
      %v1611 = vpop.xlane.xlu0 %1610
      %v1612 = vsel %vm1539, %v1588, 0.0
      %1613 = vadd.xlane.f32.xlu0 %v1612
      %v1614 = vpop.xlane.xlu0 %1613
      %v1615 = vsel %vm1539, %v1589, 0.0
      %1616 = vadd.xlane.f32.xlu0 %v1615
      %v1617 = vpop.xlane.xlu0 %1616
      %v1618 = vsel %vm1539, %v1590, 0.0
      %1619 = vadd.xlane.f32.xlu0 %v1618
      %v1620 = vpop.xlane.xlu0 %1619
      %v1621 = vsel %vm1539, %v1591, 0.0
      %1622 = vadd.xlane.f32.xlu0 %v1621
      %v1623 = vpop.xlane.xlu0 %1622
      %v1624 = vsel %vm1539, %v1592, 0.0
      %1625 = vadd.xlane.f32.xlu0 %v1624
      %v1626 = vpop.xlane.xlu0 %1625
      %v1627 = vsel %vm1539, %v1593, 0.0
      %1628 = vadd.xlane.f32.xlu0 %v1627
      %v1629 = vpop.xlane.xlu0 %1628
      %v1630 = vsel %vm1539, %v1594, 0.0
      %1631 = vadd.xlane.f32.xlu0 %v1630
      %v1632 = vpop.xlane.xlu0 %1631
      %v1633 = vsel %vm1539, %v1595, 0.0
      %1634 = vadd.xlane.f32.xlu0 %v1633
      %v1635 = vpop.xlane.xlu0 %1634
      %v1636 = vsel %vm1539, %v1596, 0.0
      %1637 = vadd.xlane.f32.xlu0 %v1636
      %v1638 = vpop.xlane.xlu0 %1637
      %v1639 = vsel %vm1539, %v1597, 0.0
      %1640 = vadd.xlane.f32.xlu0 %v1639
      %v1641 = vpop.xlane.xlu0 %1640
      %v1642 = vsel %vm1539, %v1598, 0.0
      %1643 = vadd.xlane.f32.xlu0 %v1642
      %v1644 = vpop.xlane.xlu0 %1643
      %v1645 = vsel %vm1539, %v1599, 0.0
      %1646 = vadd.xlane.f32.xlu0 %v1645
      %v1647 = vpop.xlane.xlu0 %1646
      %v1648 = vmul.bf16 %v1560, 1073758208
      %v1649 = vmul.bf16 %v1561, 1073758208
      %v1650 = vmul.bf16 %v1562, 1073758208
      %v1651 = vmul.bf16 %v1563, 1073758208
      %v1652 = vmul.bf16 %v1564, 1073758208
      %v1653 = vmul.bf16 %v1565, 1073758208
      %v1654 = vmul.bf16 %v1566, 1073758208
      %v1655 = vmul.bf16 %v1567, 1073758208
      %v1656 = vld [vmem:[#allocation3] sm:$0xff]
      %v1657 = vld [vmem:[#allocation3 + $0x8] sm:$0xff]
      %v1658 = vld [vmem:[#allocation3 + $0x10] sm:$0xff]
      %v1659 = vld [vmem:[#allocation3 + $0x18] sm:$0xff]
      %v1660 = vld [vmem:[#allocation3 + $0x20] sm:$0xff]
      %v1661 = vld [vmem:[#allocation3 + $0x28] sm:$0xff]
      %v1662 = vld [vmem:[#allocation3 + $0x30] sm:$0xff]
      %v1663 = vld [vmem:[#allocation3 + $0x38] sm:$0xff]
      %v1664 = vld [vmem:[#allocation3 + $0x40] sm:$0xff]
      %v1665 = vld [vmem:[#allocation3 + $0x48] sm:$0xff]
      %v1666 = vld [vmem:[#allocation3 + $0x50] sm:$0xff]
      %v1667 = vld [vmem:[#allocation3 + $0x58] sm:$0xff]
      %v1668 = vld [vmem:[#allocation3 + $0x60] sm:$0xff]
      %v1669 = vld [vmem:[#allocation3 + $0x68] sm:$0xff]
      %v1670 = vld [vmem:[#allocation3 + $0x70] sm:$0xff]
      %v1671 = vld [vmem:[#allocation3 + $0x78] sm:$0xff]
      %v1673 = vsel %vm1539, %v1648, 0
      %v1676 = vsel %vm1539, %v1649, 0
      %v1679 = vsel %vm1539, %v1650, 0
      %v1682 = vsel %vm1539, %v1651, 0
      %v1685 = vsel %vm1539, %v1652, 0
      %v1688 = vsel %vm1539, %v1653, 0
      %v1691 = vsel %vm1539, %v1654, 0
      %v1694 = vsel %vm1539, %v1655, 0
      %v1697 = vsel %vm1539, %v1656, 0
      %v1700 = vsel %vm1539, %v1657, 0
      %v1703 = vsel %vm1539, %v1658, 0
      %v1706 = vsel %vm1539, %v1659, 0
      %v1709 = vsel %vm1539, %v1660, 0
      %v1712 = vsel %vm1539, %v1661, 0
      %v1715 = vsel %vm1539, %v1662, 0
      %v1718 = vsel %vm1539, %v1663, 0
      %v1721 = vsel %vm1539, %v1664, 0
      %v1724 = vsel %vm1539, %v1665, 0
      %v1727 = vsel %vm1539, %v1666, 0
      %v1730 = vsel %vm1539, %v1667, 0
      %v1733 = vsel %vm1539, %v1668, 0
      %v1736 = vsel %vm1539, %v1669, 0
      %v1739 = vsel %vm1539, %v1670, 0
      %v1742 = vsel %vm1539, %v1671, 0
      %1744 = vmatprep.subr.bf16.mxu0 0
      %1745 = vmatpush1.bf16.xpose.msra.mxu0 %v1697
      %1746 = vmatprep.subr.bf16.mxu0 0
      %1747 = vmatpush1.bf16.xpose.msra.mxu0 %v1700
      %1748 = vmatprep.subr.bf16.mxu0 0
      %1749 = vmatpush1.bf16.xpose.msra.mxu0 %v1703
      %1750 = vmatprep.subr.bf16.mxu0 0
      %1751 = vmatpush1.bf16.xpose.msra.mxu0 %v1706
      %1752 = vmatprep.subr.bf16.mxu0 0
      %1753 = vmatpush1.bf16.xpose.msra.mxu0 %v1709
      %1754 = vmatprep.subr.bf16.mxu0 0
      %1755 = vmatpush1.bf16.xpose.msra.mxu0 %v1712
      %1756 = vmatprep.subr.bf16.mxu0 0
      %1757 = vmatpush1.bf16.xpose.msra.mxu0 %v1715
      %1758 = vmatprep.subr.bf16.mxu0 0
      %1759 = vmatpush1.bf16.xpose.msra.mxu0 %v1718
      %1760 = vmatprep.subr.bf16.mxu0 0
      %1761 = vmatpush1.bf16.xpose.msra.mxu0 %v1721
      %1762 = vmatprep.subr.bf16.mxu0 0
      %1763 = vmatpush1.bf16.xpose.msra.mxu0 %v1724
      %1764 = vmatprep.subr.bf16.mxu0 0
      %1765 = vmatpush1.bf16.xpose.msra.mxu0 %v1727
      %1766 = vmatprep.subr.bf16.mxu0 0
      %1767 = vmatpush1.bf16.xpose.msra.mxu0 %v1730
      %1768 = vmatprep.subr.bf16.mxu0 0
      %1769 = vmatpush1.bf16.xpose.msra.mxu0 %v1733
      %1770 = vmatprep.subr.bf16.mxu0 0
      %1771 = vmatpush1.bf16.xpose.msra.mxu0 %v1736
      %1772 = vmatprep.subr.bf16.mxu0 0
      %1773 = vmatpush1.bf16.xpose.msra.mxu0 %v1739
      %1774 = vmatprep.subr.bf16.mxu0 0
      %1775 = vmatpush1.bf16.xpose.msra.mxu0 %v1742
      %1776 = vmatprep.mubr.bf16.mxu0 0
      %1777 = vmatmul.mubr.bf16.gmra.mrb[0].mxu0 %v1673
      %v1778 = vpop.f32.mrb[0].mxu0
      %v1779 = vadd.f32 0.0, %v1778
      %v1780 = vpop.f32.mrb[0].mxu0
      %v1781 = vadd.f32 0.0, %v1780
      %v1782 = vpop.f32.mrb[0].mxu0
      %v1783 = vadd.f32 0.0, %v1782
      %v1784 = vpop.f32.mrb[0].mxu0
      %v1785 = vadd.f32 0.0, %v1784
      %1786 = vmatprep.mubr.bf16.mxu0 0
      %1787 = vmatmul.mubr.bf16.gmra.mrb[0].mxu0 %v1676
      %v1788 = vpop.f32.mrb[0].mxu0
      %v1789 = vadd.f32 0.0, %v1788
      %v1790 = vpop.f32.mrb[0].mxu0
      %v1791 = vadd.f32 0.0, %v1790
      %v1792 = vpop.f32.mrb[0].mxu0
      %v1793 = vadd.f32 0.0, %v1792
      %v1794 = vpop.f32.mrb[0].mxu0
      %v1795 = vadd.f32 0.0, %v1794
      %1796 = vmatprep.mubr.bf16.mxu0 0
      %1797 = vmatmul.mubr.bf16.gmra.mrb[0].mxu0 %v1679
      %v1798 = vpop.f32.mrb[0].mxu0
      %v1799 = vadd.f32 0.0, %v1798
      %v1800 = vpop.f32.mrb[0].mxu0
      %v1801 = vadd.f32 0.0, %v1800
      %v1802 = vpop.f32.mrb[0].mxu0
      %v1803 = vadd.f32 0.0, %v1802
      %v1804 = vpop.f32.mrb[0].mxu0
      %v1805 = vadd.f32 0.0, %v1804
      %1806 = vmatprep.mubr.bf16.mxu0 0
      %1807 = vmatmul.mubr.bf16.gmra.mrb[0].mxu0 %v1682
      %v1808 = vpop.f32.mrb[0].mxu0
      %v1809 = vadd.f32 0.0, %v1808
      %v1810 = vpop.f32.mrb[0].mxu0
      %v1811 = vadd.f32 0.0, %v1810
      %v1812 = vpop.f32.mrb[0].mxu0
      %v1813 = vadd.f32 0.0, %v1812
      %v1814 = vpop.f32.mrb[0].mxu0
      %v1815 = vadd.f32 0.0, %v1814
      %1816 = vmatprep.mubr.bf16.mxu0 0
      %1817 = vmatmul.mubr.bf16.gmra.mrb[0].mxu0 %v1685
      %v1818 = vpop.f32.mrb[0].mxu0
      %v1819 = vadd.f32 0.0, %v1818
      %v1820 = vpop.f32.mrb[0].mxu0
      %v1821 = vadd.f32 0.0, %v1820
      %v1822 = vpop.f32.mrb[0].mxu0
      %v1823 = vadd.f32 0.0, %v1822
      %v1824 = vpop.f32.mrb[0].mxu0
      %v1825 = vadd.f32 0.0, %v1824
      %1826 = vmatprep.mubr.bf16.mxu0 0
      %1827 = vmatmul.mubr.bf16.gmra.mrb[0].mxu0 %v1688
      %v1828 = vpop.f32.mrb[0].mxu0
      %v1829 = vadd.f32 0.0, %v1828
      %v1830 = vpop.f32.mrb[0].mxu0
      %v1831 = vadd.f32 0.0, %v1830
      %v1832 = vpop.f32.mrb[0].mxu0
      %v1833 = vadd.f32 0.0, %v1832
      %v1834 = vpop.f32.mrb[0].mxu0
      %v1835 = vadd.f32 0.0, %v1834
      %1836 = vmatprep.mubr.bf16.mxu0 0
      %1837 = vmatmul.mubr.bf16.gmra.mrb[0].mxu0 %v1691
      %v1838 = vpop.f32.mrb[0].mxu0
      %v1839 = vadd.f32 0.0, %v1838
      %v1840 = vpop.f32.mrb[0].mxu0
      %v1841 = vadd.f32 0.0, %v1840
      %v1842 = vpop.f32.mrb[0].mxu0
      %v1843 = vadd.f32 0.0, %v1842
      %v1844 = vpop.f32.mrb[0].mxu0
      %v1845 = vadd.f32 0.0, %v1844
      %1846 = vmatprep.mubr.bf16.mxu0 0
      %1847 = vmatmul.mubr.bf16.gmra.mrb[0].mxu0 %v1694
      %v1848 = vpop.f32.mrb[0].mxu0
      %v1849 = vadd.f32 0.0, %v1848
      %v1850 = vpop.f32.mrb[0].mxu0
      %v1851 = vadd.f32 0.0, %v1850
      %v1852 = vpop.f32.mrb[0].mxu0
      %v1853 = vadd.f32 0.0, %v1852
      %v1854 = vpop.f32.mrb[0].mxu0
      %v1855 = vadd.f32 0.0, %v1854
      %1856 = vdwg.mxu0
      %v1857 = vlaneseq
      %v1858 = vshrl.u32 %v1857, 7
      %v1859 = vadd.s32 %v1858, 8
      %v1860 = vadd.s32 %v1858, 16
      %v1861 = vadd.s32 %v1858, 24
      %v1862 = vadd.s32 %v1858, 32
      %v1863 = vadd.s32 %v1858, 40
      %v1864 = vadd.s32 %v1858, 48
      %v1865 = vadd.s32 %v1858, 56
      %v1866 = vadd.s32 %v1858, 64
      %v1867 = vadd.s32 %v1858, 72
      %v1868 = vadd.s32 %v1858, 80
      %v1869 = vadd.s32 %v1858, 88
      %v1870 = vadd.s32 %v1858, 96
      %v1871 = vadd.s32 %v1858, 104
      %v1872 = vadd.s32 %v1858, 112
      %v1873 = vadd.s32 %v1858, 120
      %v1874 = vstv %s1521
      %v1875 = vadd.s32 %v1858, %v1874
      %v1876 = vadd.s32 %v1859, %v1874
      %v1877 = vadd.s32 %v1860, %v1874
      %v1878 = vadd.s32 %v1861, %v1874
      %v1879 = vadd.s32 %v1862, %v1874
      %v1880 = vadd.s32 %v1863, %v1874
      %v1881 = vadd.s32 %v1864, %v1874
      %v1882 = vadd.s32 %v1865, %v1874
      %v1883 = vadd.s32 %v1866, %v1874
      %v1884 = vadd.s32 %v1867, %v1874
      %v1885 = vadd.s32 %v1868, %v1874
      %v1886 = vadd.s32 %v1869, %v1874
      %v1887 = vadd.s32 %v1870, %v1874
      %v1888 = vadd.s32 %v1871, %v1874
      %v1889 = vadd.s32 %v1872, %v1874
      %v1890 = vadd.s32 %v1873, %v1874
      %v1891 = vlaneseq
      %v1892 = vand.u32 %v1891, 127
      %v1893 = vadd.s32 %v1892, 128
      %s1894 = sld [smem:[#allocation6]]
      %s1895 = smul.u32 %s1894, 1013904223
      %s1896 = smul.u32 %s28, 69069
      %s1897 = sadd.s32 %s1895, %s1896
      %s1898 = sadd.s32 %s1897, 1
      %v1899 = vmul.u32 %v1892, 2654435769
      %v1900 = vmul.u32 %v1893, 2654435769
      %v1901 = vmul.u32 %v1875, 3432918353
      %v1902 = vmul.u32 %v1876, 3432918353
      %v1903 = vmul.u32 %v1877, 3432918353
      %v1904 = vmul.u32 %v1878, 3432918353
      %v1905 = vmul.u32 %v1879, 3432918353
      %v1906 = vmul.u32 %v1880, 3432918353
      %v1907 = vmul.u32 %v1881, 3432918353
      %v1908 = vmul.u32 %v1882, 3432918353
      %v1909 = vmul.u32 %v1883, 3432918353
      %v1910 = vmul.u32 %v1884, 3432918353
      %v1911 = vmul.u32 %v1885, 3432918353
      %v1912 = vmul.u32 %v1886, 3432918353
      %v1913 = vmul.u32 %v1887, 3432918353
      %v1914 = vmul.u32 %v1888, 3432918353
      %v1915 = vmul.u32 %v1889, 3432918353
      %v1916 = vmul.u32 %v1890, 3432918353
      %v1917 = vadd.s32 %v1899, %v1901
      %v1918 = vadd.s32 %v1900, %v1901
      %v1919 = vadd.s32 %v1899, %v1902
      %v1920 = vadd.s32 %v1900, %v1902
      %v1921 = vadd.s32 %v1899, %v1903
      %v1922 = vadd.s32 %v1900, %v1903
      %v1923 = vadd.s32 %v1899, %v1904
      %v1924 = vadd.s32 %v1900, %v1904
      %v1925 = vadd.s32 %v1899, %v1905
      %v1926 = vadd.s32 %v1900, %v1905
      %v1927 = vadd.s32 %v1899, %v1906
      %v1928 = vadd.s32 %v1900, %v1906
      %v1929 = vadd.s32 %v1899, %v1907
      %v1930 = vadd.s32 %v1900, %v1907
      %v1931 = vadd.s32 %v1899, %v1908
      %v1932 = vadd.s32 %v1900, %v1908
      %v1933 = vadd.s32 %v1899, %v1909
      %v1934 = vadd.s32 %v1900, %v1909
      %v1935 = vadd.s32 %v1899, %v1910
      %v1936 = vadd.s32 %v1900, %v1910
      %v1937 = vadd.s32 %v1899, %v1911
      %v1938 = vadd.s32 %v1900, %v1911
      %v1939 = vadd.s32 %v1899, %v1912
      %v1940 = vadd.s32 %v1900, %v1912
      %v1941 = vadd.s32 %v1899, %v1913
      %v1942 = vadd.s32 %v1900, %v1913
      %v1943 = vadd.s32 %v1899, %v1914
      %v1944 = vadd.s32 %v1900, %v1914
      %v1945 = vadd.s32 %v1899, %v1915
      %v1946 = vadd.s32 %v1900, %v1915
      %v1947 = vadd.s32 %v1899, %v1916
      %v1948 = vadd.s32 %v1900, %v1916
      %v1949 = vstv %s1898
      %v1950 = vxor.u32 %v1917, %v1949
      %v1951 = vxor.u32 %v1918, %v1949
      %v1952 = vxor.u32 %v1919, %v1949
      %v1953 = vxor.u32 %v1920, %v1949
      %v1954 = vxor.u32 %v1921, %v1949
      %v1955 = vxor.u32 %v1922, %v1949
      %v1956 = vxor.u32 %v1923, %v1949
      %v1957 = vxor.u32 %v1924, %v1949
      %v1958 = vxor.u32 %v1925, %v1949
      %v1959 = vxor.u32 %v1926, %v1949
      %v1960 = vxor.u32 %v1927, %v1949
      %v1961 = vxor.u32 %v1928, %v1949
      %v1962 = vxor.u32 %v1929, %v1949
      %v1963 = vxor.u32 %v1930, %v1949
      %v1964 = vxor.u32 %v1931, %v1949
      %v1965 = vxor.u32 %v1932, %v1949
      %v1966 = vxor.u32 %v1933, %v1949
      %v1967 = vxor.u32 %v1934, %v1949
      %v1968 = vxor.u32 %v1935, %v1949
      %v1969 = vxor.u32 %v1936, %v1949
      %v1970 = vxor.u32 %v1937, %v1949
      %v1971 = vxor.u32 %v1938, %v1949
      %v1972 = vxor.u32 %v1939, %v1949
      %v1973 = vxor.u32 %v1940, %v1949
      %v1974 = vxor.u32 %v1941, %v1949
      %v1975 = vxor.u32 %v1942, %v1949
      %v1976 = vxor.u32 %v1943, %v1949
      %v1977 = vxor.u32 %v1944, %v1949
      %v1978 = vxor.u32 %v1945, %v1949
      %v1979 = vxor.u32 %v1946, %v1949
      %v1980 = vxor.u32 %v1947, %v1949
      %v1981 = vxor.u32 %v1948, %v1949
      %v1982 = vshrl.u32 %v1950, 16
      %v1983 = vshrl.u32 %v1951, 16
      %v1984 = vshrl.u32 %v1952, 16
      %v1985 = vshrl.u32 %v1953, 16
      %v1986 = vshrl.u32 %v1954, 16
      %v1987 = vshrl.u32 %v1955, 16
      %v1988 = vshrl.u32 %v1956, 16
      %v1989 = vshrl.u32 %v1957, 16
      %v1990 = vshrl.u32 %v1958, 16
      %v1991 = vshrl.u32 %v1959, 16
      %v1992 = vshrl.u32 %v1960, 16
      %v1993 = vshrl.u32 %v1961, 16
      %v1994 = vshrl.u32 %v1962, 16
      %v1995 = vshrl.u32 %v1963, 16
      %v1996 = vshrl.u32 %v1964, 16
      %v1997 = vshrl.u32 %v1965, 16
      %v1998 = vshrl.u32 %v1966, 16
      %v1999 = vshrl.u32 %v1967, 16
      %v2000 = vshrl.u32 %v1968, 16
      %v2001 = vshrl.u32 %v1969, 16
      %v2002 = vshrl.u32 %v1970, 16
      %v2003 = vshrl.u32 %v1971, 16
      %v2004 = vshrl.u32 %v1972, 16
      %v2005 = vshrl.u32 %v1973, 16
      %v2006 = vshrl.u32 %v1974, 16
      %v2007 = vshrl.u32 %v1975, 16
      %v2008 = vshrl.u32 %v1976, 16
      %v2009 = vshrl.u32 %v1977, 16
      %v2010 = vshrl.u32 %v1978, 16
      %v2011 = vshrl.u32 %v1979, 16
      %v2012 = vshrl.u32 %v1980, 16
      %v2013 = vshrl.u32 %v1981, 16
      %v2014 = vxor.u32 %v1950, %v1982
      %v2015 = vxor.u32 %v1951, %v1983
      %v2016 = vxor.u32 %v1952, %v1984
      %v2017 = vxor.u32 %v1953, %v1985
      %v2018 = vxor.u32 %v1954, %v1986
      %v2019 = vxor.u32 %v1955, %v1987
      %v2020 = vxor.u32 %v1956, %v1988
      %v2021 = vxor.u32 %v1957, %v1989
      %v2022 = vxor.u32 %v1958, %v1990
      %v2023 = vxor.u32 %v1959, %v1991
      %v2024 = vxor.u32 %v1960, %v1992
      %v2025 = vxor.u32 %v1961, %v1993
      %v2026 = vxor.u32 %v1962, %v1994
      %v2027 = vxor.u32 %v1963, %v1995
      %v2028 = vxor.u32 %v1964, %v1996
      %v2029 = vxor.u32 %v1965, %v1997
      %v2030 = vxor.u32 %v1966, %v1998
      %v2031 = vxor.u32 %v1967, %v1999
      %v2032 = vxor.u32 %v1968, %v2000
      %v2033 = vxor.u32 %v1969, %v2001
      %v2034 = vxor.u32 %v1970, %v2002
      %v2035 = vxor.u32 %v1971, %v2003
      %v2036 = vxor.u32 %v1972, %v2004
      %v2037 = vxor.u32 %v1973, %v2005
      %v2038 = vxor.u32 %v1974, %v2006
      %v2039 = vxor.u32 %v1975, %v2007
      %v2040 = vxor.u32 %v1976, %v2008
      %v2041 = vxor.u32 %v1977, %v2009
      %v2042 = vxor.u32 %v1978, %v2010
      %v2043 = vxor.u32 %v1979, %v2011
      %v2044 = vxor.u32 %v1980, %v2012
      %v2045 = vxor.u32 %v1981, %v2013
      %v2046 = vmul.u32 %v2014, 2246822507
      %v2047 = vmul.u32 %v2015, 2246822507
      %v2048 = vmul.u32 %v2016, 2246822507
      %v2049 = vmul.u32 %v2017, 2246822507
      %v2050 = vmul.u32 %v2018, 2246822507
      %v2051 = vmul.u32 %v2019, 2246822507
      %v2052 = vmul.u32 %v2020, 2246822507
      %v2053 = vmul.u32 %v2021, 2246822507
      %v2054 = vmul.u32 %v2022, 2246822507
      %v2055 = vmul.u32 %v2023, 2246822507
      %v2056 = vmul.u32 %v2024, 2246822507
      %v2057 = vmul.u32 %v2025, 2246822507
      %v2058 = vmul.u32 %v2026, 2246822507
      %v2059 = vmul.u32 %v2027, 2246822507
      %v2060 = vmul.u32 %v2028, 2246822507
      %v2061 = vmul.u32 %v2029, 2246822507
      %v2062 = vmul.u32 %v2030, 2246822507
      %v2063 = vmul.u32 %v2031, 2246822507
      %v2064 = vmul.u32 %v2032, 2246822507
      %v2065 = vmul.u32 %v2033, 2246822507
      %v2066 = vmul.u32 %v2034, 2246822507
      %v2067 = vmul.u32 %v2035, 2246822507
      %v2068 = vmul.u32 %v2036, 2246822507
      %v2069 = vmul.u32 %v2037, 2246822507
      %v2070 = vmul.u32 %v2038, 2246822507
      %v2071 = vmul.u32 %v2039, 2246822507
      %v2072 = vmul.u32 %v2040, 2246822507
      %v2073 = vmul.u32 %v2041, 2246822507
      %v2074 = vmul.u32 %v2042, 2246822507
      %v2075 = vmul.u32 %v2043, 2246822507
      %v2076 = vmul.u32 %v2044, 2246822507
      %v2077 = vmul.u32 %v2045, 2246822507
      %v2078 = vshrl.u32 %v2046, 13
      %v2079 = vshrl.u32 %v2047, 13
      %v2080 = vshrl.u32 %v2048, 13
      %v2081 = vshrl.u32 %v2049, 13
      %v2082 = vshrl.u32 %v2050, 13
      %v2083 = vshrl.u32 %v2051, 13
      %v2084 = vshrl.u32 %v2052, 13
      %v2085 = vshrl.u32 %v2053, 13
      %v2086 = vshrl.u32 %v2054, 13
      %v2087 = vshrl.u32 %v2055, 13
      %v2088 = vshrl.u32 %v2056, 13
      %v2089 = vshrl.u32 %v2057, 13
      %v2090 = vshrl.u32 %v2058, 13
      %v2091 = vshrl.u32 %v2059, 13
      %v2092 = vshrl.u32 %v2060, 13
      %v2093 = vshrl.u32 %v2061, 13
      %v2094 = vshrl.u32 %v2062, 13
      %v2095 = vshrl.u32 %v2063, 13
      %v2096 = vshrl.u32 %v2064, 13
      %v2097 = vshrl.u32 %v2065, 13
      %v2098 = vshrl.u32 %v2066, 13
      %v2099 = vshrl.u32 %v2067, 13
      %v2100 = vshrl.u32 %v2068, 13
      %v2101 = vshrl.u32 %v2069, 13
      %v2102 = vshrl.u32 %v2070, 13
      %v2103 = vshrl.u32 %v2071, 13
      %v2104 = vshrl.u32 %v2072, 13
      %v2105 = vshrl.u32 %v2073, 13
      %v2106 = vshrl.u32 %v2074, 13
      %v2107 = vshrl.u32 %v2075, 13
      %v2108 = vshrl.u32 %v2076, 13
      %v2109 = vshrl.u32 %v2077, 13
      %v2110 = vxor.u32 %v2046, %v2078
      %v2111 = vxor.u32 %v2047, %v2079
      %v2112 = vxor.u32 %v2048, %v2080
      %v2113 = vxor.u32 %v2049, %v2081
      %v2114 = vxor.u32 %v2050, %v2082
      %v2115 = vxor.u32 %v2051, %v2083
      %v2116 = vxor.u32 %v2052, %v2084
      %v2117 = vxor.u32 %v2053, %v2085
      %v2118 = vxor.u32 %v2054, %v2086
      %v2119 = vxor.u32 %v2055, %v2087
      %v2120 = vxor.u32 %v2056, %v2088
      %v2121 = vxor.u32 %v2057, %v2089
      %v2122 = vxor.u32 %v2058, %v2090
      %v2123 = vxor.u32 %v2059, %v2091
      %v2124 = vxor.u32 %v2060, %v2092
      %v2125 = vxor.u32 %v2061, %v2093
      %v2126 = vxor.u32 %v2062, %v2094
      %v2127 = vxor.u32 %v2063, %v2095
      %v2128 = vxor.u32 %v2064, %v2096
      %v2129 = vxor.u32 %v2065, %v2097
      %v2130 = vxor.u32 %v2066, %v2098
      %v2131 = vxor.u32 %v2067, %v2099
      %v2132 = vxor.u32 %v2068, %v2100
      %v2133 = vxor.u32 %v2069, %v2101
      %v2134 = vxor.u32 %v2070, %v2102
      %v2135 = vxor.u32 %v2071, %v2103
      %v2136 = vxor.u32 %v2072, %v2104
      %v2137 = vxor.u32 %v2073, %v2105
      %v2138 = vxor.u32 %v2074, %v2106
      %v2139 = vxor.u32 %v2075, %v2107
      %v2140 = vxor.u32 %v2076, %v2108
      %v2141 = vxor.u32 %v2077, %v2109
      %v2142 = vmul.u32 %v2110, 3266489909
      %v2143 = vmul.u32 %v2111, 3266489909
      %v2144 = vmul.u32 %v2112, 3266489909
      %v2145 = vmul.u32 %v2113, 3266489909
      %v2146 = vmul.u32 %v2114, 3266489909
      %v2147 = vmul.u32 %v2115, 3266489909
      %v2148 = vmul.u32 %v2116, 3266489909
      %v2149 = vmul.u32 %v2117, 3266489909
      %v2150 = vmul.u32 %v2118, 3266489909
      %v2151 = vmul.u32 %v2119, 3266489909
      %v2152 = vmul.u32 %v2120, 3266489909
      %v2153 = vmul.u32 %v2121, 3266489909
      %v2154 = vmul.u32 %v2122, 3266489909
      %v2155 = vmul.u32 %v2123, 3266489909
      %v2156 = vmul.u32 %v2124, 3266489909
      %v2157 = vmul.u32 %v2125, 3266489909
      %v2158 = vmul.u32 %v2126, 3266489909
      %v2159 = vmul.u32 %v2127, 3266489909
      %v2160 = vmul.u32 %v2128, 3266489909
      %v2161 = vmul.u32 %v2129, 3266489909
      %v2162 = vmul.u32 %v2130, 3266489909
      %v2163 = vmul.u32 %v2131, 3266489909
      %v2164 = vmul.u32 %v2132, 3266489909
      %v2165 = vmul.u32 %v2133, 3266489909
      %v2166 = vmul.u32 %v2134, 3266489909
      %v2167 = vmul.u32 %v2135, 3266489909
      %v2168 = vmul.u32 %v2136, 3266489909
      %v2169 = vmul.u32 %v2137, 3266489909
      %v2170 = vmul.u32 %v2138, 3266489909
      %v2171 = vmul.u32 %v2139, 3266489909
      %v2172 = vmul.u32 %v2140, 3266489909
      %v2173 = vmul.u32 %v2141, 3266489909
      %v2174 = vshrl.u32 %v2142, 16
      %v2175 = vshrl.u32 %v2143, 16
      %v2176 = vshrl.u32 %v2144, 16
      %v2177 = vshrl.u32 %v2145, 16
      %v2178 = vshrl.u32 %v2146, 16
      %v2179 = vshrl.u32 %v2147, 16
      %v2180 = vshrl.u32 %v2148, 16
      %v2181 = vshrl.u32 %v2149, 16
      %v2182 = vshrl.u32 %v2150, 16
      %v2183 = vshrl.u32 %v2151, 16
      %v2184 = vshrl.u32 %v2152, 16
      %v2185 = vshrl.u32 %v2153, 16
      %v2186 = vshrl.u32 %v2154, 16
      %v2187 = vshrl.u32 %v2155, 16
      %v2188 = vshrl.u32 %v2156, 16
      %v2189 = vshrl.u32 %v2157, 16
      %v2190 = vshrl.u32 %v2158, 16
      %v2191 = vshrl.u32 %v2159, 16
      %v2192 = vshrl.u32 %v2160, 16
      %v2193 = vshrl.u32 %v2161, 16
      %v2194 = vshrl.u32 %v2162, 16
      %v2195 = vshrl.u32 %v2163, 16
      %v2196 = vshrl.u32 %v2164, 16
      %v2197 = vshrl.u32 %v2165, 16
      %v2198 = vshrl.u32 %v2166, 16
      %v2199 = vshrl.u32 %v2167, 16
      %v2200 = vshrl.u32 %v2168, 16
      %v2201 = vshrl.u32 %v2169, 16
      %v2202 = vshrl.u32 %v2170, 16
      %v2203 = vshrl.u32 %v2171, 16
      %v2204 = vshrl.u32 %v2172, 16
      %v2205 = vshrl.u32 %v2173, 16
      %v2206 = vxor.u32 %v2142, %v2174
      %v2207 = vxor.u32 %v2143, %v2175
      %v2208 = vxor.u32 %v2144, %v2176
      %v2209 = vxor.u32 %v2145, %v2177
      %v2210 = vxor.u32 %v2146, %v2178
      %v2211 = vxor.u32 %v2147, %v2179
      %v2212 = vxor.u32 %v2148, %v2180
      %v2213 = vxor.u32 %v2149, %v2181
      %v2214 = vxor.u32 %v2150, %v2182
      %v2215 = vxor.u32 %v2151, %v2183
      %v2216 = vxor.u32 %v2152, %v2184
      %v2217 = vxor.u32 %v2153, %v2185
      %v2218 = vxor.u32 %v2154, %v2186
      %v2219 = vxor.u32 %v2155, %v2187
      %v2220 = vxor.u32 %v2156, %v2188
      %v2221 = vxor.u32 %v2157, %v2189
      %v2222 = vxor.u32 %v2158, %v2190
      %v2223 = vxor.u32 %v2159, %v2191
      %v2224 = vxor.u32 %v2160, %v2192
      %v2225 = vxor.u32 %v2161, %v2193
      %v2226 = vxor.u32 %v2162, %v2194
      %v2227 = vxor.u32 %v2163, %v2195
      %v2228 = vxor.u32 %v2164, %v2196
      %v2229 = vxor.u32 %v2165, %v2197
      %v2230 = vxor.u32 %v2166, %v2198
      %v2231 = vxor.u32 %v2167, %v2199
      %v2232 = vxor.u32 %v2168, %v2200
      %v2233 = vxor.u32 %v2169, %v2201
      %v2234 = vxor.u32 %v2170, %v2202
      %v2235 = vxor.u32 %v2171, %v2203
      %v2236 = vxor.u32 %v2172, %v2204
      %v2237 = vxor.u32 %v2173, %v2205
      %v2238 = vand.u32 %v2206, 8388607
      %v2239 = vand.u32 %v2207, 8388607
      %v2240 = vand.u32 %v2208, 8388607
      %v2241 = vand.u32 %v2209, 8388607
      %v2242 = vand.u32 %v2210, 8388607
      %v2243 = vand.u32 %v2211, 8388607
      %v2244 = vand.u32 %v2212, 8388607
      %v2245 = vand.u32 %v2213, 8388607
      %v2246 = vand.u32 %v2214, 8388607
      %v2247 = vand.u32 %v2215, 8388607
      %v2248 = vand.u32 %v2216, 8388607
      %v2249 = vand.u32 %v2217, 8388607
      %v2250 = vand.u32 %v2218, 8388607
      %v2251 = vand.u32 %v2219, 8388607
      %v2252 = vand.u32 %v2220, 8388607
      %v2253 = vand.u32 %v2221, 8388607
      %v2254 = vand.u32 %v2222, 8388607
      %v2255 = vand.u32 %v2223, 8388607
      %v2256 = vand.u32 %v2224, 8388607
      %v2257 = vand.u32 %v2225, 8388607
      %v2258 = vand.u32 %v2226, 8388607
      %v2259 = vand.u32 %v2227, 8388607
      %v2260 = vand.u32 %v2228, 8388607
      %v2261 = vand.u32 %v2229, 8388607
      %v2262 = vand.u32 %v2230, 8388607
      %v2263 = vand.u32 %v2231, 8388607
      %v2264 = vand.u32 %v2232, 8388607
      %v2265 = vand.u32 %v2233, 8388607
      %v2266 = vand.u32 %v2234, 8388607
      %v2267 = vand.u32 %v2235, 8388607
      %v2268 = vand.u32 %v2236, 8388607
      %v2269 = vand.u32 %v2237, 8388607
      %v2270 = vcvt.s32.f32 %v2238
      %v2271 = vcvt.s32.f32 %v2239
      %v2272 = vcvt.s32.f32 %v2240
      %v2273 = vcvt.s32.f32 %v2241
      %v2274 = vcvt.s32.f32 %v2242
      %v2275 = vcvt.s32.f32 %v2243
      %v2276 = vcvt.s32.f32 %v2244
      %v2277 = vcvt.s32.f32 %v2245
      %v2278 = vcvt.s32.f32 %v2246
      %v2279 = vcvt.s32.f32 %v2247
      %v2280 = vcvt.s32.f32 %v2248
      %v2281 = vcvt.s32.f32 %v2249
      %v2282 = vcvt.s32.f32 %v2250
      %v2283 = vcvt.s32.f32 %v2251
      %v2284 = vcvt.s32.f32 %v2252
      %v2285 = vcvt.s32.f32 %v2253
      %v2286 = vcvt.s32.f32 %v2254
      %v2287 = vcvt.s32.f32 %v2255
      %v2288 = vcvt.s32.f32 %v2256
      %v2289 = vcvt.s32.f32 %v2257
      %v2290 = vcvt.s32.f32 %v2258
      %v2291 = vcvt.s32.f32 %v2259
      %v2292 = vcvt.s32.f32 %v2260
      %v2293 = vcvt.s32.f32 %v2261
      %v2294 = vcvt.s32.f32 %v2262
      %v2295 = vcvt.s32.f32 %v2263
      %v2296 = vcvt.s32.f32 %v2264
      %v2297 = vcvt.s32.f32 %v2265
      %v2298 = vcvt.s32.f32 %v2266
      %v2299 = vcvt.s32.f32 %v2267
      %v2300 = vcvt.s32.f32 %v2268
      %v2301 = vcvt.s32.f32 %v2269
      %v2302 = vmul.f32 %v2270, 1.1920929e-07
      %v2303 = vmul.f32 %v2271, 1.1920929e-07
      %v2304 = vmul.f32 %v2272, 1.1920929e-07
      %v2305 = vmul.f32 %v2273, 1.1920929e-07
      %v2306 = vmul.f32 %v2274, 1.1920929e-07
      %v2307 = vmul.f32 %v2275, 1.1920929e-07
      %v2308 = vmul.f32 %v2276, 1.1920929e-07
      %v2309 = vmul.f32 %v2277, 1.1920929e-07
      %v2310 = vmul.f32 %v2278, 1.1920929e-07
      %v2311 = vmul.f32 %v2279, 1.1920929e-07
      %v2312 = vmul.f32 %v2280, 1.1920929e-07
      %v2313 = vmul.f32 %v2281, 1.1920929e-07
      %v2314 = vmul.f32 %v2282, 1.1920929e-07
      %v2315 = vmul.f32 %v2283, 1.1920929e-07
      %v2316 = vmul.f32 %v2284, 1.1920929e-07
      %v2317 = vmul.f32 %v2285, 1.1920929e-07
      %v2318 = vmul.f32 %v2286, 1.1920929e-07
      %v2319 = vmul.f32 %v2287, 1.1920929e-07
      %v2320 = vmul.f32 %v2288, 1.1920929e-07
      %v2321 = vmul.f32 %v2289, 1.1920929e-07
      %v2322 = vmul.f32 %v2290, 1.1920929e-07
      %v2323 = vmul.f32 %v2291, 1.1920929e-07
      %v2324 = vmul.f32 %v2292, 1.1920929e-07
      %v2325 = vmul.f32 %v2293, 1.1920929e-07
      %v2326 = vmul.f32 %v2294, 1.1920929e-07
      %v2327 = vmul.f32 %v2295, 1.1920929e-07
      %v2328 = vmul.f32 %v2296, 1.1920929e-07
      %v2329 = vmul.f32 %v2297, 1.1920929e-07
      %v2330 = vmul.f32 %v2298, 1.1920929e-07
      %v2331 = vmul.f32 %v2299, 1.1920929e-07
      %v2332 = vmul.f32 %v2300, 1.1920929e-07
      %v2333 = vmul.f32 %v2301, 1.1920929e-07
      %v2334 = vadd.f32 %v2302, 1e-08
      %v2335 = vadd.f32 %v2303, 1e-08
      %v2336 = vadd.f32 %v2304, 1e-08
      %v2337 = vadd.f32 %v2305, 1e-08
      %v2338 = vadd.f32 %v2306, 1e-08
      %v2339 = vadd.f32 %v2307, 1e-08
      %v2340 = vadd.f32 %v2308, 1e-08
      %v2341 = vadd.f32 %v2309, 1e-08
      %v2342 = vadd.f32 %v2310, 1e-08
      %v2343 = vadd.f32 %v2311, 1e-08
      %v2344 = vadd.f32 %v2312, 1e-08
      %v2345 = vadd.f32 %v2313, 1e-08
      %v2346 = vadd.f32 %v2314, 1e-08
      %v2347 = vadd.f32 %v2315, 1e-08
      %v2348 = vadd.f32 %v2316, 1e-08
      %v2349 = vadd.f32 %v2317, 1e-08
      %v2350 = vadd.f32 %v2318, 1e-08
      %v2351 = vadd.f32 %v2319, 1e-08
      %v2352 = vadd.f32 %v2320, 1e-08
      %v2353 = vadd.f32 %v2321, 1e-08
      %v2354 = vadd.f32 %v2322, 1e-08
      %v2355 = vadd.f32 %v2323, 1e-08
      %v2356 = vadd.f32 %v2324, 1e-08
      %v2357 = vadd.f32 %v2325, 1e-08
      %v2358 = vadd.f32 %v2326, 1e-08
      %v2359 = vadd.f32 %v2327, 1e-08
      %v2360 = vadd.f32 %v2328, 1e-08
      %v2361 = vadd.f32 %v2329, 1e-08
      %v2362 = vadd.f32 %v2330, 1e-08
      %v2363 = vadd.f32 %v2331, 1e-08
      %v2364 = vadd.f32 %v2332, 1e-08
      %v2365 = vadd.f32 %v2333, 1e-08
      %v2366 = vlog2.pop %v2334
      %v2367 = vmul.f32 %v2366, 0.6931472
      %v2368 = vlog2.pop %v2335
      %v2369 = vmul.f32 %v2368, 0.6931472
      %v2370 = vlog2.pop %v2336
      %v2371 = vmul.f32 %v2370, 0.6931472
      %v2372 = vlog2.pop %v2337
      %v2373 = vmul.f32 %v2372, 0.6931472
      %v2374 = vlog2.pop %v2338
      %v2375 = vmul.f32 %v2374, 0.6931472
      %v2376 = vlog2.pop %v2339
      %v2377 = vmul.f32 %v2376, 0.6931472
      %v2378 = vlog2.pop %v2340
      %v2379 = vmul.f32 %v2378, 0.6931472
      %v2380 = vlog2.pop %v2341
      %v2381 = vmul.f32 %v2380, 0.6931472
      %v2382 = vlog2.pop %v2342
      %v2383 = vmul.f32 %v2382, 0.6931472
      %v2384 = vlog2.pop %v2343
      %v2385 = vmul.f32 %v2384, 0.6931472
      %v2386 = vlog2.pop %v2344
      %v2387 = vmul.f32 %v2386, 0.6931472
      %v2388 = vlog2.pop %v2345
      %v2389 = vmul.f32 %v2388, 0.6931472
      %v2390 = vlog2.pop %v2346
      %v2391 = vmul.f32 %v2390, 0.6931472
      %v2392 = vlog2.pop %v2347
      %v2393 = vmul.f32 %v2392, 0.6931472
      %v2394 = vlog2.pop %v2348
      %v2395 = vmul.f32 %v2394, 0.6931472
      %v2396 = vlog2.pop %v2349
      %v2397 = vmul.f32 %v2396, 0.6931472
      %v2398 = vlog2.pop %v2350
      %v2399 = vmul.f32 %v2398, 0.6931472
      %v2400 = vlog2.pop %v2351
      %v2401 = vmul.f32 %v2400, 0.6931472
      %v2402 = vlog2.pop %v2352
      %v2403 = vmul.f32 %v2402, 0.6931472
      %v2404 = vlog2.pop %v2353
      %v2405 = vmul.f32 %v2404, 0.6931472
      %v2406 = vlog2.pop %v2354
      %v2407 = vmul.f32 %v2406, 0.6931472
      %v2408 = vlog2.pop %v2355
      %v2409 = vmul.f32 %v2408, 0.6931472
      %v2410 = vlog2.pop %v2356
      %v2411 = vmul.f32 %v2410, 0.6931472
      %v2412 = vlog2.pop %v2357
      %v2413 = vmul.f32 %v2412, 0.6931472
      %v2414 = vlog2.pop %v2358
      %v2415 = vmul.f32 %v2414, 0.6931472
      %v2416 = vlog2.pop %v2359
      %v2417 = vmul.f32 %v2416, 0.6931472
      %v2418 = vlog2.pop %v2360
      %v2419 = vmul.f32 %v2418, 0.6931472
      %v2420 = vlog2.pop %v2361
      %v2421 = vmul.f32 %v2420, 0.6931472
      %v2422 = vlog2.pop %v2362
      %v2423 = vmul.f32 %v2422, 0.6931472
      %v2424 = vlog2.pop %v2363
      %v2425 = vmul.f32 %v2424, 0.6931472
      %v2426 = vlog2.pop %v2364
      %v2427 = vmul.f32 %v2426, 0.6931472
      %v2428 = vlog2.pop %v2365
      %v2429 = vmul.f32 %v2428, 0.6931472
      %v2430 = vsub.f32 0.0, %v2367
      %v2431 = vsub.f32 0.0, %v2369
      %v2432 = vsub.f32 0.0, %v2371
      %v2433 = vsub.f32 0.0, %v2373
      %v2434 = vsub.f32 0.0, %v2375
      %v2435 = vsub.f32 0.0, %v2377
      %v2436 = vsub.f32 0.0, %v2379
      %v2437 = vsub.f32 0.0, %v2381
      %v2438 = vsub.f32 0.0, %v2383
      %v2439 = vsub.f32 0.0, %v2385
      %v2440 = vsub.f32 0.0, %v2387
      %v2441 = vsub.f32 0.0, %v2389
      %v2442 = vsub.f32 0.0, %v2391
      %v2443 = vsub.f32 0.0, %v2393
      %v2444 = vsub.f32 0.0, %v2395
      %v2445 = vsub.f32 0.0, %v2397
      %v2446 = vsub.f32 0.0, %v2399
      %v2447 = vsub.f32 0.0, %v2401
      %v2448 = vsub.f32 0.0, %v2403
      %v2449 = vsub.f32 0.0, %v2405
      %v2450 = vsub.f32 0.0, %v2407
      %v2451 = vsub.f32 0.0, %v2409
      %v2452 = vsub.f32 0.0, %v2411
      %v2453 = vsub.f32 0.0, %v2413
      %v2454 = vsub.f32 0.0, %v2415
      %v2455 = vsub.f32 0.0, %v2417
      %v2456 = vsub.f32 0.0, %v2419
      %v2457 = vsub.f32 0.0, %v2421
      %v2458 = vsub.f32 0.0, %v2423
      %v2459 = vsub.f32 0.0, %v2425
      %v2460 = vsub.f32 0.0, %v2427
      %v2461 = vsub.f32 0.0, %v2429
      %v2462 = vlog2.pop %v2430
      %v2463 = vmul.f32 %v2462, 0.6931472
      %v2464 = vlog2.pop %v2431
      %v2465 = vmul.f32 %v2464, 0.6931472
      %v2466 = vlog2.pop %v2432
      %v2467 = vmul.f32 %v2466, 0.6931472
      %v2468 = vlog2.pop %v2433
      %v2469 = vmul.f32 %v2468, 0.6931472
      %v2470 = vlog2.pop %v2434
      %v2471 = vmul.f32 %v2470, 0.6931472
      %v2472 = vlog2.pop %v2435
      %v2473 = vmul.f32 %v2472, 0.6931472
      %v2474 = vlog2.pop %v2436
      %v2475 = vmul.f32 %v2474, 0.6931472
      %v2476 = vlog2.pop %v2437
      %v2477 = vmul.f32 %v2476, 0.6931472
      %v2478 = vlog2.pop %v2438
      %v2479 = vmul.f32 %v2478, 0.6931472
      %v2480 = vlog2.pop %v2439
      %v2481 = vmul.f32 %v2480, 0.6931472
      %v2482 = vlog2.pop %v2440
      %v2483 = vmul.f32 %v2482, 0.6931472
      %v2484 = vlog2.pop %v2441
      %v2485 = vmul.f32 %v2484, 0.6931472
      %v2486 = vlog2.pop %v2442
      %v2487 = vmul.f32 %v2486, 0.6931472
      %v2488 = vlog2.pop %v2443
      %v2489 = vmul.f32 %v2488, 0.6931472
      %v2490 = vlog2.pop %v2444
      %v2491 = vmul.f32 %v2490, 0.6931472
      %v2492 = vlog2.pop %v2445
      %v2493 = vmul.f32 %v2492, 0.6931472
      %v2494 = vlog2.pop %v2446
      %v2495 = vmul.f32 %v2494, 0.6931472
      %v2496 = vlog2.pop %v2447
      %v2497 = vmul.f32 %v2496, 0.6931472
      %v2498 = vlog2.pop %v2448
      %v2499 = vmul.f32 %v2498, 0.6931472
      %v2500 = vlog2.pop %v2449
      %v2501 = vmul.f32 %v2500, 0.6931472
      %v2502 = vlog2.pop %v2450
      %v2503 = vmul.f32 %v2502, 0.6931472
      %v2504 = vlog2.pop %v2451
      %v2505 = vmul.f32 %v2504, 0.6931472
      %v2506 = vlog2.pop %v2452
      %v2507 = vmul.f32 %v2506, 0.6931472
      %v2508 = vlog2.pop %v2453
      %v2509 = vmul.f32 %v2508, 0.6931472
      %v2510 = vlog2.pop %v2454
      %v2511 = vmul.f32 %v2510, 0.6931472
      %v2512 = vlog2.pop %v2455
      %v2513 = vmul.f32 %v2512, 0.6931472
      %v2514 = vlog2.pop %v2456
      %v2515 = vmul.f32 %v2514, 0.6931472
      %v2516 = vlog2.pop %v2457
      %v2517 = vmul.f32 %v2516, 0.6931472
      %v2518 = vlog2.pop %v2458
      %v2519 = vmul.f32 %v2518, 0.6931472
      %v2520 = vlog2.pop %v2459
      %v2521 = vmul.f32 %v2520, 0.6931472
      %v2522 = vlog2.pop %v2460
      %v2523 = vmul.f32 %v2522, 0.6931472
      %v2524 = vlog2.pop %v2461
      %v2525 = vmul.f32 %v2524, 0.6931472
      %v2526 = vld [vmem:[#allocation4] sm:$0x3]
      %v2528 = vlaneseq
      %v2529 = vshrl.u32 %v2528, 7
      %v2530 = vsub.s32 0, %v2529
      %v2531 = vrot.slane %v2526, %v2530
      %v2532 = vlaneseq
      %v2533 = vshrl.u32 %v2532, 7
      %v2534 = vsub.s32 1, %v2533
      %v2535 = vrot.slane %v2526, %v2534
      %v2538 = vadd.f32 %v1602, %v2531
      %v2539 = vadd.f32 %v1602, %v2535
      %v2540 = vadd.f32 %v1605, %v2531
      %v2541 = vadd.f32 %v1605, %v2535
      %v2542 = vadd.f32 %v1608, %v2531
      %v2543 = vadd.f32 %v1608, %v2535
      %v2544 = vadd.f32 %v1611, %v2531
      %v2545 = vadd.f32 %v1611, %v2535
      %v2546 = vadd.f32 %v1614, %v2531
      %v2547 = vadd.f32 %v1614, %v2535
      %v2548 = vadd.f32 %v1617, %v2531
      %v2549 = vadd.f32 %v1617, %v2535
      %v2550 = vadd.f32 %v1620, %v2531
      %v2551 = vadd.f32 %v1620, %v2535
      %v2552 = vadd.f32 %v1623, %v2531
      %v2553 = vadd.f32 %v1623, %v2535
      %v2554 = vadd.f32 %v1626, %v2531
      %v2555 = vadd.f32 %v1626, %v2535
      %v2556 = vadd.f32 %v1629, %v2531
      %v2557 = vadd.f32 %v1629, %v2535
      %v2558 = vadd.f32 %v1632, %v2531
      %v2559 = vadd.f32 %v1632, %v2535
      %v2560 = vadd.f32 %v1635, %v2531
      %v2561 = vadd.f32 %v1635, %v2535
      %v2562 = vadd.f32 %v1638, %v2531
      %v2563 = vadd.f32 %v1638, %v2535
      %v2564 = vadd.f32 %v1641, %v2531
      %v2565 = vadd.f32 %v1641, %v2535
      %v2566 = vadd.f32 %v1644, %v2531
      %v2567 = vadd.f32 %v1644, %v2535
      %v2568 = vadd.f32 %v1647, %v2531
      %v2569 = vadd.f32 %v1647, %v2535
      %v2570 = vsub.f32 %v2538, %v1779
      %v2571 = vsub.f32 %v2539, %v1781
      %v2572 = vsub.f32 %v2540, %v1783
      %v2573 = vsub.f32 %v2541, %v1785
      %v2574 = vsub.f32 %v2542, %v1789
      %v2575 = vsub.f32 %v2543, %v1791
      %v2576 = vsub.f32 %v2544, %v1793
      %v2577 = vsub.f32 %v2545, %v1795
      %v2578 = vsub.f32 %v2546, %v1799
      %v2579 = vsub.f32 %v2547, %v1801
      %v2580 = vsub.f32 %v2548, %v1803
      %v2581 = vsub.f32 %v2549, %v1805
      %v2582 = vsub.f32 %v2550, %v1809
      %v2583 = vsub.f32 %v2551, %v1811
      %v2584 = vsub.f32 %v2552, %v1813
      %v2585 = vsub.f32 %v2553, %v1815
      %v2586 = vsub.f32 %v2554, %v1819
      %v2587 = vsub.f32 %v2555, %v1821
      %v2588 = vsub.f32 %v2556, %v1823
      %v2589 = vsub.f32 %v2557, %v1825
      %v2590 = vsub.f32 %v2558, %v1829
      %v2591 = vsub.f32 %v2559, %v1831
      %v2592 = vsub.f32 %v2560, %v1833
      %v2593 = vsub.f32 %v2561, %v1835
      %v2594 = vsub.f32 %v2562, %v1839
      %v2595 = vsub.f32 %v2563, %v1841
      %v2596 = vsub.f32 %v2564, %v1843
      %v2597 = vsub.f32 %v2565, %v1845
      %v2598 = vsub.f32 %v2566, %v1849
      %v2599 = vsub.f32 %v2567, %v1851
      %v2600 = vsub.f32 %v2568, %v1853
      %v2601 = vsub.f32 %v2569, %v1855
      %v2602 = vsub.f32 %v2463, %v2570
      %v2603 = vsub.f32 %v2465, %v2571
      %v2604 = vsub.f32 %v2467, %v2572
      %v2605 = vsub.f32 %v2469, %v2573
      %v2606 = vsub.f32 %v2471, %v2574
      %v2607 = vsub.f32 %v2473, %v2575
      %v2608 = vsub.f32 %v2475, %v2576
      %v2609 = vsub.f32 %v2477, %v2577
      %v2610 = vsub.f32 %v2479, %v2578
      %v2611 = vsub.f32 %v2481, %v2579
      %v2612 = vsub.f32 %v2483, %v2580
      %v2613 = vsub.f32 %v2485, %v2581
      %v2614 = vsub.f32 %v2487, %v2582
      %v2615 = vsub.f32 %v2489, %v2583
      %v2616 = vsub.f32 %v2491, %v2584
      %v2617 = vsub.f32 %v2493, %v2585
      %v2618 = vsub.f32 %v2495, %v2586
      %v2619 = vsub.f32 %v2497, %v2587
      %v2620 = vsub.f32 %v2499, %v2588
      %v2621 = vsub.f32 %v2501, %v2589
      %v2622 = vsub.f32 %v2503, %v2590
      %v2623 = vsub.f32 %v2505, %v2591
      %v2624 = vsub.f32 %v2507, %v2592
      %v2625 = vsub.f32 %v2509, %v2593
      %v2626 = vsub.f32 %v2511, %v2594
      %v2627 = vsub.f32 %v2513, %v2595
      %v2628 = vsub.f32 %v2515, %v2596
      %v2629 = vsub.f32 %v2517, %v2597
      %v2630 = vsub.f32 %v2519, %v2598
      %v2631 = vsub.f32 %v2521, %v2599
      %v2632 = vsub.f32 %v2523, %v2600
      %v2633 = vsub.f32 %v2525, %v2601
      %v2634 = vcvt.s32.f32 %v1892
      %v2635 = vcvt.s32.f32 %v1893
      %v2636 = vmax.f32 %v2602, %v2603
      %2637 = vmax.xlane.f32.xlu0 %v2636
      %v2638 = vpop.xlane.xlu0 %2637
      %v2639 = vmax.f32 %v2604, %v2605
      %2640 = vmax.xlane.f32.xlu0 %v2639
      %v2641 = vpop.xlane.xlu0 %2640
      %v2642 = vmax.f32 %v2606, %v2607
      %2643 = vmax.xlane.f32.xlu0 %v2642
      %v2644 = vpop.xlane.xlu0 %2643
      %v2645 = vmax.f32 %v2608, %v2609
      %2646 = vmax.xlane.f32.xlu0 %v2645
      %v2647 = vpop.xlane.xlu0 %2646
      %v2648 = vmax.f32 %v2610, %v2611
      %2649 = vmax.xlane.f32.xlu0 %v2648
      %v2650 = vpop.xlane.xlu0 %2649
      %v2651 = vmax.f32 %v2612, %v2613
      %2652 = vmax.xlane.f32.xlu0 %v2651
      %v2653 = vpop.xlane.xlu0 %2652
      %v2654 = vmax.f32 %v2614, %v2615
      %2655 = vmax.xlane.f32.xlu0 %v2654
      %v2656 = vpop.xlane.xlu0 %2655
      %v2657 = vmax.f32 %v2616, %v2617
      %2658 = vmax.xlane.f32.xlu0 %v2657
      %v2659 = vpop.xlane.xlu0 %2658
      %v2660 = vmax.f32 %v2618, %v2619
      %2661 = vmax.xlane.f32.xlu0 %v2660
      %v2662 = vpop.xlane.xlu0 %2661
      %v2663 = vmax.f32 %v2620, %v2621
      %2664 = vmax.xlane.f32.xlu0 %v2663
      %v2665 = vpop.xlane.xlu0 %2664
      %v2666 = vmax.f32 %v2622, %v2623
      %2667 = vmax.xlane.f32.xlu0 %v2666
      %v2668 = vpop.xlane.xlu0 %2667
      %v2669 = vmax.f32 %v2624, %v2625
      %2670 = vmax.xlane.f32.xlu0 %v2669
      %v2671 = vpop.xlane.xlu0 %2670
      %v2672 = vmax.f32 %v2626, %v2627
      %2673 = vmax.xlane.f32.xlu0 %v2672
      %v2674 = vpop.xlane.xlu0 %2673
      %v2675 = vmax.f32 %v2628, %v2629
      %2676 = vmax.xlane.f32.xlu0 %v2675
      %v2677 = vpop.xlane.xlu0 %2676
      %v2678 = vmax.f32 %v2630, %v2631
      %2679 = vmax.xlane.f32.xlu0 %v2678
      %v2680 = vpop.xlane.xlu0 %2679
      %v2681 = vmax.f32 %v2632, %v2633
      %2682 = vmax.xlane.f32.xlu0 %v2681
      %v2683 = vpop.xlane.xlu0 %2682
      %vm2684 = vcmp.eq.f32.partialorder %v2602, %v2638
      %vm2685 = vcmp.eq.f32.partialorder %v2603, %v2638
      %vm2686 = vcmp.eq.f32.partialorder %v2604, %v2641
      %vm2687 = vcmp.eq.f32.partialorder %v2605, %v2641
      %vm2688 = vcmp.eq.f32.partialorder %v2606, %v2644
      %vm2689 = vcmp.eq.f32.partialorder %v2607, %v2644
      %vm2690 = vcmp.eq.f32.partialorder %v2608, %v2647
      %vm2691 = vcmp.eq.f32.partialorder %v2609, %v2647
      %vm2692 = vcmp.eq.f32.partialorder %v2610, %v2650
      %vm2693 = vcmp.eq.f32.partialorder %v2611, %v2650
      %vm2694 = vcmp.eq.f32.partialorder %v2612, %v2653
      %vm2695 = vcmp.eq.f32.partialorder %v2613, %v2653
      %vm2696 = vcmp.eq.f32.partialorder %v2614, %v2656
      %vm2697 = vcmp.eq.f32.partialorder %v2615, %v2656
      %vm2698 = vcmp.eq.f32.partialorder %v2616, %v2659
      %vm2699 = vcmp.eq.f32.partialorder %v2617, %v2659
      %vm2700 = vcmp.eq.f32.partialorder %v2618, %v2662
      %vm2701 = vcmp.eq.f32.partialorder %v2619, %v2662
      %vm2702 = vcmp.eq.f32.partialorder %v2620, %v2665
      %vm2703 = vcmp.eq.f32.partialorder %v2621, %v2665
      %vm2704 = vcmp.eq.f32.partialorder %v2622, %v2668
      %vm2705 = vcmp.eq.f32.partialorder %v2623, %v2668
      %vm2706 = vcmp.eq.f32.partialorder %v2624, %v2671
      %vm2707 = vcmp.eq.f32.partialorder %v2625, %v2671
      %vm2708 = vcmp.eq.f32.partialorder %v2626, %v2674
      %vm2709 = vcmp.eq.f32.partialorder %v2627, %v2674
      %vm2710 = vcmp.eq.f32.partialorder %v2628, %v2677
      %vm2711 = vcmp.eq.f32.partialorder %v2629, %v2677
      %vm2712 = vcmp.eq.f32.partialorder %v2630, %v2680
      %vm2713 = vcmp.eq.f32.partialorder %v2631, %v2680
      %vm2714 = vcmp.eq.f32.partialorder %v2632, %v2683
      %vm2715 = vcmp.eq.f32.partialorder %v2633, %v2683
      %v2716 = vsel %vm2684, %v2634, 256.0
      %v2717 = vsel %vm2685, %v2635, 256.0
      %v2718 = vsel %vm2686, %v2634, 256.0
      %v2719 = vsel %vm2687, %v2635, 256.0
      %v2720 = vsel %vm2688, %v2634, 256.0
      %v2721 = vsel %vm2689, %v2635, 256.0
      %v2722 = vsel %vm2690, %v2634, 256.0
      %v2723 = vsel %vm2691, %v2635, 256.0
      %v2724 = vsel %vm2692, %v2634, 256.0
      %v2725 = vsel %vm2693, %v2635, 256.0
      %v2726 = vsel %vm2694, %v2634, 256.0
      %v2727 = vsel %vm2695, %v2635, 256.0
      %v2728 = vsel %vm2696, %v2634, 256.0
      %v2729 = vsel %vm2697, %v2635, 256.0
      %v2730 = vsel %vm2698, %v2634, 256.0
      %v2731 = vsel %vm2699, %v2635, 256.0
      %v2732 = vsel %vm2700, %v2634, 256.0
      %v2733 = vsel %vm2701, %v2635, 256.0
      %v2734 = vsel %vm2702, %v2634, 256.0
      %v2735 = vsel %vm2703, %v2635, 256.0
      %v2736 = vsel %vm2704, %v2634, 256.0
      %v2737 = vsel %vm2705, %v2635, 256.0
      %v2738 = vsel %vm2706, %v2634, 256.0
      %v2739 = vsel %vm2707, %v2635, 256.0
      %v2740 = vsel %vm2708, %v2634, 256.0
      %v2741 = vsel %vm2709, %v2635, 256.0
      %v2742 = vsel %vm2710, %v2634, 256.0
      %v2743 = vsel %vm2711, %v2635, 256.0
      %v2744 = vsel %vm2712, %v2634, 256.0
      %v2745 = vsel %vm2713, %v2635, 256.0
      %v2746 = vsel %vm2714, %v2634, 256.0
      %v2747 = vsel %vm2715, %v2635, 256.0
      %v2748 = vmin.f32 %v2716, %v2717
      %2749 = vmin.xlane.f32.xlu0 %v2748
      %v2750 = vpop.xlane.xlu0 %2749
      %v2751 = vmin.f32 %v2718, %v2719
      %2752 = vmin.xlane.f32.xlu0 %v2751
      %v2753 = vpop.xlane.xlu0 %2752
      %v2754 = vmin.f32 %v2720, %v2721
      %2755 = vmin.xlane.f32.xlu0 %v2754
      %v2756 = vpop.xlane.xlu0 %2755
      %v2757 = vmin.f32 %v2722, %v2723
      %2758 = vmin.xlane.f32.xlu0 %v2757
      %v2759 = vpop.xlane.xlu0 %2758
      %v2760 = vmin.f32 %v2724, %v2725
      %2761 = vmin.xlane.f32.xlu0 %v2760
      %v2762 = vpop.xlane.xlu0 %2761
      %v2763 = vmin.f32 %v2726, %v2727
      %2764 = vmin.xlane.f32.xlu0 %v2763
      %v2765 = vpop.xlane.xlu0 %2764
      %v2766 = vmin.f32 %v2728, %v2729
      %2767 = vmin.xlane.f32.xlu0 %v2766
      %v2768 = vpop.xlane.xlu0 %2767
      %v2769 = vmin.f32 %v2730, %v2731
      %2770 = vmin.xlane.f32.xlu0 %v2769
      %v2771 = vpop.xlane.xlu0 %2770
      %v2772 = vmin.f32 %v2732, %v2733
      %2773 = vmin.xlane.f32.xlu0 %v2772
      %v2774 = vpop.xlane.xlu0 %2773
      %v2775 = vmin.f32 %v2734, %v2735
      %2776 = vmin.xlane.f32.xlu0 %v2775
      %v2777 = vpop.xlane.xlu0 %2776
      %v2778 = vmin.f32 %v2736, %v2737
      %2779 = vmin.xlane.f32.xlu0 %v2778
      %v2780 = vpop.xlane.xlu0 %2779
      %v2781 = vmin.f32 %v2738, %v2739
      %2782 = vmin.xlane.f32.xlu0 %v2781
      %v2783 = vpop.xlane.xlu0 %2782
      %v2784 = vmin.f32 %v2740, %v2741
      %2785 = vmin.xlane.f32.xlu0 %v2784
      %v2786 = vpop.xlane.xlu0 %2785
      %v2787 = vmin.f32 %v2742, %v2743
      %2788 = vmin.xlane.f32.xlu0 %v2787
      %v2789 = vpop.xlane.xlu0 %2788
      %v2790 = vmin.f32 %v2744, %v2745
      %2791 = vmin.xlane.f32.xlu0 %v2790
      %v2792 = vpop.xlane.xlu0 %2791
      %v2793 = vmin.f32 %v2746, %v2747
      %2794 = vmin.xlane.f32.xlu0 %v2793
      %v2795 = vpop.xlane.xlu0 %2794
      %vm2796 = vcmp.eq.s32.totalorder %v1892, 0
      %v2797 = vsel %vm2796, 1, 0
      %vm2798 = vcmp.eq.s32.totalorder %v2797, 1
      %v2799 = vsel %vm2798, %v2638, 0.0
      %v2800 = vsel %vm2798, %v2641, 0.0
      %v2801 = vsel %vm2798, %v2644, 0.0
      %v2802 = vsel %vm2798, %v2647, 0.0
      %v2803 = vsel %vm2798, %v2650, 0.0
      %v2804 = vsel %vm2798, %v2653, 0.0
      %v2805 = vsel %vm2798, %v2656, 0.0
      %v2806 = vsel %vm2798, %v2659, 0.0
      %v2807 = vsel %vm2798, %v2662, 0.0
      %v2808 = vsel %vm2798, %v2665, 0.0
      %v2809 = vsel %vm2798, %v2668, 0.0
      %v2810 = vsel %vm2798, %v2671, 0.0
      %v2811 = vsel %vm2798, %v2674, 0.0
      %v2812 = vsel %vm2798, %v2677, 0.0
      %v2813 = vsel %vm2798, %v2680, 0.0
      %v2814 = vsel %vm2798, %v2683, 0.0
      %v2815 = vcvt.f32.s32.to.zero.pseudo %v2750
      %v2816 = vcvt.f32.s32.to.zero.pseudo %v2753
      %v2817 = vcvt.f32.s32.to.zero.pseudo %v2756
      %v2818 = vcvt.f32.s32.to.zero.pseudo %v2759
      %v2819 = vcvt.f32.s32.to.zero.pseudo %v2762
      %v2820 = vcvt.f32.s32.to.zero.pseudo %v2765
      %v2821 = vcvt.f32.s32.to.zero.pseudo %v2768
      %v2822 = vcvt.f32.s32.to.zero.pseudo %v2771
      %v2823 = vcvt.f32.s32.to.zero.pseudo %v2774
      %v2824 = vcvt.f32.s32.to.zero.pseudo %v2777
      %v2825 = vcvt.f32.s32.to.zero.pseudo %v2780
      %v2826 = vcvt.f32.s32.to.zero.pseudo %v2783
      %v2827 = vcvt.f32.s32.to.zero.pseudo %v2786
      %v2828 = vcvt.f32.s32.to.zero.pseudo %v2789
      %v2829 = vcvt.f32.s32.to.zero.pseudo %v2792
      %v2830 = vcvt.f32.s32.to.zero.pseudo %v2795
      %v2831 = vsel %vm2798, %v2815, 0
      %v2832 = vsel %vm2798, %v2816, 0
      %v2833 = vsel %vm2798, %v2817, 0
      %v2834 = vsel %vm2798, %v2818, 0
      %v2835 = vsel %vm2798, %v2819, 0
      %v2836 = vsel %vm2798, %v2820, 0
      %v2837 = vsel %vm2798, %v2821, 0
      %v2838 = vsel %vm2798, %v2822, 0
      %v2839 = vsel %vm2798, %v2823, 0
      %v2840 = vsel %vm2798, %v2824, 0
      %v2841 = vsel %vm2798, %v2825, 0
      %v2842 = vsel %vm2798, %v2826, 0
      %v2843 = vsel %vm2798, %v2827, 0
      %v2844 = vsel %vm2798, %v2828, 0
      %v2845 = vsel %vm2798, %v2829, 0
      %v2846 = vsel %vm2798, %v2830, 0
      %v2847 = vsel %vm2684, -inf, %v2602
      %v2848 = vsel %vm2685, -inf, %v2603
      %v2849 = vsel %vm2686, -inf, %v2604
      %v2850 = vsel %vm2687, -inf, %v2605
      %v2851 = vsel %vm2688, -inf, %v2606
      %v2852 = vsel %vm2689, -inf, %v2607
      %v2853 = vsel %vm2690, -inf, %v2608
      %v2854 = vsel %vm2691, -inf, %v2609
      %v2855 = vsel %vm2692, -inf, %v2610
      %v2856 = vsel %vm2693, -inf, %v2611
      %v2857 = vsel %vm2694, -inf, %v2612
      %v2858 = vsel %vm2695, -inf, %v2613
      %v2859 = vsel %vm2696, -inf, %v2614
      %v2860 = vsel %vm2697, -inf, %v2615
      %v2861 = vsel %vm2698, -inf, %v2616
      %v2862 = vsel %vm2699, -inf, %v2617
      %v2863 = vsel %vm2700, -inf, %v2618
      %v2864 = vsel %vm2701, -inf, %v2619
      %v2865 = vsel %vm2702, -inf, %v2620
      %v2866 = vsel %vm2703, -inf, %v2621
      %v2867 = vsel %vm2704, -inf, %v2622
      %v2868 = vsel %vm2705, -inf, %v2623
      %v2869 = vsel %vm2706, -inf, %v2624
      %v2870 = vsel %vm2707, -inf, %v2625
      %v2871 = vsel %vm2708, -inf, %v2626
      %v2872 = vsel %vm2709, -inf, %v2627
      %v2873 = vsel %vm2710, -inf, %v2628
      %v2874 = vsel %vm2711, -inf, %v2629
      %v2875 = vsel %vm2712, -inf, %v2630
      %v2876 = vsel %vm2713, -inf, %v2631
      %v2877 = vsel %vm2714, -inf, %v2632
      %v2878 = vsel %vm2715, -inf, %v2633
      %v2879 = vmax.f32 %v2847, %v2848
      %2880 = vmax.xlane.f32.xlu0 %v2879
      %v2881 = vpop.xlane.xlu0 %2880
      %v2882 = vmax.f32 %v2849, %v2850
      %2883 = vmax.xlane.f32.xlu0 %v2882
      %v2884 = vpop.xlane.xlu0 %2883
      %v2885 = vmax.f32 %v2851, %v2852
      %2886 = vmax.xlane.f32.xlu0 %v2885
      %v2887 = vpop.xlane.xlu0 %2886
      %v2888 = vmax.f32 %v2853, %v2854
      %2889 = vmax.xlane.f32.xlu0 %v2888
      %v2890 = vpop.xlane.xlu0 %2889
      %v2891 = vmax.f32 %v2855, %v2856
      %2892 = vmax.xlane.f32.xlu0 %v2891
      %v2893 = vpop.xlane.xlu0 %2892
      %v2894 = vmax.f32 %v2857, %v2858
      %2895 = vmax.xlane.f32.xlu0 %v2894
      %v2896 = vpop.xlane.xlu0 %2895
      %v2897 = vmax.f32 %v2859, %v2860
      %2898 = vmax.xlane.f32.xlu0 %v2897
      %v2899 = vpop.xlane.xlu0 %2898
      %v2900 = vmax.f32 %v2861, %v2862
      %2901 = vmax.xlane.f32.xlu0 %v2900
      %v2902 = vpop.xlane.xlu0 %2901
      %v2903 = vmax.f32 %v2863, %v2864
      %2904 = vmax.xlane.f32.xlu0 %v2903
      %v2905 = vpop.xlane.xlu0 %2904
      %v2906 = vmax.f32 %v2865, %v2866
      %2907 = vmax.xlane.f32.xlu0 %v2906
      %v2908 = vpop.xlane.xlu0 %2907
      %v2909 = vmax.f32 %v2867, %v2868
      %2910 = vmax.xlane.f32.xlu0 %v2909
      %v2911 = vpop.xlane.xlu0 %2910
      %v2912 = vmax.f32 %v2869, %v2870
      %2913 = vmax.xlane.f32.xlu0 %v2912
      %v2914 = vpop.xlane.xlu0 %2913
      %v2915 = vmax.f32 %v2871, %v2872
      %2916 = vmax.xlane.f32.xlu0 %v2915
      %v2917 = vpop.xlane.xlu0 %2916
      %v2918 = vmax.f32 %v2873, %v2874
      %2919 = vmax.xlane.f32.xlu0 %v2918
      %v2920 = vpop.xlane.xlu0 %2919
      %v2921 = vmax.f32 %v2875, %v2876
      %2922 = vmax.xlane.f32.xlu0 %v2921
      %v2923 = vpop.xlane.xlu0 %2922
      %v2924 = vmax.f32 %v2877, %v2878
      %2925 = vmax.xlane.f32.xlu0 %v2924
      %v2926 = vpop.xlane.xlu0 %2925
      %vm2927 = vcmp.eq.f32.partialorder %v2847, %v2881
      %vm2928 = vcmp.eq.f32.partialorder %v2848, %v2881
      %vm2929 = vcmp.eq.f32.partialorder %v2849, %v2884
      %vm2930 = vcmp.eq.f32.partialorder %v2850, %v2884
      %vm2931 = vcmp.eq.f32.partialorder %v2851, %v2887
      %vm2932 = vcmp.eq.f32.partialorder %v2852, %v2887
      %vm2933 = vcmp.eq.f32.partialorder %v2853, %v2890
      %vm2934 = vcmp.eq.f32.partialorder %v2854, %v2890
      %vm2935 = vcmp.eq.f32.partialorder %v2855, %v2893
      %vm2936 = vcmp.eq.f32.partialorder %v2856, %v2893
      %vm2937 = vcmp.eq.f32.partialorder %v2857, %v2896
      %vm2938 = vcmp.eq.f32.partialorder %v2858, %v2896
      %vm2939 = vcmp.eq.f32.partialorder %v2859, %v2899
      %vm2940 = vcmp.eq.f32.partialorder %v2860, %v2899
      %vm2941 = vcmp.eq.f32.partialorder %v2861, %v2902
      %vm2942 = vcmp.eq.f32.partialorder %v2862, %v2902
      %vm2943 = vcmp.eq.f32.partialorder %v2863, %v2905
      %vm2944 = vcmp.eq.f32.partialorder %v2864, %v2905
      %vm2945 = vcmp.eq.f32.partialorder %v2865, %v2908
      %vm2946 = vcmp.eq.f32.partialorder %v2866, %v2908
      %vm2947 = vcmp.eq.f32.partialorder %v2867, %v2911
      %vm2948 = vcmp.eq.f32.partialorder %v2868, %v2911
      %vm2949 = vcmp.eq.f32.partialorder %v2869, %v2914
      %vm2950 = vcmp.eq.f32.partialorder %v2870, %v2914
      %vm2951 = vcmp.eq.f32.partialorder %v2871, %v2917
      %vm2952 = vcmp.eq.f32.partialorder %v2872, %v2917
      %vm2953 = vcmp.eq.f32.partialorder %v2873, %v2920
      %vm2954 = vcmp.eq.f32.partialorder %v2874, %v2920
      %vm2955 = vcmp.eq.f32.partialorder %v2875, %v2923
      %vm2956 = vcmp.eq.f32.partialorder %v2876, %v2923
      %vm2957 = vcmp.eq.f32.partialorder %v2877, %v2926
      %vm2958 = vcmp.eq.f32.partialorder %v2878, %v2926
      %v2959 = vsel %vm2927, %v2634, 256.0
      %v2960 = vsel %vm2928, %v2635, 256.0
      %v2961 = vsel %vm2929, %v2634, 256.0
      %v2962 = vsel %vm2930, %v2635, 256.0
      %v2963 = vsel %vm2931, %v2634, 256.0
      %v2964 = vsel %vm2932, %v2635, 256.0
      %v2965 = vsel %vm2933, %v2634, 256.0
      %v2966 = vsel %vm2934, %v2635, 256.0
      %v2967 = vsel %vm2935, %v2634, 256.0
      %v2968 = vsel %vm2936, %v2635, 256.0
      %v2969 = vsel %vm2937, %v2634, 256.0
      %v2970 = vsel %vm2938, %v2635, 256.0
      %v2971 = vsel %vm2939, %v2634, 256.0
      %v2972 = vsel %vm2940, %v2635, 256.0
      %v2973 = vsel %vm2941, %v2634, 256.0
      %v2974 = vsel %vm2942, %v2635, 256.0
      %v2975 = vsel %vm2943, %v2634, 256.0
      %v2976 = vsel %vm2944, %v2635, 256.0
      %v2977 = vsel %vm2945, %v2634, 256.0
      %v2978 = vsel %vm2946, %v2635, 256.0
      %v2979 = vsel %vm2947, %v2634, 256.0
      %v2980 = vsel %vm2948, %v2635, 256.0
      %v2981 = vsel %vm2949, %v2634, 256.0
      %v2982 = vsel %vm2950, %v2635, 256.0
      %v2983 = vsel %vm2951, %v2634, 256.0
      %v2984 = vsel %vm2952, %v2635, 256.0
      %v2985 = vsel %vm2953, %v2634, 256.0
      %v2986 = vsel %vm2954, %v2635, 256.0
      %v2987 = vsel %vm2955, %v2634, 256.0
      %v2988 = vsel %vm2956, %v2635, 256.0
      %v2989 = vsel %vm2957, %v2634, 256.0
      %v2990 = vsel %vm2958, %v2635, 256.0
      %v2991 = vmin.f32 %v2959, %v2960
      %2992 = vmin.xlane.f32.xlu0 %v2991
      %v2993 = vpop.xlane.xlu0 %2992
      %v2994 = vmin.f32 %v2961, %v2962
      %2995 = vmin.xlane.f32.xlu0 %v2994
      %v2996 = vpop.xlane.xlu0 %2995
      %v2997 = vmin.f32 %v2963, %v2964
      %2998 = vmin.xlane.f32.xlu0 %v2997
      %v2999 = vpop.xlane.xlu0 %2998
      %v3000 = vmin.f32 %v2965, %v2966
      %3001 = vmin.xlane.f32.xlu0 %v3000
      %v3002 = vpop.xlane.xlu0 %3001
      %v3003 = vmin.f32 %v2967, %v2968
      %3004 = vmin.xlane.f32.xlu0 %v3003
      %v3005 = vpop.xlane.xlu0 %3004
      %v3006 = vmin.f32 %v2969, %v2970
      %3007 = vmin.xlane.f32.xlu0 %v3006
      %v3008 = vpop.xlane.xlu0 %3007
      %v3009 = vmin.f32 %v2971, %v2972
      %3010 = vmin.xlane.f32.xlu0 %v3009
      %v3011 = vpop.xlane.xlu0 %3010
      %v3012 = vmin.f32 %v2973, %v2974
      %3013 = vmin.xlane.f32.xlu0 %v3012
      %v3014 = vpop.xlane.xlu0 %3013
      %v3015 = vmin.f32 %v2975, %v2976
      %3016 = vmin.xlane.f32.xlu0 %v3015
      %v3017 = vpop.xlane.xlu0 %3016
      %v3018 = vmin.f32 %v2977, %v2978
      %3019 = vmin.xlane.f32.xlu0 %v3018
      %v3020 = vpop.xlane.xlu0 %3019
      %v3021 = vmin.f32 %v2979, %v2980
      %3022 = vmin.xlane.f32.xlu0 %v3021
      %v3023 = vpop.xlane.xlu0 %3022
      %v3024 = vmin.f32 %v2981, %v2982
      %3025 = vmin.xlane.f32.xlu0 %v3024
      %v3026 = vpop.xlane.xlu0 %3025
      %v3027 = vmin.f32 %v2983, %v2984
      %3028 = vmin.xlane.f32.xlu0 %v3027
      %v3029 = vpop.xlane.xlu0 %3028
      %v3030 = vmin.f32 %v2985, %v2986
      %3031 = vmin.xlane.f32.xlu0 %v3030
      %v3032 = vpop.xlane.xlu0 %3031
      %v3033 = vmin.f32 %v2987, %v2988
      %3034 = vmin.xlane.f32.xlu0 %v3033
      %v3035 = vpop.xlane.xlu0 %3034
      %v3036 = vmin.f32 %v2989, %v2990
      %3037 = vmin.xlane.f32.xlu0 %v3036
      %v3038 = vpop.xlane.xlu0 %3037
      %vm3039 = vcmp.eq.s32.totalorder %v1892, 1
      %v3040 = vsel %vm3039, 1, 0
      %vm3041 = vcmp.eq.s32.totalorder %v3040, 1
      %v3042 = vsel %vm3041, %v2881, %v2799
      %v3043 = vsel %vm3041, %v2884, %v2800
      %v3044 = vsel %vm3041, %v2887, %v2801
      %v3045 = vsel %vm3041, %v2890, %v2802
      %v3046 = vsel %vm3041, %v2893, %v2803
      %v3047 = vsel %vm3041, %v2896, %v2804
      %v3048 = vsel %vm3041, %v2899, %v2805
      %v3049 = vsel %vm3041, %v2902, %v2806
      %v3050 = vsel %vm3041, %v2905, %v2807
      %v3051 = vsel %vm3041, %v2908, %v2808
      %v3052 = vsel %vm3041, %v2911, %v2809
      %v3053 = vsel %vm3041, %v2914, %v2810
      %v3054 = vsel %vm3041, %v2917, %v2811
      %v3055 = vsel %vm3041, %v2920, %v2812
      %v3056 = vsel %vm3041, %v2923, %v2813
      %v3057 = vsel %vm3041, %v2926, %v2814
      %v3058 = vcvt.f32.s32.to.zero.pseudo %v2993
      %v3059 = vcvt.f32.s32.to.zero.pseudo %v2996
      %v3060 = vcvt.f32.s32.to.zero.pseudo %v2999
      %v3061 = vcvt.f32.s32.to.zero.pseudo %v3002
      %v3062 = vcvt.f32.s32.to.zero.pseudo %v3005
      %v3063 = vcvt.f32.s32.to.zero.pseudo %v3008
      %v3064 = vcvt.f32.s32.to.zero.pseudo %v3011
      %v3065 = vcvt.f32.s32.to.zero.pseudo %v3014
      %v3066 = vcvt.f32.s32.to.zero.pseudo %v3017
      %v3067 = vcvt.f32.s32.to.zero.pseudo %v3020
      %v3068 = vcvt.f32.s32.to.zero.pseudo %v3023
      %v3069 = vcvt.f32.s32.to.zero.pseudo %v3026
      %v3070 = vcvt.f32.s32.to.zero.pseudo %v3029
      %v3071 = vcvt.f32.s32.to.zero.pseudo %v3032
      %v3072 = vcvt.f32.s32.to.zero.pseudo %v3035
      %v3073 = vcvt.f32.s32.to.zero.pseudo %v3038
      %v3074 = vsel %vm3041, %v3058, %v2831
      %v3075 = vsel %vm3041, %v3059, %v2832
      %v3076 = vsel %vm3041, %v3060, %v2833
      %v3077 = vsel %vm3041, %v3061, %v2834
      %v3078 = vsel %vm3041, %v3062, %v2835
      %v3079 = vsel %vm3041, %v3063, %v2836
      %v3080 = vsel %vm3041, %v3064, %v2837
      %v3081 = vsel %vm3041, %v3065, %v2838
      %v3082 = vsel %vm3041, %v3066, %v2839
      %v3083 = vsel %vm3041, %v3067, %v2840
      %v3084 = vsel %vm3041, %v3068, %v2841
      %v3085 = vsel %vm3041, %v3069, %v2842
      %v3086 = vsel %vm3041, %v3070, %v2843
      %v3087 = vsel %vm3041, %v3071, %v2844
      %v3088 = vsel %vm3041, %v3072, %v2845
      %v3089 = vsel %vm3041, %v3073, %v2846
      %v3090 = vsel %vm2927, -inf, %v2847
      %v3091 = vsel %vm2928, -inf, %v2848
      %v3092 = vsel %vm2929, -inf, %v2849
      %v3093 = vsel %vm2930, -inf, %v2850
      %v3094 = vsel %vm2931, -inf, %v2851
      %v3095 = vsel %vm2932, -inf, %v2852
      %v3096 = vsel %vm2933, -inf, %v2853
      %v3097 = vsel %vm2934, -inf, %v2854
      %v3098 = vsel %vm2935, -inf, %v2855
      %v3099 = vsel %vm2936, -inf, %v2856
      %v3100 = vsel %vm2937, -inf, %v2857
      %v3101 = vsel %vm2938, -inf, %v2858
      %v3102 = vsel %vm2939, -inf, %v2859
      %v3103 = vsel %vm2940, -inf, %v2860
      %v3104 = vsel %vm2941, -inf, %v2861
      %v3105 = vsel %vm2942, -inf, %v2862
      %v3106 = vsel %vm2943, -inf, %v2863
      %v3107 = vsel %vm2944, -inf, %v2864
      %v3108 = vsel %vm2945, -inf, %v2865
      %v3109 = vsel %vm2946, -inf, %v2866
      %v3110 = vsel %vm2947, -inf, %v2867
      %v3111 = vsel %vm2948, -inf, %v2868
      %v3112 = vsel %vm2949, -inf, %v2869
      %v3113 = vsel %vm2950, -inf, %v2870
      %v3114 = vsel %vm2951, -inf, %v2871
      %v3115 = vsel %vm2952, -inf, %v2872
      %v3116 = vsel %vm2953, -inf, %v2873
      %v3117 = vsel %vm2954, -inf, %v2874
      %v3118 = vsel %vm2955, -inf, %v2875
      %v3119 = vsel %vm2956, -inf, %v2876
      %v3120 = vsel %vm2957, -inf, %v2877
      %v3121 = vsel %vm2958, -inf, %v2878
      %v3122 = vmax.f32 %v3090, %v3091
      %3123 = vmax.xlane.f32.xlu0 %v3122
      %v3124 = vpop.xlane.xlu0 %3123
      %v3125 = vmax.f32 %v3092, %v3093
      %3126 = vmax.xlane.f32.xlu0 %v3125
      %v3127 = vpop.xlane.xlu0 %3126
      %v3128 = vmax.f32 %v3094, %v3095
      %3129 = vmax.xlane.f32.xlu0 %v3128
      %v3130 = vpop.xlane.xlu0 %3129
      %v3131 = vmax.f32 %v3096, %v3097
      %3132 = vmax.xlane.f32.xlu0 %v3131
      %v3133 = vpop.xlane.xlu0 %3132
      %v3134 = vmax.f32 %v3098, %v3099
      %3135 = vmax.xlane.f32.xlu0 %v3134
      %v3136 = vpop.xlane.xlu0 %3135
      %v3137 = vmax.f32 %v3100, %v3101
      %3138 = vmax.xlane.f32.xlu0 %v3137
      %v3139 = vpop.xlane.xlu0 %3138
      %v3140 = vmax.f32 %v3102, %v3103
      %3141 = vmax.xlane.f32.xlu0 %v3140
      %v3142 = vpop.xlane.xlu0 %3141
      %v3143 = vmax.f32 %v3104, %v3105
      %3144 = vmax.xlane.f32.xlu0 %v3143
      %v3145 = vpop.xlane.xlu0 %3144
      %v3146 = vmax.f32 %v3106, %v3107
      %3147 = vmax.xlane.f32.xlu0 %v3146
      %v3148 = vpop.xlane.xlu0 %3147
      %v3149 = vmax.f32 %v3108, %v3109
      %3150 = vmax.xlane.f32.xlu0 %v3149
      %v3151 = vpop.xlane.xlu0 %3150
      %v3152 = vmax.f32 %v3110, %v3111
      %3153 = vmax.xlane.f32.xlu0 %v3152
      %v3154 = vpop.xlane.xlu0 %3153
      %v3155 = vmax.f32 %v3112, %v3113
      %3156 = vmax.xlane.f32.xlu0 %v3155
      %v3157 = vpop.xlane.xlu0 %3156
      %v3158 = vmax.f32 %v3114, %v3115
      %3159 = vmax.xlane.f32.xlu0 %v3158
      %v3160 = vpop.xlane.xlu0 %3159
      %v3161 = vmax.f32 %v3116, %v3117
      %3162 = vmax.xlane.f32.xlu0 %v3161
      %v3163 = vpop.xlane.xlu0 %3162
      %v3164 = vmax.f32 %v3118, %v3119
      %3165 = vmax.xlane.f32.xlu0 %v3164
      %v3166 = vpop.xlane.xlu0 %3165
      %v3167 = vmax.f32 %v3120, %v3121
      %3168 = vmax.xlane.f32.xlu0 %v3167
      %v3169 = vpop.xlane.xlu0 %3168
      %vm3170 = vcmp.eq.f32.partialorder %v3090, %v3124
      %vm3171 = vcmp.eq.f32.partialorder %v3091, %v3124
      %vm3172 = vcmp.eq.f32.partialorder %v3092, %v3127
      %vm3173 = vcmp.eq.f32.partialorder %v3093, %v3127
      %vm3174 = vcmp.eq.f32.partialorder %v3094, %v3130
      %vm3175 = vcmp.eq.f32.partialorder %v3095, %v3130
      %vm3176 = vcmp.eq.f32.partialorder %v3096, %v3133
      %vm3177 = vcmp.eq.f32.partialorder %v3097, %v3133
      %vm3178 = vcmp.eq.f32.partialorder %v3098, %v3136
      %vm3179 = vcmp.eq.f32.partialorder %v3099, %v3136
      %vm3180 = vcmp.eq.f32.partialorder %v3100, %v3139
      %vm3181 = vcmp.eq.f32.partialorder %v3101, %v3139
      %vm3182 = vcmp.eq.f32.partialorder %v3102, %v3142
      %vm3183 = vcmp.eq.f32.partialorder %v3103, %v3142
      %vm3184 = vcmp.eq.f32.partialorder %v3104, %v3145
      %vm3185 = vcmp.eq.f32.partialorder %v3105, %v3145
      %vm3186 = vcmp.eq.f32.partialorder %v3106, %v3148
      %vm3187 = vcmp.eq.f32.partialorder %v3107, %v3148
      %vm3188 = vcmp.eq.f32.partialorder %v3108, %v3151
      %vm3189 = vcmp.eq.f32.partialorder %v3109, %v3151
      %vm3190 = vcmp.eq.f32.partialorder %v3110, %v3154
      %vm3191 = vcmp.eq.f32.partialorder %v3111, %v3154
      %vm3192 = vcmp.eq.f32.partialorder %v3112, %v3157
      %vm3193 = vcmp.eq.f32.partialorder %v3113, %v3157
      %vm3194 = vcmp.eq.f32.partialorder %v3114, %v3160
      %vm3195 = vcmp.eq.f32.partialorder %v3115, %v3160
      %vm3196 = vcmp.eq.f32.partialorder %v3116, %v3163
      %vm3197 = vcmp.eq.f32.partialorder %v3117, %v3163
      %vm3198 = vcmp.eq.f32.partialorder %v3118, %v3166
      %vm3199 = vcmp.eq.f32.partialorder %v3119, %v3166
      %vm3200 = vcmp.eq.f32.partialorder %v3120, %v3169
      %vm3201 = vcmp.eq.f32.partialorder %v3121, %v3169
      %v3202 = vsel %vm3170, %v2634, 256.0
      %v3203 = vsel %vm3171, %v2635, 256.0
      %v3204 = vsel %vm3172, %v2634, 256.0
      %v3205 = vsel %vm3173, %v2635, 256.0
      %v3206 = vsel %vm3174, %v2634, 256.0
      %v3207 = vsel %vm3175, %v2635, 256.0
      %v3208 = vsel %vm3176, %v2634, 256.0
      %v3209 = vsel %vm3177, %v2635, 256.0
      %v3210 = vsel %vm3178, %v2634, 256.0
      %v3211 = vsel %vm3179, %v2635, 256.0
      %v3212 = vsel %vm3180, %v2634, 256.0
      %v3213 = vsel %vm3181, %v2635, 256.0
      %v3214 = vsel %vm3182, %v2634, 256.0
      %v3215 = vsel %vm3183, %v2635, 256.0
      %v3216 = vsel %vm3184, %v2634, 256.0
      %v3217 = vsel %vm3185, %v2635, 256.0
      %v3218 = vsel %vm3186, %v2634, 256.0
      %v3219 = vsel %vm3187, %v2635, 256.0
      %v3220 = vsel %vm3188, %v2634, 256.0
      %v3221 = vsel %vm3189, %v2635, 256.0
      %v3222 = vsel %vm3190, %v2634, 256.0
      %v3223 = vsel %vm3191, %v2635, 256.0
      %v3224 = vsel %vm3192, %v2634, 256.0
      %v3225 = vsel %vm3193, %v2635, 256.0
      %v3226 = vsel %vm3194, %v2634, 256.0
      %v3227 = vsel %vm3195, %v2635, 256.0
      %v3228 = vsel %vm3196, %v2634, 256.0
      %v3229 = vsel %vm3197, %v2635, 256.0
      %v3230 = vsel %vm3198, %v2634, 256.0
      %v3231 = vsel %vm3199, %v2635, 256.0
      %v3232 = vsel %vm3200, %v2634, 256.0
      %v3233 = vsel %vm3201, %v2635, 256.0
      %v3234 = vmin.f32 %v3202, %v3203
      %3235 = vmin.xlane.f32.xlu0 %v3234
      %v3236 = vpop.xlane.xlu0 %3235
      %v3237 = vmin.f32 %v3204, %v3205
      %3238 = vmin.xlane.f32.xlu0 %v3237
      %v3239 = vpop.xlane.xlu0 %3238
      %v3240 = vmin.f32 %v3206, %v3207
      %3241 = vmin.xlane.f32.xlu0 %v3240
      %v3242 = vpop.xlane.xlu0 %3241
      %v3243 = vmin.f32 %v3208, %v3209
      %3244 = vmin.xlane.f32.xlu0 %v3243
      %v3245 = vpop.xlane.xlu0 %3244
      %v3246 = vmin.f32 %v3210, %v3211
      %3247 = vmin.xlane.f32.xlu0 %v3246
      %v3248 = vpop.xlane.xlu0 %3247
      %v3249 = vmin.f32 %v3212, %v3213
      %3250 = vmin.xlane.f32.xlu0 %v3249
      %v3251 = vpop.xlane.xlu0 %3250
      %v3252 = vmin.f32 %v3214, %v3215
      %3253 = vmin.xlane.f32.xlu0 %v3252
      %v3254 = vpop.xlane.xlu0 %3253
      %v3255 = vmin.f32 %v3216, %v3217
      %3256 = vmin.xlane.f32.xlu0 %v3255
      %v3257 = vpop.xlane.xlu0 %3256
      %v3258 = vmin.f32 %v3218, %v3219
      %3259 = vmin.xlane.f32.xlu0 %v3258
      %v3260 = vpop.xlane.xlu0 %3259
      %v3261 = vmin.f32 %v3220, %v3221
      %3262 = vmin.xlane.f32.xlu0 %v3261
      %v3263 = vpop.xlane.xlu0 %3262
      %v3264 = vmin.f32 %v3222, %v3223
      %3265 = vmin.xlane.f32.xlu0 %v3264
      %v3266 = vpop.xlane.xlu0 %3265
      %v3267 = vmin.f32 %v3224, %v3225
      %3268 = vmin.xlane.f32.xlu0 %v3267
      %v3269 = vpop.xlane.xlu0 %3268
      %v3270 = vmin.f32 %v3226, %v3227
      %3271 = vmin.xlane.f32.xlu0 %v3270
      %v3272 = vpop.xlane.xlu0 %3271
      %v3273 = vmin.f32 %v3228, %v3229
      %3274 = vmin.xlane.f32.xlu0 %v3273
      %v3275 = vpop.xlane.xlu0 %3274
      %v3276 = vmin.f32 %v3230, %v3231
      %3277 = vmin.xlane.f32.xlu0 %v3276
      %v3278 = vpop.xlane.xlu0 %3277
      %v3279 = vmin.f32 %v3232, %v3233
      %3280 = vmin.xlane.f32.xlu0 %v3279
      %v3281 = vpop.xlane.xlu0 %3280
      %vm3282 = vcmp.eq.s32.totalorder %v1892, 2
      %v3283 = vsel %vm3282, 1, 0
      %vm3284 = vcmp.eq.s32.totalorder %v3283, 1
      %v3285 = vsel %vm3284, %v3124, %v3042
      %v3286 = vsel %vm3284, %v3127, %v3043
      %v3287 = vsel %vm3284, %v3130, %v3044
      %v3288 = vsel %vm3284, %v3133, %v3045
      %v3289 = vsel %vm3284, %v3136, %v3046
      %v3290 = vsel %vm3284, %v3139, %v3047
      %v3291 = vsel %vm3284, %v3142, %v3048
      %v3292 = vsel %vm3284, %v3145, %v3049
      %v3293 = vsel %vm3284, %v3148, %v3050
      %v3294 = vsel %vm3284, %v3151, %v3051
      %v3295 = vsel %vm3284, %v3154, %v3052
      %v3296 = vsel %vm3284, %v3157, %v3053
      %v3297 = vsel %vm3284, %v3160, %v3054
      %v3298 = vsel %vm3284, %v3163, %v3055
      %v3299 = vsel %vm3284, %v3166, %v3056
      %v3300 = vsel %vm3284, %v3169, %v3057
      %v3301 = vcvt.f32.s32.to.zero.pseudo %v3236
      %v3302 = vcvt.f32.s32.to.zero.pseudo %v3239
      %v3303 = vcvt.f32.s32.to.zero.pseudo %v3242
      %v3304 = vcvt.f32.s32.to.zero.pseudo %v3245
      %v3305 = vcvt.f32.s32.to.zero.pseudo %v3248
      %v3306 = vcvt.f32.s32.to.zero.pseudo %v3251
      %v3307 = vcvt.f32.s32.to.zero.pseudo %v3254
      %v3308 = vcvt.f32.s32.to.zero.pseudo %v3257
      %v3309 = vcvt.f32.s32.to.zero.pseudo %v3260
      %v3310 = vcvt.f32.s32.to.zero.pseudo %v3263
      %v3311 = vcvt.f32.s32.to.zero.pseudo %v3266
      %v3312 = vcvt.f32.s32.to.zero.pseudo %v3269
      %v3313 = vcvt.f32.s32.to.zero.pseudo %v3272
      %v3314 = vcvt.f32.s32.to.zero.pseudo %v3275
      %v3315 = vcvt.f32.s32.to.zero.pseudo %v3278
      %v3316 = vcvt.f32.s32.to.zero.pseudo %v3281
      %v3317 = vsel %vm3284, %v3301, %v3074
      %v3318 = vsel %vm3284, %v3302, %v3075
      %v3319 = vsel %vm3284, %v3303, %v3076
      %v3320 = vsel %vm3284, %v3304, %v3077
      %v3321 = vsel %vm3284, %v3305, %v3078
      %v3322 = vsel %vm3284, %v3306, %v3079
      %v3323 = vsel %vm3284, %v3307, %v3080
      %v3324 = vsel %vm3284, %v3308, %v3081
      %v3325 = vsel %vm3284, %v3309, %v3082
      %v3326 = vsel %vm3284, %v3310, %v3083
      %v3327 = vsel %vm3284, %v3311, %v3084
      %v3328 = vsel %vm3284, %v3312, %v3085
      %v3329 = vsel %vm3284, %v3313, %v3086
      %v3330 = vsel %vm3284, %v3314, %v3087
      %v3331 = vsel %vm3284, %v3315, %v3088
      %v3332 = vsel %vm3284, %v3316, %v3089
      %v3333 = vsel %vm3170, -inf, %v3090
      %v3334 = vsel %vm3171, -inf, %v3091
      %v3335 = vsel %vm3172, -inf, %v3092
      %v3336 = vsel %vm3173, -inf, %v3093
      %v3337 = vsel %vm3174, -inf, %v3094
      %v3338 = vsel %vm3175, -inf, %v3095
      %v3339 = vsel %vm3176, -inf, %v3096
      %v3340 = vsel %vm3177, -inf, %v3097
      %v3341 = vsel %vm3178, -inf, %v3098
      %v3342 = vsel %vm3179, -inf, %v3099
      %v3343 = vsel %vm3180, -inf, %v3100
      %v3344 = vsel %vm3181, -inf, %v3101
      %v3345 = vsel %vm3182, -inf, %v3102
      %v3346 = vsel %vm3183, -inf, %v3103
      %v3347 = vsel %vm3184, -inf, %v3104
      %v3348 = vsel %vm3185, -inf, %v3105
      %v3349 = vsel %vm3186, -inf, %v3106
      %v3350 = vsel %vm3187, -inf, %v3107
      %v3351 = vsel %vm3188, -inf, %v3108
      %v3352 = vsel %vm3189, -inf, %v3109
      %v3353 = vsel %vm3190, -inf, %v3110
      %v3354 = vsel %vm3191, -inf, %v3111
      %v3355 = vsel %vm3192, -inf, %v3112
      %v3356 = vsel %vm3193, -inf, %v3113
      %v3357 = vsel %vm3194, -inf, %v3114
      %v3358 = vsel %vm3195, -inf, %v3115
      %v3359 = vsel %vm3196, -inf, %v3116
      %v3360 = vsel %vm3197, -inf, %v3117
      %v3361 = vsel %vm3198, -inf, %v3118
      %v3362 = vsel %vm3199, -inf, %v3119
      %v3363 = vsel %vm3200, -inf, %v3120
      %v3364 = vsel %vm3201, -inf, %v3121
      %v3365 = vmax.f32 %v3333, %v3334
      %3366 = vmax.xlane.f32.xlu0 %v3365
      %v3367 = vpop.xlane.xlu0 %3366
      %v3368 = vmax.f32 %v3335, %v3336
      %3369 = vmax.xlane.f32.xlu0 %v3368
      %v3370 = vpop.xlane.xlu0 %3369
      %v3371 = vmax.f32 %v3337, %v3338
      %3372 = vmax.xlane.f32.xlu0 %v3371
      %v3373 = vpop.xlane.xlu0 %3372
      %v3374 = vmax.f32 %v3339, %v3340
      %3375 = vmax.xlane.f32.xlu0 %v3374
      %v3376 = vpop.xlane.xlu0 %3375
      %v3377 = vmax.f32 %v3341, %v3342
      %3378 = vmax.xlane.f32.xlu0 %v3377
      %v3379 = vpop.xlane.xlu0 %3378
      %v3380 = vmax.f32 %v3343, %v3344
      %3381 = vmax.xlane.f32.xlu0 %v3380
      %v3382 = vpop.xlane.xlu0 %3381
      %v3383 = vmax.f32 %v3345, %v3346
      %3384 = vmax.xlane.f32.xlu0 %v3383
      %v3385 = vpop.xlane.xlu0 %3384
      %v3386 = vmax.f32 %v3347, %v3348
      %3387 = vmax.xlane.f32.xlu0 %v3386
      %v3388 = vpop.xlane.xlu0 %3387
      %v3389 = vmax.f32 %v3349, %v3350
      %3390 = vmax.xlane.f32.xlu0 %v3389
      %v3391 = vpop.xlane.xlu0 %3390
      %v3392 = vmax.f32 %v3351, %v3352
      %3393 = vmax.xlane.f32.xlu0 %v3392
      %v3394 = vpop.xlane.xlu0 %3393
      %v3395 = vmax.f32 %v3353, %v3354
      %3396 = vmax.xlane.f32.xlu0 %v3395
      %v3397 = vpop.xlane.xlu0 %3396
      %v3398 = vmax.f32 %v3355, %v3356
      %3399 = vmax.xlane.f32.xlu0 %v3398
      %v3400 = vpop.xlane.xlu0 %3399
      %v3401 = vmax.f32 %v3357, %v3358
      %3402 = vmax.xlane.f32.xlu0 %v3401
      %v3403 = vpop.xlane.xlu0 %3402
      %v3404 = vmax.f32 %v3359, %v3360
      %3405 = vmax.xlane.f32.xlu0 %v3404
      %v3406 = vpop.xlane.xlu0 %3405
      %v3407 = vmax.f32 %v3361, %v3362
      %3408 = vmax.xlane.f32.xlu0 %v3407
      %v3409 = vpop.xlane.xlu0 %3408
      %v3410 = vmax.f32 %v3363, %v3364
      %3411 = vmax.xlane.f32.xlu0 %v3410
      %v3412 = vpop.xlane.xlu0 %3411
      %vm3413 = vcmp.eq.f32.partialorder %v3333, %v3367
      %vm3414 = vcmp.eq.f32.partialorder %v3334, %v3367
      %vm3415 = vcmp.eq.f32.partialorder %v3335, %v3370
      %vm3416 = vcmp.eq.f32.partialorder %v3336, %v3370
      %vm3417 = vcmp.eq.f32.partialorder %v3337, %v3373
      %vm3418 = vcmp.eq.f32.partialorder %v3338, %v3373
      %vm3419 = vcmp.eq.f32.partialorder %v3339, %v3376
      %vm3420 = vcmp.eq.f32.partialorder %v3340, %v3376
      %vm3421 = vcmp.eq.f32.partialorder %v3341, %v3379
      %vm3422 = vcmp.eq.f32.partialorder %v3342, %v3379
      %vm3423 = vcmp.eq.f32.partialorder %v3343, %v3382
      %vm3424 = vcmp.eq.f32.partialorder %v3344, %v3382
      %vm3425 = vcmp.eq.f32.partialorder %v3345, %v3385
      %vm3426 = vcmp.eq.f32.partialorder %v3346, %v3385
      %vm3427 = vcmp.eq.f32.partialorder %v3347, %v3388
      %vm3428 = vcmp.eq.f32.partialorder %v3348, %v3388
      %vm3429 = vcmp.eq.f32.partialorder %v3349, %v3391
      %vm3430 = vcmp.eq.f32.partialorder %v3350, %v3391
      %vm3431 = vcmp.eq.f32.partialorder %v3351, %v3394
      %vm3432 = vcmp.eq.f32.partialorder %v3352, %v3394
      %vm3433 = vcmp.eq.f32.partialorder %v3353, %v3397
      %vm3434 = vcmp.eq.f32.partialorder %v3354, %v3397
      %vm3435 = vcmp.eq.f32.partialorder %v3355, %v3400
      %vm3436 = vcmp.eq.f32.partialorder %v3356, %v3400
      %vm3437 = vcmp.eq.f32.partialorder %v3357, %v3403
      %vm3438 = vcmp.eq.f32.partialorder %v3358, %v3403
      %vm3439 = vcmp.eq.f32.partialorder %v3359, %v3406
      %vm3440 = vcmp.eq.f32.partialorder %v3360, %v3406
      %vm3441 = vcmp.eq.f32.partialorder %v3361, %v3409
      %vm3442 = vcmp.eq.f32.partialorder %v3362, %v3409
      %vm3443 = vcmp.eq.f32.partialorder %v3363, %v3412
      %vm3444 = vcmp.eq.f32.partialorder %v3364, %v3412
      %v3445 = vsel %vm3413, %v2634, 256.0
      %v3446 = vsel %vm3414, %v2635, 256.0
      %v3447 = vsel %vm3415, %v2634, 256.0
      %v3448 = vsel %vm3416, %v2635, 256.0
      %v3449 = vsel %vm3417, %v2634, 256.0
      %v3450 = vsel %vm3418, %v2635, 256.0
      %v3451 = vsel %vm3419, %v2634, 256.0
      %v3452 = vsel %vm3420, %v2635, 256.0
      %v3453 = vsel %vm3421, %v2634, 256.0
      %v3454 = vsel %vm3422, %v2635, 256.0
      %v3455 = vsel %vm3423, %v2634, 256.0
      %v3456 = vsel %vm3424, %v2635, 256.0
      %v3457 = vsel %vm3425, %v2634, 256.0
      %v3458 = vsel %vm3426, %v2635, 256.0
      %v3459 = vsel %vm3427, %v2634, 256.0
      %v3460 = vsel %vm3428, %v2635, 256.0
      %v3461 = vsel %vm3429, %v2634, 256.0
      %v3462 = vsel %vm3430, %v2635, 256.0
      %v3463 = vsel %vm3431, %v2634, 256.0
      %v3464 = vsel %vm3432, %v2635, 256.0
      %v3465 = vsel %vm3433, %v2634, 256.0
      %v3466 = vsel %vm3434, %v2635, 256.0
      %v3467 = vsel %vm3435, %v2634, 256.0
      %v3468 = vsel %vm3436, %v2635, 256.0
      %v3469 = vsel %vm3437, %v2634, 256.0
      %v3470 = vsel %vm3438, %v2635, 256.0
      %v3471 = vsel %vm3439, %v2634, 256.0
      %v3472 = vsel %vm3440, %v2635, 256.0
      %v3473 = vsel %vm3441, %v2634, 256.0
      %v3474 = vsel %vm3442, %v2635, 256.0
      %v3475 = vsel %vm3443, %v2634, 256.0
      %v3476 = vsel %vm3444, %v2635, 256.0
      %v3477 = vmin.f32 %v3445, %v3446
      %3478 = vmin.xlane.f32.xlu0 %v3477
      %v3479 = vpop.xlane.xlu0 %3478
      %v3480 = vmin.f32 %v3447, %v3448
      %3481 = vmin.xlane.f32.xlu0 %v3480
      %v3482 = vpop.xlane.xlu0 %3481
      %v3483 = vmin.f32 %v3449, %v3450
      %3484 = vmin.xlane.f32.xlu0 %v3483
      %v3485 = vpop.xlane.xlu0 %3484
      %v3486 = vmin.f32 %v3451, %v3452
      %3487 = vmin.xlane.f32.xlu0 %v3486
      %v3488 = vpop.xlane.xlu0 %3487
      %v3489 = vmin.f32 %v3453, %v3454
      %3490 = vmin.xlane.f32.xlu0 %v3489
      %v3491 = vpop.xlane.xlu0 %3490
      %v3492 = vmin.f32 %v3455, %v3456
      %3493 = vmin.xlane.f32.xlu0 %v3492
      %v3494 = vpop.xlane.xlu0 %3493
      %v3495 = vmin.f32 %v3457, %v3458
      %3496 = vmin.xlane.f32.xlu0 %v3495
      %v3497 = vpop.xlane.xlu0 %3496
      %v3498 = vmin.f32 %v3459, %v3460
      %3499 = vmin.xlane.f32.xlu0 %v3498
      %v3500 = vpop.xlane.xlu0 %3499
      %v3501 = vmin.f32 %v3461, %v3462
      %3502 = vmin.xlane.f32.xlu0 %v3501
      %v3503 = vpop.xlane.xlu0 %3502
      %v3504 = vmin.f32 %v3463, %v3464
      %3505 = vmin.xlane.f32.xlu0 %v3504
      %v3506 = vpop.xlane.xlu0 %3505
      %v3507 = vmin.f32 %v3465, %v3466
      %3508 = vmin.xlane.f32.xlu0 %v3507
      %v3509 = vpop.xlane.xlu0 %3508
      %v3510 = vmin.f32 %v3467, %v3468
      %3511 = vmin.xlane.f32.xlu0 %v3510
      %v3512 = vpop.xlane.xlu0 %3511
      %v3513 = vmin.f32 %v3469, %v3470
      %3514 = vmin.xlane.f32.xlu0 %v3513
      %v3515 = vpop.xlane.xlu0 %3514
      %v3516 = vmin.f32 %v3471, %v3472
      %3517 = vmin.xlane.f32.xlu0 %v3516
      %v3518 = vpop.xlane.xlu0 %3517
      %v3519 = vmin.f32 %v3473, %v3474
      %3520 = vmin.xlane.f32.xlu0 %v3519
      %v3521 = vpop.xlane.xlu0 %3520
      %v3522 = vmin.f32 %v3475, %v3476
      %3523 = vmin.xlane.f32.xlu0 %v3522
      %v3524 = vpop.xlane.xlu0 %3523
      %vm3525 = vcmp.eq.s32.totalorder %v1892, 3
      %v3526 = vsel %vm3525, 1, 0
      %vm3527 = vcmp.eq.s32.totalorder %v3526, 1
      %v3528 = vsel %vm3527, %v3367, %v3285
      %v3529 = vsel %vm3527, %v3370, %v3286
      %v3530 = vsel %vm3527, %v3373, %v3287
      %v3531 = vsel %vm3527, %v3376, %v3288
      %v3532 = vsel %vm3527, %v3379, %v3289
      %v3533 = vsel %vm3527, %v3382, %v3290
      %v3534 = vsel %vm3527, %v3385, %v3291
      %v3535 = vsel %vm3527, %v3388, %v3292
      %v3536 = vsel %vm3527, %v3391, %v3293
      %v3537 = vsel %vm3527, %v3394, %v3294
      %v3538 = vsel %vm3527, %v3397, %v3295
      %v3539 = vsel %vm3527, %v3400, %v3296
      %v3540 = vsel %vm3527, %v3403, %v3297
      %v3541 = vsel %vm3527, %v3406, %v3298
      %v3542 = vsel %vm3527, %v3409, %v3299
      %v3543 = vsel %vm3527, %v3412, %v3300
      %v3544 = vcvt.f32.s32.to.zero.pseudo %v3479
      %v3545 = vcvt.f32.s32.to.zero.pseudo %v3482
      %v3546 = vcvt.f32.s32.to.zero.pseudo %v3485
      %v3547 = vcvt.f32.s32.to.zero.pseudo %v3488
      %v3548 = vcvt.f32.s32.to.zero.pseudo %v3491
      %v3549 = vcvt.f32.s32.to.zero.pseudo %v3494
      %v3550 = vcvt.f32.s32.to.zero.pseudo %v3497
      %v3551 = vcvt.f32.s32.to.zero.pseudo %v3500
      %v3552 = vcvt.f32.s32.to.zero.pseudo %v3503
      %v3553 = vcvt.f32.s32.to.zero.pseudo %v3506
      %v3554 = vcvt.f32.s32.to.zero.pseudo %v3509
      %v3555 = vcvt.f32.s32.to.zero.pseudo %v3512
      %v3556 = vcvt.f32.s32.to.zero.pseudo %v3515
      %v3557 = vcvt.f32.s32.to.zero.pseudo %v3518
      %v3558 = vcvt.f32.s32.to.zero.pseudo %v3521
      %v3559 = vcvt.f32.s32.to.zero.pseudo %v3524
      %v3560 = vsel %vm3527, %v3544, %v3317
      %v3561 = vsel %vm3527, %v3545, %v3318
      %v3562 = vsel %vm3527, %v3546, %v3319
      %v3563 = vsel %vm3527, %v3547, %v3320
      %v3564 = vsel %vm3527, %v3548, %v3321
      %v3565 = vsel %vm3527, %v3549, %v3322
      %v3566 = vsel %vm3527, %v3550, %v3323
      %v3567 = vsel %vm3527, %v3551, %v3324
      %v3568 = vsel %vm3527, %v3552, %v3325
      %v3569 = vsel %vm3527, %v3553, %v3326
      %v3570 = vsel %vm3527, %v3554, %v3327
      %v3571 = vsel %vm3527, %v3555, %v3328
      %v3572 = vsel %vm3527, %v3556, %v3329
      %v3573 = vsel %vm3527, %v3557, %v3330
      %v3574 = vsel %vm3527, %v3558, %v3331
      %v3575 = vsel %vm3527, %v3559, %v3332
      %v3576 = vsel %vm3413, -inf, %v3333
      %v3577 = vsel %vm3414, -inf, %v3334
      %v3578 = vsel %vm3415, -inf, %v3335
      %v3579 = vsel %vm3416, -inf, %v3336
      %v3580 = vsel %vm3417, -inf, %v3337
      %v3581 = vsel %vm3418, -inf, %v3338
      %v3582 = vsel %vm3419, -inf, %v3339
      %v3583 = vsel %vm3420, -inf, %v3340
      %v3584 = vsel %vm3421, -inf, %v3341
      %v3585 = vsel %vm3422, -inf, %v3342
      %v3586 = vsel %vm3423, -inf, %v3343
      %v3587 = vsel %vm3424, -inf, %v3344
      %v3588 = vsel %vm3425, -inf, %v3345
      %v3589 = vsel %vm3426, -inf, %v3346
      %v3590 = vsel %vm3427, -inf, %v3347
      %v3591 = vsel %vm3428, -inf, %v3348
      %v3592 = vsel %vm3429, -inf, %v3349
      %v3593 = vsel %vm3430, -inf, %v3350
      %v3594 = vsel %vm3431, -inf, %v3351
      %v3595 = vsel %vm3432, -inf, %v3352
      %v3596 = vsel %vm3433, -inf, %v3353
      %v3597 = vsel %vm3434, -inf, %v3354
      %v3598 = vsel %vm3435, -inf, %v3355
      %v3599 = vsel %vm3436, -inf, %v3356
      %v3600 = vsel %vm3437, -inf, %v3357
      %v3601 = vsel %vm3438, -inf, %v3358
      %v3602 = vsel %vm3439, -inf, %v3359
      %v3603 = vsel %vm3440, -inf, %v3360
      %v3604 = vsel %vm3441, -inf, %v3361
      %v3605 = vsel %vm3442, -inf, %v3362
      %v3606 = vsel %vm3443, -inf, %v3363
      %v3607 = vsel %vm3444, -inf, %v3364
      %v3608 = vmax.f32 %v3576, %v3577
      %3609 = vmax.xlane.f32.xlu0 %v3608
      %v3610 = vpop.xlane.xlu0 %3609
      %v3611 = vmax.f32 %v3578, %v3579
      %3612 = vmax.xlane.f32.xlu0 %v3611
      %v3613 = vpop.xlane.xlu0 %3612
      %v3614 = vmax.f32 %v3580, %v3581
      %3615 = vmax.xlane.f32.xlu0 %v3614
      %v3616 = vpop.xlane.xlu0 %3615
      %v3617 = vmax.f32 %v3582, %v3583
      %3618 = vmax.xlane.f32.xlu0 %v3617
      %v3619 = vpop.xlane.xlu0 %3618
      %v3620 = vmax.f32 %v3584, %v3585
      %3621 = vmax.xlane.f32.xlu0 %v3620
      %v3622 = vpop.xlane.xlu0 %3621
      %v3623 = vmax.f32 %v3586, %v3587
      %3624 = vmax.xlane.f32.xlu0 %v3623
      %v3625 = vpop.xlane.xlu0 %3624
      %v3626 = vmax.f32 %v3588, %v3589
      %3627 = vmax.xlane.f32.xlu0 %v3626
      %v3628 = vpop.xlane.xlu0 %3627
      %v3629 = vmax.f32 %v3590, %v3591
      %3630 = vmax.xlane.f32.xlu0 %v3629
      %v3631 = vpop.xlane.xlu0 %3630
      %v3632 = vmax.f32 %v3592, %v3593
      %3633 = vmax.xlane.f32.xlu0 %v3632
      %v3634 = vpop.xlane.xlu0 %3633
      %v3635 = vmax.f32 %v3594, %v3595
      %3636 = vmax.xlane.f32.xlu0 %v3635
      %v3637 = vpop.xlane.xlu0 %3636
      %v3638 = vmax.f32 %v3596, %v3597
      %3639 = vmax.xlane.f32.xlu0 %v3638
      %v3640 = vpop.xlane.xlu0 %3639
      %v3641 = vmax.f32 %v3598, %v3599
      %3642 = vmax.xlane.f32.xlu0 %v3641
      %v3643 = vpop.xlane.xlu0 %3642
      %v3644 = vmax.f32 %v3600, %v3601
      %3645 = vmax.xlane.f32.xlu0 %v3644
      %v3646 = vpop.xlane.xlu0 %3645
      %v3647 = vmax.f32 %v3602, %v3603
      %3648 = vmax.xlane.f32.xlu0 %v3647
      %v3649 = vpop.xlane.xlu0 %3648
      %v3650 = vmax.f32 %v3604, %v3605
      %3651 = vmax.xlane.f32.xlu0 %v3650
      %v3652 = vpop.xlane.xlu0 %3651
      %v3653 = vmax.f32 %v3606, %v3607
      %3654 = vmax.xlane.f32.xlu0 %v3653
      %v3655 = vpop.xlane.xlu0 %3654
      %vm3656 = vcmp.eq.f32.partialorder %v3576, %v3610
      %vm3657 = vcmp.eq.f32.partialorder %v3577, %v3610
      %vm3658 = vcmp.eq.f32.partialorder %v3578, %v3613
      %vm3659 = vcmp.eq.f32.partialorder %v3579, %v3613
      %vm3660 = vcmp.eq.f32.partialorder %v3580, %v3616
      %vm3661 = vcmp.eq.f32.partialorder %v3581, %v3616
      %vm3662 = vcmp.eq.f32.partialorder %v3582, %v3619
      %vm3663 = vcmp.eq.f32.partialorder %v3583, %v3619
      %vm3664 = vcmp.eq.f32.partialorder %v3584, %v3622
      %vm3665 = vcmp.eq.f32.partialorder %v3585, %v3622
      %vm3666 = vcmp.eq.f32.partialorder %v3586, %v3625
      %vm3667 = vcmp.eq.f32.partialorder %v3587, %v3625
      %vm3668 = vcmp.eq.f32.partialorder %v3588, %v3628
      %vm3669 = vcmp.eq.f32.partialorder %v3589, %v3628
      %vm3670 = vcmp.eq.f32.partialorder %v3590, %v3631
      %vm3671 = vcmp.eq.f32.partialorder %v3591, %v3631
      %vm3672 = vcmp.eq.f32.partialorder %v3592, %v3634
      %vm3673 = vcmp.eq.f32.partialorder %v3593, %v3634
      %vm3674 = vcmp.eq.f32.partialorder %v3594, %v3637
      %vm3675 = vcmp.eq.f32.partialorder %v3595, %v3637
      %vm3676 = vcmp.eq.f32.partialorder %v3596, %v3640
      %vm3677 = vcmp.eq.f32.partialorder %v3597, %v3640
      %vm3678 = vcmp.eq.f32.partialorder %v3598, %v3643
      %vm3679 = vcmp.eq.f32.partialorder %v3599, %v3643
      %vm3680 = vcmp.eq.f32.partialorder %v3600, %v3646
      %vm3681 = vcmp.eq.f32.partialorder %v3601, %v3646
      %vm3682 = vcmp.eq.f32.partialorder %v3602, %v3649
      %vm3683 = vcmp.eq.f32.partialorder %v3603, %v3649
      %vm3684 = vcmp.eq.f32.partialorder %v3604, %v3652
      %vm3685 = vcmp.eq.f32.partialorder %v3605, %v3652
      %vm3686 = vcmp.eq.f32.partialorder %v3606, %v3655
      %vm3687 = vcmp.eq.f32.partialorder %v3607, %v3655
      %v3688 = vsel %vm3656, %v2634, 256.0
      %v3689 = vsel %vm3657, %v2635, 256.0
      %v3690 = vsel %vm3658, %v2634, 256.0
      %v3691 = vsel %vm3659, %v2635, 256.0
      %v3692 = vsel %vm3660, %v2634, 256.0
      %v3693 = vsel %vm3661, %v2635, 256.0
      %v3694 = vsel %vm3662, %v2634, 256.0
      %v3695 = vsel %vm3663, %v2635, 256.0
      %v3696 = vsel %vm3664, %v2634, 256.0
      %v3697 = vsel %vm3665, %v2635, 256.0
      %v3698 = vsel %vm3666, %v2634, 256.0
      %v3699 = vsel %vm3667, %v2635, 256.0
      %v3700 = vsel %vm3668, %v2634, 256.0
      %v3701 = vsel %vm3669, %v2635, 256.0
      %v3702 = vsel %vm3670, %v2634, 256.0
      %v3703 = vsel %vm3671, %v2635, 256.0
      %v3704 = vsel %vm3672, %v2634, 256.0
      %v3705 = vsel %vm3673, %v2635, 256.0
      %v3706 = vsel %vm3674, %v2634, 256.0
      %v3707 = vsel %vm3675, %v2635, 256.0
      %v3708 = vsel %vm3676, %v2634, 256.0
      %v3709 = vsel %vm3677, %v2635, 256.0
      %v3710 = vsel %vm3678, %v2634, 256.0
      %v3711 = vsel %vm3679, %v2635, 256.0
      %v3712 = vsel %vm3680, %v2634, 256.0
      %v3713 = vsel %vm3681, %v2635, 256.0
      %v3714 = vsel %vm3682, %v2634, 256.0
      %v3715 = vsel %vm3683, %v2635, 256.0
      %v3716 = vsel %vm3684, %v2634, 256.0
      %v3717 = vsel %vm3685, %v2635, 256.0
      %v3718 = vsel %vm3686, %v2634, 256.0
      %v3719 = vsel %vm3687, %v2635, 256.0
      %v3720 = vmin.f32 %v3688, %v3689
      %3721 = vmin.xlane.f32.xlu0 %v3720
      %v3722 = vpop.xlane.xlu0 %3721
      %v3723 = vmin.f32 %v3690, %v3691
      %3724 = vmin.xlane.f32.xlu0 %v3723
      %v3725 = vpop.xlane.xlu0 %3724
      %v3726 = vmin.f32 %v3692, %v3693
      %3727 = vmin.xlane.f32.xlu0 %v3726
      %v3728 = vpop.xlane.xlu0 %3727
      %v3729 = vmin.f32 %v3694, %v3695
      %3730 = vmin.xlane.f32.xlu0 %v3729
      %v3731 = vpop.xlane.xlu0 %3730
      %v3732 = vmin.f32 %v3696, %v3697
      %3733 = vmin.xlane.f32.xlu0 %v3732
      %v3734 = vpop.xlane.xlu0 %3733
      %v3735 = vmin.f32 %v3698, %v3699
      %3736 = vmin.xlane.f32.xlu0 %v3735
      %v3737 = vpop.xlane.xlu0 %3736
      %v3738 = vmin.f32 %v3700, %v3701
      %3739 = vmin.xlane.f32.xlu0 %v3738
      %v3740 = vpop.xlane.xlu0 %3739
      %v3741 = vmin.f32 %v3702, %v3703
      %3742 = vmin.xlane.f32.xlu0 %v3741
      %v3743 = vpop.xlane.xlu0 %3742
      %v3744 = vmin.f32 %v3704, %v3705
      %3745 = vmin.xlane.f32.xlu0 %v3744
      %v3746 = vpop.xlane.xlu0 %3745
      %v3747 = vmin.f32 %v3706, %v3707
      %3748 = vmin.xlane.f32.xlu0 %v3747
      %v3749 = vpop.xlane.xlu0 %3748
      %v3750 = vmin.f32 %v3708, %v3709
      %3751 = vmin.xlane.f32.xlu0 %v3750
      %v3752 = vpop.xlane.xlu0 %3751
      %v3753 = vmin.f32 %v3710, %v3711
      %3754 = vmin.xlane.f32.xlu0 %v3753
      %v3755 = vpop.xlane.xlu0 %3754
      %v3756 = vmin.f32 %v3712, %v3713
      %3757 = vmin.xlane.f32.xlu0 %v3756
      %v3758 = vpop.xlane.xlu0 %3757
      %v3759 = vmin.f32 %v3714, %v3715
      %3760 = vmin.xlane.f32.xlu0 %v3759
      %v3761 = vpop.xlane.xlu0 %3760
      %v3762 = vmin.f32 %v3716, %v3717
      %3763 = vmin.xlane.f32.xlu0 %v3762
      %v3764 = vpop.xlane.xlu0 %3763
      %v3765 = vmin.f32 %v3718, %v3719
      %3766 = vmin.xlane.f32.xlu0 %v3765
      %v3767 = vpop.xlane.xlu0 %3766
      %vm3768 = vcmp.eq.s32.totalorder %v1892, 4
      %v3769 = vsel %vm3768, 1, 0
      %vm3770 = vcmp.eq.s32.totalorder %v3769, 1
      %v3771 = vsel %vm3770, %v3610, %v3528
      %v3772 = vsel %vm3770, %v3613, %v3529
      %v3773 = vsel %vm3770, %v3616, %v3530
      %v3774 = vsel %vm3770, %v3619, %v3531
      %v3775 = vsel %vm3770, %v3622, %v3532
      %v3776 = vsel %vm3770, %v3625, %v3533
      %v3777 = vsel %vm3770, %v3628, %v3534
      %v3778 = vsel %vm3770, %v3631, %v3535
      %v3779 = vsel %vm3770, %v3634, %v3536
      %v3780 = vsel %vm3770, %v3637, %v3537
      %v3781 = vsel %vm3770, %v3640, %v3538
      %v3782 = vsel %vm3770, %v3643, %v3539
      %v3783 = vsel %vm3770, %v3646, %v3540
      %v3784 = vsel %vm3770, %v3649, %v3541
      %v3785 = vsel %vm3770, %v3652, %v3542
      %v3786 = vsel %vm3770, %v3655, %v3543
      %v3787 = vcvt.f32.s32.to.zero.pseudo %v3722
      %v3788 = vcvt.f32.s32.to.zero.pseudo %v3725
      %v3789 = vcvt.f32.s32.to.zero.pseudo %v3728
      %v3790 = vcvt.f32.s32.to.zero.pseudo %v3731
      %v3791 = vcvt.f32.s32.to.zero.pseudo %v3734
      %v3792 = vcvt.f32.s32.to.zero.pseudo %v3737
      %v3793 = vcvt.f32.s32.to.zero.pseudo %v3740
      %v3794 = vcvt.f32.s32.to.zero.pseudo %v3743
      %v3795 = vcvt.f32.s32.to.zero.pseudo %v3746
      %v3796 = vcvt.f32.s32.to.zero.pseudo %v3749
      %v3797 = vcvt.f32.s32.to.zero.pseudo %v3752
      %v3798 = vcvt.f32.s32.to.zero.pseudo %v3755
      %v3799 = vcvt.f32.s32.to.zero.pseudo %v3758
      %v3800 = vcvt.f32.s32.to.zero.pseudo %v3761
      %v3801 = vcvt.f32.s32.to.zero.pseudo %v3764
      %v3802 = vcvt.f32.s32.to.zero.pseudo %v3767
      %v3803 = vsel %vm3770, %v3787, %v3560
      %v3804 = vsel %vm3770, %v3788, %v3561
      %v3805 = vsel %vm3770, %v3789, %v3562
      %v3806 = vsel %vm3770, %v3790, %v3563
      %v3807 = vsel %vm3770, %v3791, %v3564
      %v3808 = vsel %vm3770, %v3792, %v3565
      %v3809 = vsel %vm3770, %v3793, %v3566
      %v3810 = vsel %vm3770, %v3794, %v3567
      %v3811 = vsel %vm3770, %v3795, %v3568
      %v3812 = vsel %vm3770, %v3796, %v3569
      %v3813 = vsel %vm3770, %v3797, %v3570
      %v3814 = vsel %vm3770, %v3798, %v3571
      %v3815 = vsel %vm3770, %v3799, %v3572
      %v3816 = vsel %vm3770, %v3800, %v3573
      %v3817 = vsel %vm3770, %v3801, %v3574
      %v3818 = vsel %vm3770, %v3802, %v3575
      %vm3819 = vcmask 64512
      %3820 = vst.msk [vmem:[%s412] sm:$0xff] %vm3819, %v3771
      %3821 = vst.msk [vmem:[%s412 + $0x8] sm:$0xff] %vm3819, %v3772
      %3822 = vst.msk [vmem:[%s412 + $0x10] sm:$0xff] %vm3819, %v3773
      %3823 = vst.msk [vmem:[%s412 + $0x18] sm:$0xff] %vm3819, %v3774
      %3824 = vst.msk [vmem:[%s412 + $0x20] sm:$0xff] %vm3819, %v3775
      %3825 = vst.msk [vmem:[%s412 + $0x28] sm:$0xff] %vm3819, %v3776
      %3826 = vst.msk [vmem:[%s412 + $0x30] sm:$0xff] %vm3819, %v3777
      %3827 = vst.msk [vmem:[%s412 + $0x38] sm:$0xff] %vm3819, %v3778
      %3828 = vst.msk [vmem:[%s412 + $0x40] sm:$0xff] %vm3819, %v3779
      %3829 = vst.msk [vmem:[%s412 + $0x48] sm:$0xff] %vm3819, %v3780
      %3830 = vst.msk [vmem:[%s412 + $0x50] sm:$0xff] %vm3819, %v3781
      %3831 = vst.msk [vmem:[%s412 + $0x58] sm:$0xff] %vm3819, %v3782
      %3832 = vst.msk [vmem:[%s412 + $0x60] sm:$0xff] %vm3819, %v3783
      %3833 = vst.msk [vmem:[%s412 + $0x68] sm:$0xff] %vm3819, %v3784
      %3834 = vst.msk [vmem:[%s412 + $0x70] sm:$0xff] %vm3819, %v3785
      %3835 = vst.msk [vmem:[%s412 + $0x78] sm:$0xff] %vm3819, %v3786
      %3836 = vst.msk [vmem:[%s424] sm:$0xff] %vm3819, %v3803
      %3837 = vst.msk [vmem:[%s424 + $0x8] sm:$0xff] %vm3819, %v3804
      %3838 = vst.msk [vmem:[%s424 + $0x10] sm:$0xff] %vm3819, %v3805
      %3839 = vst.msk [vmem:[%s424 + $0x18] sm:$0xff] %vm3819, %v3806
      %3840 = vst.msk [vmem:[%s424 + $0x20] sm:$0xff] %vm3819, %v3807
      %3841 = vst.msk [vmem:[%s424 + $0x28] sm:$0xff] %vm3819, %v3808
      %3842 = vst.msk [vmem:[%s424 + $0x30] sm:$0xff] %vm3819, %v3809
      %3843 = vst.msk [vmem:[%s424 + $0x38] sm:$0xff] %vm3819, %v3810
      %3844 = vst.msk [vmem:[%s424 + $0x40] sm:$0xff] %vm3819, %v3811
      %3845 = vst.msk [vmem:[%s424 + $0x48] sm:$0xff] %vm3819, %v3812
      %3846 = vst.msk [vmem:[%s424 + $0x50] sm:$0xff] %vm3819, %v3813
      %3847 = vst.msk [vmem:[%s424 + $0x58] sm:$0xff] %vm3819, %v3814
      %3848 = vst.msk [vmem:[%s424 + $0x60] sm:$0xff] %vm3819, %v3815
      %3849 = vst.msk [vmem:[%s424 + $0x68] sm:$0xff] %vm3819, %v3816
      %3850 = vst.msk [vmem:[%s424 + $0x70] sm:$0xff] %vm3819, %v3817
      %3851 = vst.msk [vmem:[%s424 + $0x78] sm:$0xff] %vm3819, %v3818
      %s3852 = sadd.s32 %s29, %s30
      %s3853 = smul.u32 16, %s3852
      %p3854 = scmp.lt.s32.totalorder %s28, 1
      %s3855 = scalar_select %p3854, %s28, 1
      %p3856 = scmp.lt.s32.totalorder %s3853, 31
      %s3857 = scalar_select %p3856, %s3853, 31
      %s3858 = smul.addr %s3855, 32
      %s3859 = sadd.s32 %s3857, %s3858
      %s3860 = smul.addr %s3859, 8
      %s3861 = scalar_lea.vmem %s7, %s3860
      %s3862 = sadd.s32 %s29, %s30
      %s3863 = smul.u32 16, %s3862
      %p3864 = scmp.lt.s32.totalorder %s28, 1
      %s3865 = scalar_select %p3864, %s28, 1
      %p3866 = scmp.lt.s32.totalorder %s3863, 31
      %s3867 = scalar_select %p3866, %s3863, 31
      %s3868 = smul.addr %s3865, 32
      %s3869 = sadd.s32 %s3867, %s3868
      %s3870 = smul.addr %s3869, 8
      %s3871 = scalar_lea.vmem %s8, %s3870
      %s3872 = sadd.s32 %s29, %s30
      %s3873 = smul.u32 16, %s3872
      %p3874 = scmp.lt.s32.totalorder %s28, 1
      %s3875 = scalar_select %p3874, %s28, 1
      %p3876 = scmp.lt.s32.totalorder %s3873, 31
      %s3877 = scalar_select %p3876, %s3873, 31
      %s3878 = smul.addr %s3875, 32
      %s3879 = sadd.s32 %s3877, %s3878
      %s3880 = smul.addr %s3879, 8
      %s3881 = scalar_lea.vmem %s9, %s3880
      // Predicated region
      $region53: #{tpu_custom_call.1} parent=47 // pred_check
        %p3882 = pneg %p216
      $region54: #{tpu_custom_call.1} parent=47 // pred_check_branch
        %3884 = sbr.rel (%p3882) target = $region56
      $region55: #{tpu_custom_call.1} parent=47 // pred_region
        %s3885 = sadd.s32 %s29, %s30
        %s3886 = smul.u32 16, %s3885
      $region56: #{tpu_custom_call.1} parent=47 // pred_fallthru
        _
      // Predicated region
      $region57: #{tpu_custom_call.1} parent=47 // pred_check
        %p3887 = pneg %p246
      $region58: #{tpu_custom_call.1} parent=47 // pred_check_branch
        %3889 = sbr.rel (%p3887) target = $region60
      $region59: #{tpu_custom_call.1} parent=47 // pred_region
        %s3890 = sadd.s32 %s29, %s30
        %s3891 = smul.u32 16, %s3890
      $region60: #{tpu_custom_call.1} parent=47 // pred_fallthru
        _
      // Predicated region
      $region61: #{tpu_custom_call.1} parent=47 // pred_check
        %p3892 = pneg %p276
      $region62: #{tpu_custom_call.1} parent=47 // pred_check_branch
        %3894 = sbr.rel (%p3892) target = $region64
      $region63: #{tpu_custom_call.1} parent=47 // pred_region
        %s3895 = sadd.s32 %s29, %s30
        %s3896 = smul.u32 16, %s3895
      $region64: #{tpu_custom_call.1} parent=47 // pred_fallthru
        _
    $region48: #{tpu_custom_call.1} parent=5 // pred_fallthru
      _
    %p3897 = scmp.le.s32.totalorder 2, %s18
    // Predicated region
    $region65: #{tpu_custom_call.1} parent=5 // pred_check
      %p3898 = pneg %p3897
    $region66: #{tpu_custom_call.1} parent=5 // pred_check_branch
      %3900 = sbr.rel (%p3898) target = $region68
    $region67: #{tpu_custom_call.1} parent=5 // pred_region
      %s3901 = ssub.s32 %s18, 2
      // Predicated region
      $region69: #{tpu_custom_call.1} parent=67 // pred_check
        %p3902 = pneg %p222
      $region70: #{tpu_custom_call.1} parent=67 // pred_check_branch
        %3904 = sbr.rel (%p3902) target = $region72
      $region71: #{tpu_custom_call.1} parent=67 // pred_region
        %s3905 = sadd.s32 %s32, %s33
        %s3906 = smul.u32 16, %s3905
        %p3907 = scmp.lt.s32.totalorder %s31, 1
        %s3908 = scalar_select %p3907, %s31, 1
        %p3909 = scmp.lt.s32.totalorder %s3906, 31
        %s3910 = scalar_select %p3909, %s3906, 31
        %s3911 = smul.addr %s3908, 32
        %s3912 = sadd.s32 %s3910, %s3911
        %s3913 = smul.addr %s3912, 8
        %s3914 = scalar_lea.vmem %s7, %s3913
      $region72: #{tpu_custom_call.1} parent=67 // pred_fallthru
        _
      // Predicated region
      $region73: #{tpu_custom_call.1} parent=67 // pred_check
        %p3915 = pneg %p252
      $region74: #{tpu_custom_call.1} parent=67 // pred_check_branch
        %3917 = sbr.rel (%p3915) target = $region76
      $region75: #{tpu_custom_call.1} parent=67 // pred_region
        %s3918 = sadd.s32 %s32, %s33
        %s3919 = smul.u32 16, %s3918
        %p3920 = scmp.lt.s32.totalorder %s31, 1
        %s3921 = scalar_select %p3920, %s31, 1
        %p3922 = scmp.lt.s32.totalorder %s3919, 31
        %s3923 = scalar_select %p3922, %s3919, 31
        %s3924 = smul.addr %s3921, 32
        %s3925 = sadd.s32 %s3923, %s3924
        %s3926 = smul.addr %s3925, 8
        %s3927 = scalar_lea.vmem %s8, %s3926
      $region76: #{tpu_custom_call.1} parent=67 // pred_fallthru
        _
      // Predicated region
      $region77: #{tpu_custom_call.1} parent=67 // pred_check
        %p3928 = pneg %p282
      $region78: #{tpu_custom_call.1} parent=67 // pred_check_branch
        %3930 = sbr.rel (%p3928) target = $region80
      $region79: #{tpu_custom_call.1} parent=67 // pred_region
        %s3931 = sadd.s32 %s32, %s33
        %s3932 = smul.u32 16, %s3931
        %p3933 = scmp.lt.s32.totalorder %s31, 1
        %s3934 = scalar_select %p3933, %s31, 1
        %p3935 = scmp.lt.s32.totalorder %s3932, 31
        %s3936 = scalar_select %p3935, %s3932, 31
        %s3937 = smul.addr %s3934, 32
        %s3938 = sadd.s32 %s3936, %s3937
        %s3939 = smul.addr %s3938, 8
        %s3940 = scalar_lea.vmem %s9, %s3939
      $region80: #{tpu_custom_call.1} parent=67 // pred_fallthru
        _
    $region68: #{tpu_custom_call.1} parent=5 // pred_fallthru
      _
  $region6: #{tpu_custom_call.1} parent=0 // loop_footer
    %s22 = sadd.s32 1, %s18
  $region7: #{tpu_custom_call.1} parent=0 // loop_footer_branch
    %17 = sbr.rel target = $region3
  $region8: #{tpu_custom_call.1} parent=0 // loop_exit
    _

</llo_original>
